<compile_context>
chip_gen: v5e
topology: v5e:2x2
jax: 0.10.0
libtpu: 0.0.40
codegen_flags: <defaults>
</compile_context>

<pallas_src>
import functools

import numpy as np
import jax
import jax.numpy as jnp
from jax import lax
from jax.experimental import pallas as pl
from jax.experimental.pallas import tpu as pltpu


# ----------------------------------------------------------------------------- #
# Kernel 1: RoI max-pooling (torchvision RoIPool semantics), channels-last,
#           separable over W then H.
# ----------------------------------------------------------------------------- #
def _roi_pool_kernel(idx_ref, rois_ref, x_ref, out_ref, col_red_ref, *,
                     roi_size, spatial_scale, H, W, C):
    r = pl.program_id(0)

    # rois columns are (y1, x1, y2, x2); the PyTorch forward permutes them to
    # (x1, y1, x2, y2) before calling RoIPool -- we read them accordingly.
    # rois_ref is a flat (4*R,) f32 SMEM array.
    y1 = rois_ref[4 * r + 0]
    x1 = rois_ref[4 * r + 1]
    y2 = rois_ref[4 * r + 2]
    x2 = rois_ref[4 * r + 3]

    def c_round(v):  # C-style round-half-up for non-negative coords
        return jnp.floor(v * spatial_scale + 0.5).astype(jnp.int32)

    roi_start_w = c_round(x1)
    roi_start_h = c_round(y1)
    roi_end_w = c_round(x2)
    roi_end_h = c_round(y2)

    roi_w = jnp.maximum(roi_end_w - roi_start_w + 1, 1)
    roi_h = jnp.maximum(roi_end_h - roi_start_h + 1, 1)
    bin_h = roi_h.astype(jnp.float32) / jnp.float32(roi_size)
    bin_w = roi_w.astype(jnp.float32) / jnp.float32(roi_size)

    x = x_ref[0]                                               # (H, W, C), C on lanes
    neg_inf = jnp.float32(-jnp.inf)
    # Hoisted iotas (built once per program, reused by every bin).
    w_ids = lax.broadcasted_iota(jnp.int32, (H, W, C), 1)
    h_ids = lax.broadcasted_iota(jnp.int32, (roi_size, H, C), 1)

    # Stage 1: reduce each of the roi_size column bins over W -> (roi_size, H, C).
    for pw in range(roi_size):
        wstart = jnp.clip(
            jnp.floor(jnp.float32(pw) * bin_w).astype(jnp.int32) + roi_start_w, 0, W)
        wend = jnp.clip(
            jnp.ceil(jnp.float32(pw + 1) * bin_w).astype(jnp.int32) + roi_start_w, 0, W)
        m = (w_ids >= wstart) & (w_ids < wend)                 # (H, W, C)
        col_red_ref[pw] = jnp.max(jnp.where(m, x, neg_inf), axis=1)      # (H, C)

    # Stage 2: reduce each of the roi_size row bins over H; one dense store per row.
    for ph in range(roi_size):
        hstart = jnp.clip(
            jnp.floor(jnp.float32(ph) * bin_h).astype(jnp.int32) + roi_start_h, 0, H)
        hend = jnp.clip(
            jnp.ceil(jnp.float32(ph + 1) * bin_h).astype(jnp.int32) + roi_start_h, 0, H)
        m = (h_ids >= hstart) & (h_ids < hend)                 # (roi_size, H, C)
        v = jnp.max(jnp.where(m, col_red_ref[...], neg_inf), axis=1)     # (roi_size, C)
        # Fully-masked (empty) bins stay at -inf -> replace with 0 (torchvision
        # RoIPool semantics; feature maps are finite so -inf is a safe sentinel).
        out_ref[0, ph] = jnp.where(v == neg_inf, 0.0, v)


def roi_pool(x_nhwc, rois, roi_indices, *, roi_size, spatial_scale):
    """x_nhwc: (N, H, W, C) f32, rois: (R, 4) f32 (y1,x1,y2,x2), roi_indices: (R,).
    Returns pooled features of shape (R, roi_size, roi_size, C) in (h, w, c) order."""
    N, H, W, C = x_nhwc.shape
    R = rois.shape[0]

    kernel = functools.partial(_roi_pool_kernel, roi_size=roi_size,
                               spatial_scale=float(spatial_scale), H=H, W=W, C=C)

    grid_spec = pltpu.PrefetchScalarGridSpec(
        num_scalar_prefetch=1,                       # roi_indices -> SMEM
        grid=(R,),
        in_specs=[
            pl.BlockSpec(memory_space=pltpu.MemorySpace.SMEM),            # rois (4R,)
            pl.BlockSpec((1, H, W, C),
                         lambda r, idx_ref: (idx_ref[r], 0, 0, 0)),       # x block
        ],
        out_specs=pl.BlockSpec((1, roi_size, roi_size, C),
                               lambda r, idx_ref: (r, 0, 0, 0)),
        scratch_shapes=[pltpu.VMEM((roi_size, H, C), jnp.float32)],
    )

    return pl.pallas_call(
        kernel,
        grid_spec=grid_spec,
        out_shape=jax.ShapeDtypeStruct((R, roi_size, roi_size, C), jnp.float32),
        compiler_params=pltpu.CompilerParams(dimension_semantics=("parallel",)),
    )(roi_indices.astype(jnp.int32),
      rois.reshape(-1).astype(jnp.float32),
      x_nhwc.astype(jnp.float32))


# ----------------------------------------------------------------------------- #
# Kernel 2: classifier (2x Linear+ReLU) + fused cls_loc/score head.
# Grid over K of the first layer (streamed bf16 w1 tiles, f32 VMEM accumulator);
# the rest of the chain runs at the last K step with a lane-dense output.
# ----------------------------------------------------------------------------- #
def _fc_head_kernel(pool_ref, w1_ref, b1_ref, w2_ref, b2_ref, wh_ref, bh_ref,
                    out_ref, acc_ref):
    k = pl.program_id(0)

    @pl.when(k == 0)
    def _():
        acc_ref[...] = jnp.zeros_like(acc_ref)

    acc_ref[...] += jnp.dot(pool_ref[...], w1_ref[...],
                            preferred_element_type=jnp.float32)

    @pl.when(k == pl.num_programs(0) - 1)
    def _():
        h = jnp.maximum(acc_ref[...] + b1_ref[...], 0.0)
        h = jnp.dot(h.astype(w2_ref.dtype), w2_ref[...],
                    preferred_element_type=jnp.float32)
        h = jnp.maximum(h + b2_ref[...], 0.0)
        out_ref[...] = (jnp.dot(h.astype(wh_ref.dtype), wh_ref[...],
                                preferred_element_type=jnp.float32)
                        + bh_ref[...])


def fc_head(pool_flat_bf16, fcp, *, tk=128):
    """pool_flat_bf16: (R_pad, K_pad) bf16.  Returns (R_pad, n_out_pad) f32."""
    r_pad, k_pad = pool_flat_bf16.shape
    hidden = fcp["w1"].shape[1]
    n_out_pad = fcp["n_out_pad"]

    grid_spec = pltpu.PrefetchScalarGridSpec(
        num_scalar_prefetch=0,
        grid=(k_pad // tk,),
        in_specs=[
            pl.BlockSpec((r_pad, tk), lambda k: (0, k)),          # pooled activations
            pl.BlockSpec((tk, hidden), lambda k: (k, 0)),         # streamed w1 tile
            pl.BlockSpec((1, hidden), lambda k: (0, 0)),          # b1 (resident)
            pl.BlockSpec((hidden, hidden), lambda k: (0, 0)),     # w2 (resident)
            pl.BlockSpec((1, hidden), lambda k: (0, 0)),          # b2
            pl.BlockSpec((hidden, n_out_pad), lambda k: (0, 0)),  # fused loc|score W
            pl.BlockSpec((1, n_out_pad), lambda k: (0, 0)),       # fused bias
        ],
        out_specs=pl.BlockSpec((r_pad, n_out_pad), lambda k: (0, 0)),
        scratch_shapes=[pltpu.VMEM((r_pad, hidden), jnp.float32)],
    )

    return pl.pallas_call(
        _fc_head_kernel,
        grid_spec=grid_spec,
        out_shape=jax.ShapeDtypeStruct((r_pad, n_out_pad), jnp.float32),
        compiler_params=pltpu.CompilerParams(dimension_semantics=("arbitrary",)),
    )(pool_flat_bf16, fcp["w1"], fcp["b1"], fcp["w2"], fcp["b2"],
      fcp["w_head"], fcp["b_head"])


def prepare_fc_params(params, C, roi_size, *, tk=128, lane=128):
    """One-time parameter prep: permute w1 rows from PyTorch's (c, h, w) flatten
    order to the kernel's (h, w, c) order, pad K to a multiple of tk, fuse the
    loc/score heads into one lane-dense (padded to 128) weight, cast to bf16."""
    hidden = params["w1"].shape[1]
    n_loc = params["w_loc"].shape[1]
    n_cls = params["w_score"].shape[1]

    k_in = C * roi_size * roi_size
    assert params["w1"].shape[0] == k_in
    w1 = params["w1"].reshape(C, roi_size, roi_size, hidden)
    w1 = jnp.transpose(w1, (1, 2, 0, 3)).reshape(k_in, hidden)     # (h,w,c) rows
    k_pad = ((k_in + tk - 1) // tk) * tk
    w1 = jnp.pad(w1, ((0, k_pad - k_in), (0, 0)))

    w_head = jnp.concatenate([params["w_loc"], params["w_score"]], axis=1)
    b_head = jnp.concatenate([params["b_loc"], params["b_score"]], axis=1)
    n_out = n_loc + n_cls
    n_out_pad = ((n_out + lane - 1) // lane) * lane
    w_head = jnp.pad(w_head, ((0, 0), (0, n_out_pad - n_out)))
    b_head = jnp.pad(b_head, ((0, 0), (0, n_out_pad - n_out)))

    return {
        "w1": w1.astype(jnp.bfloat16),
        "b1": params["b1"].astype(jnp.float32),
        "w2": params["w2"].astype(jnp.bfloat16),
        "b2": params["b2"].astype(jnp.float32),
        "w_head": w_head.astype(jnp.bfloat16),
        "b_head": b_head.astype(jnp.float32),
        "k_in": k_in, "k_pad": k_pad,
        "n_loc": n_loc, "n_cls": n_cls, "n_out_pad": n_out_pad,
    }


# ----------------------------------------------------------------------------- #
# Full RoIHead forward.
# ----------------------------------------------------------------------------- #
def roi_head_forward(x, rois, roi_indices, params, *, roi_size, spatial_scale):
    R = rois.shape[0]
    N, C, H, W = x.shape

    # One-time channels-last relayout so C sits on the 128-lane axis in the kernel.
    x_nhwc = jnp.transpose(x, (0, 2, 3, 1))

    # Sort RoIs by image index so consecutive grid steps map to the same feature-map
    # block (Pallas skips re-DMAing it); unsort the head outputs at the end.
    order = jnp.argsort(roi_indices)
    inv_order = jnp.argsort(order)
    pooled = roi_pool(x_nhwc, rois[order], roi_indices[order],
                      roi_size=roi_size, spatial_scale=spatial_scale)  # (R, rs, rs, C)

    # TODO(synk): in a real deployment prepare_fc_params runs once at model load,
    # not per forward call.
    fcp = prepare_fc_params(params, C, roi_size)

    pool_flat = pooled.reshape(R, roi_size * roi_size * C)      # (h, w, c) flatten
    r_pad = ((R + 7) // 8) * 8                                   # pad M to sublanes
    pool_flat = jnp.pad(pool_flat, ((0, r_pad - R), (0, fcp["k_pad"] - fcp["k_in"])))

    out = fc_head(pool_flat.astype(jnp.bfloat16), fcp)           # (r_pad, n_out_pad)
    out = out[:R][inv_order]
    roi_cls_locs = out[:, :fcp["n_loc"]]
    roi_scores = out[:, fcp["n_loc"]:fcp["n_loc"] + fcp["n_cls"]]
    return roi_cls_locs, roi_scores


def init_params(key, in_dim, hidden, n_class):
    """Deterministic synthetic weights. Weights stored as (in, out), PyTorch
    flatten order (c, h, w) for w1's rows."""
    k1, k2, k3, k4 = jax.random.split(key, 4)
    params = {
        # classifier: two Linear(...,1024) layers with ReLU (VGG16-style, trimmed)
        "w1": jax.random.normal(k1, (in_dim, hidden), jnp.float32) * 0.01,
        "b1": jnp.zeros((1, hidden), jnp.float32),
        "w2": jax.random.normal(k2, (hidden, hidden), jnp.float32) * 0.01,
        "b2": jnp.zeros((1, hidden), jnp.float32),
        # normal_init(cls_loc, 0, 0.001)
        "w_loc": jax.random.normal(k3, (hidden, n_class * 4), jnp.float32) * 0.001,
        "b_loc": jnp.zeros((1, n_class * 4), jnp.float32),
        # normal_init(score, 0, 0.01)
        "w_score": jax.random.normal(k4, (hidden, n_class), jnp.float32) * 0.01,
        "b_score": jnp.zeros((1, n_class), jnp.float32),
    }
    return params


# ----------------------------------------------------------------------------- #
# numpy reference (torchvision RoIPool semantics) for sanity checking.
# ----------------------------------------------------------------------------- #
def np_roi_pool_ref(x, rois, roi_indices, roi_size, spatial_scale):
    x = np.asarray(x, np.float32)
    rois = np.asarray(rois, np.float32)
    N, C, H, W = x.shape
    R = rois.shape[0]
    out = np.zeros((R, C, roi_size, roi_size), np.float32)
    scale = np.float32(spatial_scale)
    for r in range(R):
        b = int(roi_indices[r])
        y1, x1, y2, x2 = rois[r]
        rsw = int(np.floor(np.float32(x1) * scale + np.float32(0.5)))
        rsh = int(np.floor(np.float32(y1) * scale + np.float32(0.5)))
        rew = int(np.floor(np.float32(x2) * scale + np.float32(0.5)))
        reh = int(np.floor(np.float32(y2) * scale + np.float32(0.5)))
        rw = max(rew - rsw + 1, 1)
        rh = max(reh - rsh + 1, 1)
        bh = np.float32(rh) / np.float32(roi_size)
        bw = np.float32(rw) / np.float32(roi_size)
        for ph in range(roi_size):
            hs = min(max(int(np.floor(np.float32(ph) * bh)) + rsh, 0), H)
            he = min(max(int(np.ceil(np.float32(ph + 1) * bh)) + rsh, 0), H)
            for pw in range(roi_size):
                ws = min(max(int(np.floor(np.float32(pw) * bw)) + rsw, 0), W)
                we = min(max(int(np.ceil(np.float32(pw + 1) * bw)) + rsw, 0), W)
                if he <= hs or we <= ws:
                    continue
                out[r, :, ph, pw] = x[b, :, hs:he, ws:we].max(axis=(1, 2))
    return out


if __name__ == "__main__":
    key = jax.random.PRNGKey(0)

    # Small, module-consistent shapes.
    N, C, H, W = 2, 8, 16, 16          # feature map (NCHW)
    roi_size = 7
    spatial_scale = 1.0 / 16.0
    n_class = 5
    hidden = 1024                      # fixed by nn.Linear(1024, ...) in the module
    R = 6                              # total RoIs across the batch

    k_x, k_tl, k_wh, k_p = jax.random.split(key, 4)
    x = jax.random.normal(k_x, (N, C, H, W), jnp.float32)

    tl = jax.random.uniform(k_tl, (R, 2), minval=0.0, maxval=180.0)    # (y1, x1)
    wh = jax.random.uniform(k_wh, (R, 2), minval=32.0, maxval=72.0)    # (h, w)
    rois = jnp.concatenate([tl, tl + wh], axis=1).astype(jnp.float32)  # (y1,x1,y2,x2)
    roi_indices = jnp.array([0, 1, 0, 1, 0, 1], jnp.int32)

    params = init_params(k_p, C * roi_size * roi_size, hidden, n_class)

    roi_cls_locs, roi_scores = roi_head_forward(
        x, rois, roi_indices, params, roi_size=roi_size, spatial_scale=spatial_scale)
    jax.block_until_ready((roi_cls_locs, roi_scores))

    assert roi_cls_locs.shape == (R, n_class * 4)
    assert roi_scores.shape == (R, n_class)

    # --- sanity check of the pooling kernel against a plain numpy reference ---
    x_nhwc = jnp.transpose(x, (0, 2, 3, 1))
    pooled_kernel = jax.block_until_ready(
        roi_pool(x_nhwc, rois, roi_indices, roi_size=roi_size,
                 spatial_scale=spatial_scale))                        # (R, rs, rs, C)
    pooled_kernel_nchw = np.transpose(np.asarray(pooled_kernel), (0, 3, 1, 2))
    pooled_ref = np_roi_pool_ref(x, rois, roi_indices, roi_size, spatial_scale)
    assert np.allclose(pooled_kernel_nchw, pooled_ref, atol=1e-5), "RoI pooling mismatch"

    # --- end-to-end check (validates w1 permutation, sort/unsort, padding, bf16) ---
    ref_flat = jnp.asarray(pooled_ref.reshape(R, -1))                 # (c,h,w) order
    h_ref = jax.nn.relu(ref_flat @ params["w1"] + params["b1"])
    h_ref = jax.nn.relu(h_ref @ params["w2"] + params["b2"])
    ref_locs = h_ref @ params["w_loc"] + params["b_loc"]
    ref_scores = h_ref @ params["w_score"] + params["b_score"]
    assert np.allclose(np.asarray(roi_cls_locs), np.asarray(ref_locs),
                       rtol=5e-2, atol=1e-3), "cls_loc mismatch"
    assert np.allclose(np.asarray(roi_scores), np.asarray(ref_scores),
                       rtol=5e-2, atol=1e-3), "score mismatch"

    print("KERNEL_OK")
</pallas_src>

<mosaic_0001>
module attributes {stable_mosaic.version = 11 : i64} {
  func.func @_roi_pool_kernel(%arg0: i32, %arg1: memref<6xi32, #tpu.memory_space<smem>>, %arg2: memref<24xf32, #tpu.memory_space<smem>>, %arg3: memref<1x16x16x8xf32, #tpu.memory_space<vmem>>, %arg4: memref<1x7x7x8xf32, #tpu.memory_space<vmem>>, %arg5: memref<7x16x8xf32, #tpu.memory_space<vmem>>) attributes {dimension_semantics = [#tpu.dimension_semantics<parallel>], iteration_bounds = array<i64: 6>, scalar_prefetch = 1 : i64, scratch_operands = 1 : i64, tpu.core_type = #tpu.core_type<tc>, window_params = [{transform_indices = @transform_0, window_bounds = array<i64: 24>}, {transform_indices = @transform_1, window_bounds = array<i64: 1, 16, 16, 8>}, {transform_indices = @transform_2, window_bounds = array<i64: 1, 7, 7, 8>}]} {
    %c4_i32 = arith.constant 4 : i32
    %0 = arith.muli %c4_i32, %arg0 : i32
    %c0_i32 = arith.constant 0 : i32
    %1 = arith.addi %0, %c0_i32 : i32
    %2 = arith.index_cast %1 : i32 to index
    %3 = memref.load %arg2[%2] : memref<24xf32, #tpu.memory_space<smem>>
    %c4_i32_0 = arith.constant 4 : i32
    %4 = arith.muli %c4_i32_0, %arg0 : i32
    %c1_i32 = arith.constant 1 : i32
    %5 = arith.addi %4, %c1_i32 : i32
    %6 = arith.index_cast %5 : i32 to index
    %7 = memref.load %arg2[%6] : memref<24xf32, #tpu.memory_space<smem>>
    %c4_i32_1 = arith.constant 4 : i32
    %8 = arith.muli %c4_i32_1, %arg0 : i32
    %c2_i32 = arith.constant 2 : i32
    %9 = arith.addi %8, %c2_i32 : i32
    %10 = arith.index_cast %9 : i32 to index
    %11 = memref.load %arg2[%10] : memref<24xf32, #tpu.memory_space<smem>>
    %c4_i32_2 = arith.constant 4 : i32
    %12 = arith.muli %c4_i32_2, %arg0 : i32
    %c3_i32 = arith.constant 3 : i32
    %13 = arith.addi %12, %c3_i32 : i32
    %14 = arith.index_cast %13 : i32 to index
    %15 = memref.load %arg2[%14] : memref<24xf32, #tpu.memory_space<smem>>
    %cst = arith.constant 6.250000e-02 : f32
    %16 = arith.mulf %7, %cst : f32
    %cst_3 = arith.constant 5.000000e-01 : f32
    %17 = arith.addf %16, %cst_3 : f32
    %18 = math.floor %17 : f32
    %19 = arith.fptosi %18 : f32 to i32
    %cst_4 = arith.constant 6.250000e-02 : f32
    %20 = arith.mulf %3, %cst_4 : f32
    %cst_5 = arith.constant 5.000000e-01 : f32
    %21 = arith.addf %20, %cst_5 : f32
    %22 = math.floor %21 : f32
    %23 = arith.fptosi %22 : f32 to i32
    %cst_6 = arith.constant 6.250000e-02 : f32
    %24 = arith.mulf %15, %cst_6 : f32
    %cst_7 = arith.constant 5.000000e-01 : f32
    %25 = arith.addf %24, %cst_7 : f32
    %26 = math.floor %25 : f32
    %27 = arith.fptosi %26 : f32 to i32
    %cst_8 = arith.constant 6.250000e-02 : f32
    %28 = arith.mulf %11, %cst_8 : f32
    %cst_9 = arith.constant 5.000000e-01 : f32
    %29 = arith.addf %28, %cst_9 : f32
    %30 = math.floor %29 : f32
    %31 = arith.fptosi %30 : f32 to i32
    %32 = arith.subi %27, %19 : i32
    %c1_i32_10 = arith.constant 1 : i32
    %33 = arith.addi %32, %c1_i32_10 : i32
    %c1_i32_11 = arith.constant 1 : i32
    %34 = arith.maxsi %33, %c1_i32_11 : i32
    %35 = arith.subi %31, %23 : i32
    %c1_i32_12 = arith.constant 1 : i32
    %36 = arith.addi %35, %c1_i32_12 : i32
    %c1_i32_13 = arith.constant 1 : i32
    %37 = arith.maxsi %36, %c1_i32_13 : i32
    %38 = arith.sitofp %37 : i32 to f32
    %cst_14 = arith.constant 7.000000e+00 : f32
    %39 = arith.divf %38, %cst_14 : f32
    %40 = arith.sitofp %34 : i32 to f32
    %cst_15 = arith.constant 7.000000e+00 : f32
    %41 = arith.divf %40, %cst_15 : f32
    %c0 = arith.constant 0 : index
    %c0_16 = arith.constant 0 : index
    %c0_17 = arith.constant 0 : index
    %c0_18 = arith.constant 0 : index
    %42 = vector.load %arg3[%c0, %c0_16, %c0_17, %c0_18] : memref<1x16x16x8xf32, #tpu.memory_space<vmem>>, vector<1x16x16x8xf32>
    %43 = vector.shape_cast %42 : vector<1x16x16x8xf32> to vector<16x16x8xf32>
    %44 = tpu.iota {dimensions = array<i32: 1>} : vector<16x16x8xi32>
    %45 = tpu.iota {dimensions = array<i32: 1>} : vector<7x16x8xi32>
    %cst_19 = arith.constant 0.000000e+00 : f32
    %46 = arith.mulf %cst_19, %41 : f32
    %47 = math.floor %46 : f32
    %48 = arith.fptosi %47 : f32 to i32
    %49 = arith.addi %48, %19 : i32
    %c0_i32_20 = arith.constant 0 : i32
    %c16_i32 = arith.constant 16 : i32
    %50 = arith.maxsi %c0_i32_20, %49 : i32
    %51 = arith.minsi %c16_i32, %50 : i32
    %cst_21 = arith.constant 1.000000e+00 : f32
    %52 = arith.mulf %cst_21, %41 : f32
    %53 = math.ceil %52 : f32
    %54 = arith.fptosi %53 : f32 to i32
    %55 = arith.addi %54, %19 : i32
    %c0_i32_22 = arith.constant 0 : i32
    %c16_i32_23 = arith.constant 16 : i32
    %56 = arith.maxsi %c0_i32_22, %55 : i32
    %57 = arith.minsi %c16_i32_23, %56 : i32
    %58 = vector.broadcast %51 : i32 to vector<16x16x8xi32>
    %59 = arith.cmpi sge, %44, %58 : vector<16x16x8xi32>
    %60 = vector.broadcast %57 : i32 to vector<16x16x8xi32>
    %61 = arith.cmpi slt, %44, %60 : vector<16x16x8xi32>
    %62 = arith.andi %59, %61 : vector<16x16x8xi1>
    %cst_24 = arith.constant 0xFF800000 : f32
    %63 = vector.broadcast %cst_24 : f32 to vector<16x16x8xf32>
    %64 = arith.select %62, %43, %63 : vector<16x16x8xi1>, vector<16x16x8xf32>
    %cst_25 = arith.constant dense<0xFF800000> : vector<16x8xf32>
    %65 = vector.multi_reduction <maximumf>, %64, %cst_25 [1] : vector<16x16x8xf32> to vector<16x8xf32>
    %c0_26 = arith.constant 0 : index
    %c0_27 = arith.constant 0 : index
    %c0_28 = arith.constant 0 : index
    %66 = vector.load %arg5[%c0_26, %c0_27, %c0_28] : memref<7x16x8xf32, #tpu.memory_space<vmem>>, vector<1x16x8xf32>
    %67 = vector.shape_cast %66 : vector<1x16x8xf32> to vector<16x8xf32>
    %68 = vector.shape_cast %65 : vector<16x8xf32> to vector<1x16x8xf32>
    tpu.vector_store %arg5[%c0_26, %c0_27, %c0_28], %68 {strides = array<i32>} : memref<7x16x8xf32, #tpu.memory_space<vmem>>, vector<1x16x8xf32>,
    %cst_29 = arith.constant 1.000000e+00 : f32
    %69 = arith.mulf %cst_29, %41 : f32
    %70 = math.floor %69 : f32
    %71 = arith.fptosi %70 : f32 to i32
    %72 = arith.addi %71, %19 : i32
    %c0_i32_30 = arith.constant 0 : i32
    %c16_i32_31 = arith.constant 16 : i32
    %73 = arith.maxsi %c0_i32_30, %72 : i32
    %74 = arith.minsi %c16_i32_31, %73 : i32
    %cst_32 = arith.constant 2.000000e+00 : f32
    %75 = arith.mulf %cst_32, %41 : f32
    %76 = math.ceil %75 : f32
    %77 = arith.fptosi %76 : f32 to i32
    %78 = arith.addi %77, %19 : i32
    %c0_i32_33 = arith.constant 0 : i32
    %c16_i32_34 = arith.constant 16 : i32
    %79 = arith.maxsi %c0_i32_33, %78 : i32
    %80 = arith.minsi %c16_i32_34, %79 : i32
    %81 = vector.broadcast %74 : i32 to vector<16x16x8xi32>
    %82 = arith.cmpi sge, %44, %81 : vector<16x16x8xi32>
    %83 = vector.broadcast %80 : i32 to vector<16x16x8xi32>
    %84 = arith.cmpi slt, %44, %83 : vector<16x16x8xi32>
    %85 = arith.andi %82, %84 : vector<16x16x8xi1>
    %cst_35 = arith.constant 0xFF800000 : f32
    %86 = vector.broadcast %cst_35 : f32 to vector<16x16x8xf32>
    %87 = arith.select %85, %43, %86 : vector<16x16x8xi1>, vector<16x16x8xf32>
    %cst_36 = arith.constant dense<0xFF800000> : vector<16x8xf32>
    %88 = vector.multi_reduction <maximumf>, %87, %cst_36 [1] : vector<16x16x8xf32> to vector<16x8xf32>
    %c1 = arith.constant 1 : index
    %c0_37 = arith.constant 0 : index
    %c0_38 = arith.constant 0 : index
    %89 = vector.load %arg5[%c1, %c0_37, %c0_38] : memref<7x16x8xf32, #tpu.memory_space<vmem>>, vector<1x16x8xf32>
    %90 = vector.shape_cast %89 : vector<1x16x8xf32> to vector<16x8xf32>
    %91 = vector.shape_cast %88 : vector<16x8xf32> to vector<1x16x8xf32>
    tpu.vector_store %arg5[%c1, %c0_37, %c0_38], %91 {strides = array<i32>} : memref<7x16x8xf32, #tpu.memory_space<vmem>>, vector<1x16x8xf32>,
    %cst_39 = arith.constant 2.000000e+00 : f32
    %92 = arith.mulf %cst_39, %41 : f32
    %93 = math.floor %92 : f32
    %94 = arith.fptosi %93 : f32 to i32
    %95 = arith.addi %94, %19 : i32
    %c0_i32_40 = arith.constant 0 : i32
    %c16_i32_41 = arith.constant 16 : i32
    %96 = arith.maxsi %c0_i32_40, %95 : i32
    %97 = arith.minsi %c16_i32_41, %96 : i32
    %cst_42 = arith.constant 3.000000e+00 : f32
    %98 = arith.mulf %cst_42, %41 : f32
    %99 = math.ceil %98 : f32
    %100 = arith.fptosi %99 : f32 to i32
    %101 = arith.addi %100, %19 : i32
    %c0_i32_43 = arith.constant 0 : i32
    %c16_i32_44 = arith.constant 16 : i32
    %102 = arith.maxsi %c0_i32_43, %101 : i32
    %103 = arith.minsi %c16_i32_44, %102 : i32
    %104 = vector.broadcast %97 : i32 to vector<16x16x8xi32>
    %105 = arith.cmpi sge, %44, %104 : vector<16x16x8xi32>
    %106 = vector.broadcast %103 : i32 to vector<16x16x8xi32>
    %107 = arith.cmpi slt, %44, %106 : vector<16x16x8xi32>
    %108 = arith.andi %105, %107 : vector<16x16x8xi1>
    %cst_45 = arith.constant 0xFF800000 : f32
    %109 = vector.broadcast %cst_45 : f32 to vector<16x16x8xf32>
    %110 = arith.select %108, %43, %109 : vector<16x16x8xi1>, vector<16x16x8xf32>
    %cst_46 = arith.constant dense<0xFF800000> : vector<16x8xf32>
    %111 = vector.multi_reduction <maximumf>, %110, %cst_46 [1] : vector<16x16x8xf32> to vector<16x8xf32>
    %c2 = arith.constant 2 : index
    %c0_47 = arith.constant 0 : index
    %c0_48 = arith.constant 0 : index
    %112 = vector.load %arg5[%c2, %c0_47, %c0_48] : memref<7x16x8xf32, #tpu.memory_space<vmem>>, vector<1x16x8xf32>
    %113 = vector.shape_cast %112 : vector<1x16x8xf32> to vector<16x8xf32>
    %114 = vector.shape_cast %111 : vector<16x8xf32> to vector<1x16x8xf32>
    tpu.vector_store %arg5[%c2, %c0_47, %c0_48], %114 {strides = array<i32>} : memref<7x16x8xf32, #tpu.memory_space<vmem>>, vector<1x16x8xf32>,
    %cst_49 = arith.constant 3.000000e+00 : f32
    %115 = arith.mulf %cst_49, %41 : f32
    %116 = math.floor %115 : f32
    %117 = arith.fptosi %116 : f32 to i32
    %118 = arith.addi %117, %19 : i32
    %c0_i32_50 = arith.constant 0 : i32
    %c16_i32_51 = arith.constant 16 : i32
    %119 = arith.maxsi %c0_i32_50, %118 : i32
    %120 = arith.minsi %c16_i32_51, %119 : i32
    %cst_52 = arith.constant 4.000000e+00 : f32
    %121 = arith.mulf %cst_52, %41 : f32
    %122 = math.ceil %121 : f32
    %123 = arith.fptosi %122 : f32 to i32
    %124 = arith.addi %123, %19 : i32
    %c0_i32_53 = arith.constant 0 : i32
    %c16_i32_54 = arith.constant 16 : i32
    %125 = arith.maxsi %c0_i32_53, %124 : i32
    %126 = arith.minsi %c16_i32_54, %125 : i32
    %127 = vector.broadcast %120 : i32 to vector<16x16x8xi32>
    %128 = arith.cmpi sge, %44, %127 : vector<16x16x8xi32>
    %129 = vector.broadcast %126 : i32 to vector<16x16x8xi32>
    %130 = arith.cmpi slt, %44, %129 : vector<16x16x8xi32>
    %131 = arith.andi %128, %130 : vector<16x16x8xi1>
    %cst_55 = arith.constant 0xFF800000 : f32
    %132 = vector.broadcast %cst_55 : f32 to vector<16x16x8xf32>
    %133 = arith.select %131, %43, %132 : vector<16x16x8xi1>, vector<16x16x8xf32>
    %cst_56 = arith.constant dense<0xFF800000> : vector<16x8xf32>
    %134 = vector.multi_reduction <maximumf>, %133, %cst_56 [1] : vector<16x16x8xf32> to vector<16x8xf32>
    %c3 = arith.constant 3 : index
    %c0_57 = arith.constant 0 : index
    %c0_58 = arith.constant 0 : index
    %135 = vector.load %arg5[%c3, %c0_57, %c0_58] : memref<7x16x8xf32, #tpu.memory_space<vmem>>, vector<1x16x8xf32>
    %136 = vector.shape_cast %135 : vector<1x16x8xf32> to vector<16x8xf32>
    %137 = vector.shape_cast %134 : vector<16x8xf32> to vector<1x16x8xf32>
    tpu.vector_store %arg5[%c3, %c0_57, %c0_58], %137 {strides = array<i32>} : memref<7x16x8xf32, #tpu.memory_space<vmem>>, vector<1x16x8xf32>,
    %cst_59 = arith.constant 4.000000e+00 : f32
    %138 = arith.mulf %cst_59, %41 : f32
    %139 = math.floor %138 : f32
    %140 = arith.fptosi %139 : f32 to i32
    %141 = arith.addi %140, %19 : i32
    %c0_i32_60 = arith.constant 0 : i32
    %c16_i32_61 = arith.constant 16 : i32
    %142 = arith.maxsi %c0_i32_60, %141 : i32
    %143 = arith.minsi %c16_i32_61, %142 : i32
    %cst_62 = arith.constant 5.000000e+00 : f32
    %144 = arith.mulf %cst_62, %41 : f32
    %145 = math.ceil %144 : f32
    %146 = arith.fptosi %145 : f32 to i32
    %147 = arith.addi %146, %19 : i32
    %c0_i32_63 = arith.constant 0 : i32
    %c16_i32_64 = arith.constant 16 : i32
    %148 = arith.maxsi %c0_i32_63, %147 : i32
    %149 = arith.minsi %c16_i32_64, %148 : i32
    %150 = vector.broadcast %143 : i32 to vector<16x16x8xi32>
    %151 = arith.cmpi sge, %44, %150 : vector<16x16x8xi32>
    %152 = vector.broadcast %149 : i32 to vector<16x16x8xi32>
    %153 = arith.cmpi slt, %44, %152 : vector<16x16x8xi32>
    %154 = arith.andi %151, %153 : vector<16x16x8xi1>
    %cst_65 = arith.constant 0xFF800000 : f32
    %155 = vector.broadcast %cst_65 : f32 to vector<16x16x8xf32>
    %156 = arith.select %154, %43, %155 : vector<16x16x8xi1>, vector<16x16x8xf32>
    %cst_66 = arith.constant dense<0xFF800000> : vector<16x8xf32>
    %157 = vector.multi_reduction <maximumf>, %156, %cst_66 [1] : vector<16x16x8xf32> to vector<16x8xf32>
    %c4 = arith.constant 4 : index
    %c0_67 = arith.constant 0 : index
    %c0_68 = arith.constant 0 : index
    %158 = vector.load %arg5[%c4, %c0_67, %c0_68] : memref<7x16x8xf32, #tpu.memory_space<vmem>>, vector<1x16x8xf32>
    %159 = vector.shape_cast %158 : vector<1x16x8xf32> to vector<16x8xf32>
    %160 = vector.shape_cast %157 : vector<16x8xf32> to vector<1x16x8xf32>
    tpu.vector_store %arg5[%c4, %c0_67, %c0_68], %160 {strides = array<i32>} : memref<7x16x8xf32, #tpu.memory_space<vmem>>, vector<1x16x8xf32>,
    %cst_69 = arith.constant 5.000000e+00 : f32
    %161 = arith.mulf %cst_69, %41 : f32
    %162 = math.floor %161 : f32
    %163 = arith.fptosi %162 : f32 to i32
    %164 = arith.addi %163, %19 : i32
    %c0_i32_70 = arith.constant 0 : i32
    %c16_i32_71 = arith.constant 16 : i32
    %165 = arith.maxsi %c0_i32_70, %164 : i32
    %166 = arith.minsi %c16_i32_71, %165 : i32
    %cst_72 = arith.constant 6.000000e+00 : f32
    %167 = arith.mulf %cst_72, %41 : f32
    %168 = math.ceil %167 : f32
    %169 = arith.fptosi %168 : f32 to i32
    %170 = arith.addi %169, %19 : i32
    %c0_i32_73 = arith.constant 0 : i32
    %c16_i32_74 = arith.constant 16 : i32
    %171 = arith.maxsi %c0_i32_73, %170 : i32
    %172 = arith.minsi %c16_i32_74, %171 : i32
    %173 = vector.broadcast %166 : i32 to vector<16x16x8xi32>
    %174 = arith.cmpi sge, %44, %173 : vector<16x16x8xi32>
    %175 = vector.broadcast %172 : i32 to vector<16x16x8xi32>
    %176 = arith.cmpi slt, %44, %175 : vector<16x16x8xi32>
    %177 = arith.andi %174, %176 : vector<16x16x8xi1>
    %cst_75 = arith.constant 0xFF800000 : f32
    %178 = vector.broadcast %cst_75 : f32 to vector<16x16x8xf32>
    %179 = arith.select %177, %43, %178 : vector<16x16x8xi1>, vector<16x16x8xf32>
    %cst_76 = arith.constant dense<0xFF800000> : vector<16x8xf32>
    %180 = vector.multi_reduction <maximumf>, %179, %cst_76 [1] : vector<16x16x8xf32> to vector<16x8xf32>
    %c5 = arith.constant 5 : index
    %c0_77 = arith.constant 0 : index
    %c0_78 = arith.constant 0 : index
    %181 = vector.load %arg5[%c5, %c0_77, %c0_78] : memref<7x16x8xf32, #tpu.memory_space<vmem>>, vector<1x16x8xf32>
    %182 = vector.shape_cast %181 : vector<1x16x8xf32> to vector<16x8xf32>
    %183 = vector.shape_cast %180 : vector<16x8xf32> to vector<1x16x8xf32>
    tpu.vector_store %arg5[%c5, %c0_77, %c0_78], %183 {strides = array<i32>} : memref<7x16x8xf32, #tpu.memory_space<vmem>>, vector<1x16x8xf32>,
    %cst_79 = arith.constant 6.000000e+00 : f32
    %184 = arith.mulf %cst_79, %41 : f32
    %185 = math.floor %184 : f32
    %186 = arith.fptosi %185 : f32 to i32
    %187 = arith.addi %186, %19 : i32
    %c0_i32_80 = arith.constant 0 : i32
    %c16_i32_81 = arith.constant 16 : i32
    %188 = arith.maxsi %c0_i32_80, %187 : i32
    %189 = arith.minsi %c16_i32_81, %188 : i32
    %cst_82 = arith.constant 7.000000e+00 : f32
    %190 = arith.mulf %cst_82, %41 : f32
    %191 = math.ceil %190 : f32
    %192 = arith.fptosi %191 : f32 to i32
    %193 = arith.addi %192, %19 : i32
    %c0_i32_83 = arith.constant 0 : i32
    %c16_i32_84 = arith.constant 16 : i32
    %194 = arith.maxsi %c0_i32_83, %193 : i32
    %195 = arith.minsi %c16_i32_84, %194 : i32
    %196 = vector.broadcast %189 : i32 to vector<16x16x8xi32>
    %197 = arith.cmpi sge, %44, %196 : vector<16x16x8xi32>
    %198 = vector.broadcast %195 : i32 to vector<16x16x8xi32>
    %199 = arith.cmpi slt, %44, %198 : vector<16x16x8xi32>
    %200 = arith.andi %197, %199 : vector<16x16x8xi1>
    %cst_85 = arith.constant 0xFF800000 : f32
    %201 = vector.broadcast %cst_85 : f32 to vector<16x16x8xf32>
    %202 = arith.select %200, %43, %201 : vector<16x16x8xi1>, vector<16x16x8xf32>
    %cst_86 = arith.constant dense<0xFF800000> : vector<16x8xf32>
    %203 = vector.multi_reduction <maximumf>, %202, %cst_86 [1] : vector<16x16x8xf32> to vector<16x8xf32>
    %c6 = arith.constant 6 : index
    %c0_87 = arith.constant 0 : index
    %c0_88 = arith.constant 0 : index
    %204 = vector.load %arg5[%c6, %c0_87, %c0_88] : memref<7x16x8xf32, #tpu.memory_space<vmem>>, vector<1x16x8xf32>
    %205 = vector.shape_cast %204 : vector<1x16x8xf32> to vector<16x8xf32>
    %206 = vector.shape_cast %203 : vector<16x8xf32> to vector<1x16x8xf32>
    tpu.vector_store %arg5[%c6, %c0_87, %c0_88], %206 {strides = array<i32>} : memref<7x16x8xf32, #tpu.memory_space<vmem>>, vector<1x16x8xf32>,
    %cst_89 = arith.constant 0.000000e+00 : f32
    %207 = arith.mulf %cst_89, %39 : f32
    %208 = math.floor %207 : f32
    %209 = arith.fptosi %208 : f32 to i32
    %210 = arith.addi %209, %23 : i32
    %c0_i32_90 = arith.constant 0 : i32
    %c16_i32_91 = arith.constant 16 : i32
    %211 = arith.maxsi %c0_i32_90, %210 : i32
    %212 = arith.minsi %c16_i32_91, %211 : i32
    %cst_92 = arith.constant 1.000000e+00 : f32
    %213 = arith.mulf %cst_92, %39 : f32
    %214 = math.ceil %213 : f32
    %215 = arith.fptosi %214 : f32 to i32
    %216 = arith.addi %215, %23 : i32
    %c0_i32_93 = arith.constant 0 : i32
    %c16_i32_94 = arith.constant 16 : i32
    %217 = arith.maxsi %c0_i32_93, %216 : i32
    %218 = arith.minsi %c16_i32_94, %217 : i32
    %219 = vector.broadcast %212 : i32 to vector<7x16x8xi32>
    %220 = arith.cmpi sge, %45, %219 : vector<7x16x8xi32>
    %221 = vector.broadcast %218 : i32 to vector<7x16x8xi32>
    %222 = arith.cmpi slt, %45, %221 : vector<7x16x8xi32>
    %223 = arith.andi %220, %222 : vector<7x16x8xi1>
    %c0_95 = arith.constant 0 : index
    %c0_96 = arith.constant 0 : index
    %c0_97 = arith.constant 0 : index
    %224 = vector.load %arg5[%c0_95, %c0_96, %c0_97] : memref<7x16x8xf32, #tpu.memory_space<vmem>>, vector<7x16x8xf32>
    %cst_98 = arith.constant 0xFF800000 : f32
    %225 = vector.broadcast %cst_98 : f32 to vector<7x16x8xf32>
    %226 = arith.select %223, %224, %225 : vector<7x16x8xi1>, vector<7x16x8xf32>
    %cst_99 = arith.constant dense<0xFF800000> : vector<7x8xf32>
    %227 = vector.multi_reduction <maximumf>, %226, %cst_99 [1] : vector<7x16x8xf32> to vector<7x8xf32>
    %cst_100 = arith.constant 0xFF800000 : f32
    %228 = vector.broadcast %cst_100 : f32 to vector<7x8xf32>
    %229 = arith.cmpf oeq, %227, %228 : vector<7x8xf32>
    %cst_101 = arith.constant 0.000000e+00 : f32
    %230 = vector.broadcast %cst_101 : f32 to vector<7x8xf32>
    %231 = arith.select %229, %230, %227 : vector<7x8xi1>, vector<7x8xf32>
    %c0_102 = arith.constant 0 : index
    %c0_103 = arith.constant 0 : index
    %c0_104 = arith.constant 0 : index
    %c0_105 = arith.constant 0 : index
    %232 = vector.load %arg4[%c0_102, %c0_103, %c0_104, %c0_105] : memref<1x7x7x8xf32, #tpu.memory_space<vmem>>, vector<1x1x7x8xf32>
    %233 = vector.shape_cast %232 : vector<1x1x7x8xf32> to vector<7x8xf32>
    %234 = vector.shape_cast %231 : vector<7x8xf32> to vector<1x1x7x8xf32>
    tpu.vector_store %arg4[%c0_102, %c0_103, %c0_104, %c0_105], %234 {strides = array<i32>} : memref<1x7x7x8xf32, #tpu.memory_space<vmem>>, vector<1x1x7x8xf32>,
    %cst_106 = arith.constant 1.000000e+00 : f32
    %235 = arith.mulf %cst_106, %39 : f32
    %236 = math.floor %235 : f32
    %237 = arith.fptosi %236 : f32 to i32
    %238 = arith.addi %237, %23 : i32
    %c0_i32_107 = arith.constant 0 : i32
    %c16_i32_108 = arith.constant 16 : i32
    %239 = arith.maxsi %c0_i32_107, %238 : i32
    %240 = arith.minsi %c16_i32_108, %239 : i32
    %cst_109 = arith.constant 2.000000e+00 : f32
    %241 = arith.mulf %cst_109, %39 : f32
    %242 = math.ceil %241 : f32
    %243 = arith.fptosi %242 : f32 to i32
    %244 = arith.addi %243, %23 : i32
    %c0_i32_110 = arith.constant 0 : i32
    %c16_i32_111 = arith.constant 16 : i32
    %245 = arith.maxsi %c0_i32_110, %244 : i32
    %246 = arith.minsi %c16_i32_111, %245 : i32
    %247 = vector.broadcast %240 : i32 to vector<7x16x8xi32>
    %248 = arith.cmpi sge, %45, %247 : vector<7x16x8xi32>
    %249 = vector.broadcast %246 : i32 to vector<7x16x8xi32>
    %250 = arith.cmpi slt, %45, %249 : vector<7x16x8xi32>
    %251 = arith.andi %248, %250 : vector<7x16x8xi1>
    %c0_112 = arith.constant 0 : index
    %c0_113 = arith.constant 0 : index
    %c0_114 = arith.constant 0 : index
    %252 = vector.load %arg5[%c0_112, %c0_113, %c0_114] : memref<7x16x8xf32, #tpu.memory_space<vmem>>, vector<7x16x8xf32>
    %cst_115 = arith.constant 0xFF800000 : f32
    %253 = vector.broadcast %cst_115 : f32 to vector<7x16x8xf32>
    %254 = arith.select %251, %252, %253 : vector<7x16x8xi1>, vector<7x16x8xf32>
    %cst_116 = arith.constant dense<0xFF800000> : vector<7x8xf32>
    %255 = vector.multi_reduction <maximumf>, %254, %cst_116 [1] : vector<7x16x8xf32> to vector<7x8xf32>
    %cst_117 = arith.constant 0xFF800000 : f32
    %256 = vector.broadcast %cst_117 : f32 to vector<7x8xf32>
    %257 = arith.cmpf oeq, %255, %256 : vector<7x8xf32>
    %cst_118 = arith.constant 0.000000e+00 : f32
    %258 = vector.broadcast %cst_118 : f32 to vector<7x8xf32>
    %259 = arith.select %257, %258, %255 : vector<7x8xi1>, vector<7x8xf32>
    %c0_119 = arith.constant 0 : index
    %c1_120 = arith.constant 1 : index
    %c0_121 = arith.constant 0 : index
    %c0_122 = arith.constant 0 : index
    %260 = vector.load %arg4[%c0_119, %c1_120, %c0_121, %c0_122] : memref<1x7x7x8xf32, #tpu.memory_space<vmem>>, vector<1x1x7x8xf32>
    %261 = vector.shape_cast %260 : vector<1x1x7x8xf32> to vector<7x8xf32>
    %262 = vector.shape_cast %259 : vector<7x8xf32> to vector<1x1x7x8xf32>
    tpu.vector_store %arg4[%c0_119, %c1_120, %c0_121, %c0_122], %262 {strides = array<i32>} : memref<1x7x7x8xf32, #tpu.memory_space<vmem>>, vector<1x1x7x8xf32>,
    %cst_123 = arith.constant 2.000000e+00 : f32
    %263 = arith.mulf %cst_123, %39 : f32
    %264 = math.floor %263 : f32
    %265 = arith.fptosi %264 : f32 to i32
    %266 = arith.addi %265, %23 : i32
    %c0_i32_124 = arith.constant 0 : i32
    %c16_i32_125 = arith.constant 16 : i32
    %267 = arith.maxsi %c0_i32_124, %266 : i32
    %268 = arith.minsi %c16_i32_125, %267 : i32
    %cst_126 = arith.constant 3.000000e+00 : f32
    %269 = arith.mulf %cst_126, %39 : f32
    %270 = math.ceil %269 : f32
    %271 = arith.fptosi %270 : f32 to i32
    %272 = arith.addi %271, %23 : i32
    %c0_i32_127 = arith.constant 0 : i32
    %c16_i32_128 = arith.constant 16 : i32
    %273 = arith.maxsi %c0_i32_127, %272 : i32
    %274 = arith.minsi %c16_i32_128, %273 : i32
    %275 = vector.broadcast %268 : i32 to vector<7x16x8xi32>
    %276 = arith.cmpi sge, %45, %275 : vector<7x16x8xi32>
    %277 = vector.broadcast %274 : i32 to vector<7x16x8xi32>
    %278 = arith.cmpi slt, %45, %277 : vector<7x16x8xi32>
    %279 = arith.andi %276, %278 : vector<7x16x8xi1>
    %c0_129 = arith.constant 0 : index
    %c0_130 = arith.constant 0 : index
    %c0_131 = arith.constant 0 : index
    %280 = vector.load %arg5[%c0_129, %c0_130, %c0_131] : memref<7x16x8xf32, #tpu.memory_space<vmem>>, vector<7x16x8xf32>
    %cst_132 = arith.constant 0xFF800000 : f32
    %281 = vector.broadcast %cst_132 : f32 to vector<7x16x8xf32>
    %282 = arith.select %279, %280, %281 : vector<7x16x8xi1>, vector<7x16x8xf32>
    %cst_133 = arith.constant dense<0xFF800000> : vector<7x8xf32>
    %283 = vector.multi_reduction <maximumf>, %282, %cst_133 [1] : vector<7x16x8xf32> to vector<7x8xf32>
    %cst_134 = arith.constant 0xFF800000 : f32
    %284 = vector.broadcast %cst_134 : f32 to vector<7x8xf32>
    %285 = arith.cmpf oeq, %283, %284 : vector<7x8xf32>
    %cst_135 = arith.constant 0.000000e+00 : f32
    %286 = vector.broadcast %cst_135 : f32 to vector<7x8xf32>
    %287 = arith.select %285, %286, %283 : vector<7x8xi1>, vector<7x8xf32>
    %c0_136 = arith.constant 0 : index
    %c2_137 = arith.constant 2 : index
    %c0_138 = arith.constant 0 : index
    %c0_139 = arith.constant 0 : index
    %288 = vector.load %arg4[%c0_136, %c2_137, %c0_138, %c0_139] : memref<1x7x7x8xf32, #tpu.memory_space<vmem>>, vector<1x1x7x8xf32>
    %289 = vector.shape_cast %288 : vector<1x1x7x8xf32> to vector<7x8xf32>
    %290 = vector.shape_cast %287 : vector<7x8xf32> to vector<1x1x7x8xf32>
    tpu.vector_store %arg4[%c0_136, %c2_137, %c0_138, %c0_139], %290 {strides = array<i32>} : memref<1x7x7x8xf32, #tpu.memory_space<vmem>>, vector<1x1x7x8xf32>,
    %cst_140 = arith.constant 3.000000e+00 : f32
    %291 = arith.mulf %cst_140, %39 : f32
    %292 = math.floor %291 : f32
    %293 = arith.fptosi %292 : f32 to i32
    %294 = arith.addi %293, %23 : i32
    %c0_i32_141 = arith.constant 0 : i32
    %c16_i32_142 = arith.constant 16 : i32
    %295 = arith.maxsi %c0_i32_141, %294 : i32
    %296 = arith.minsi %c16_i32_142, %295 : i32
    %cst_143 = arith.constant 4.000000e+00 : f32
    %297 = arith.mulf %cst_143, %39 : f32
    %298 = math.ceil %297 : f32
    %299 = arith.fptosi %298 : f32 to i32
    %300 = arith.addi %299, %23 : i32
    %c0_i32_144 = arith.constant 0 : i32
    %c16_i32_145 = arith.constant 16 : i32
    %301 = arith.maxsi %c0_i32_144, %300 : i32
    %302 = arith.minsi %c16_i32_145, %301 : i32
    %303 = vector.broadcast %296 : i32 to vector<7x16x8xi32>
    %304 = arith.cmpi sge, %45, %303 : vector<7x16x8xi32>
    %305 = vector.broadcast %302 : i32 to vector<7x16x8xi32>
    %306 = arith.cmpi slt, %45, %305 : vector<7x16x8xi32>
    %307 = arith.andi %304, %306 : vector<7x16x8xi1>
    %c0_146 = arith.constant 0 : index
    %c0_147 = arith.constant 0 : index
    %c0_148 = arith.constant 0 : index
    %308 = vector.load %arg5[%c0_146, %c0_147, %c0_148] : memref<7x16x8xf32, #tpu.memory_space<vmem>>, vector<7x16x8xf32>
    %cst_149 = arith.constant 0xFF800000 : f32
    %309 = vector.broadcast %cst_149 : f32 to vector<7x16x8xf32>
    %310 = arith.select %307, %308, %309 : vector<7x16x8xi1>, vector<7x16x8xf32>
    %cst_150 = arith.constant dense<0xFF800000> : vector<7x8xf32>
    %311 = vector.multi_reduction <maximumf>, %310, %cst_150 [1] : vector<7x16x8xf32> to vector<7x8xf32>
    %cst_151 = arith.constant 0xFF800000 : f32
    %312 = vector.broadcast %cst_151 : f32 to vector<7x8xf32>
    %313 = arith.cmpf oeq, %311, %312 : vector<7x8xf32>
    %cst_152 = arith.constant 0.000000e+00 : f32
    %314 = vector.broadcast %cst_152 : f32 to vector<7x8xf32>
    %315 = arith.select %313, %314, %311 : vector<7x8xi1>, vector<7x8xf32>
    %c0_153 = arith.constant 0 : index
    %c3_154 = arith.constant 3 : index
    %c0_155 = arith.constant 0 : index
    %c0_156 = arith.constant 0 : index
    %316 = vector.load %arg4[%c0_153, %c3_154, %c0_155, %c0_156] : memref<1x7x7x8xf32, #tpu.memory_space<vmem>>, vector<1x1x7x8xf32>
    %317 = vector.shape_cast %316 : vector<1x1x7x8xf32> to vector<7x8xf32>
    %318 = vector.shape_cast %315 : vector<7x8xf32> to vector<1x1x7x8xf32>
    tpu.vector_store %arg4[%c0_153, %c3_154, %c0_155, %c0_156], %318 {strides = array<i32>} : memref<1x7x7x8xf32, #tpu.memory_space<vmem>>, vector<1x1x7x8xf32>,
    %cst_157 = arith.constant 4.000000e+00 : f32
    %319 = arith.mulf %cst_157, %39 : f32
    %320 = math.floor %319 : f32
    %321 = arith.fptosi %320 : f32 to i32
    %322 = arith.addi %321, %23 : i32
    %c0_i32_158 = arith.constant 0 : i32
    %c16_i32_159 = arith.constant 16 : i32
    %323 = arith.maxsi %c0_i32_158, %322 : i32
    %324 = arith.minsi %c16_i32_159, %323 : i32
    %cst_160 = arith.constant 5.000000e+00 : f32
    %325 = arith.mulf %cst_160, %39 : f32
    %326 = math.ceil %325 : f32
    %327 = arith.fptosi %326 : f32 to i32
    %328 = arith.addi %327, %23 : i32
    %c0_i32_161 = arith.constant 0 : i32
    %c16_i32_162 = arith.constant 16 : i32
    %329 = arith.maxsi %c0_i32_161, %328 : i32
    %330 = arith.minsi %c16_i32_162, %329 : i32
    %331 = vector.broadcast %324 : i32 to vector<7x16x8xi32>
    %332 = arith.cmpi sge, %45, %331 : vector<7x16x8xi32>
    %333 = vector.broadcast %330 : i32 to vector<7x16x8xi32>
    %334 = arith.cmpi slt, %45, %333 : vector<7x16x8xi32>
    %335 = arith.andi %332, %334 : vector<7x16x8xi1>
    %c0_163 = arith.constant 0 : index
    %c0_164 = arith.constant 0 : index
    %c0_165 = arith.constant 0 : index
    %336 = vector.load %arg5[%c0_163, %c0_164, %c0_165] : memref<7x16x8xf32, #tpu.memory_space<vmem>>, vector<7x16x8xf32>
    %cst_166 = arith.constant 0xFF800000 : f32
    %337 = vector.broadcast %cst_166 : f32 to vector<7x16x8xf32>
    %338 = arith.select %335, %336, %337 : vector<7x16x8xi1>, vector<7x16x8xf32>
    %cst_167 = arith.constant dense<0xFF800000> : vector<7x8xf32>
    %339 = vector.multi_reduction <maximumf>, %338, %cst_167 [1] : vector<7x16x8xf32> to vector<7x8xf32>
    %cst_168 = arith.constant 0xFF800000 : f32
    %340 = vector.broadcast %cst_168 : f32 to vector<7x8xf32>
    %341 = arith.cmpf oeq, %339, %340 : vector<7x8xf32>
    %cst_169 = arith.constant 0.000000e+00 : f32
    %342 = vector.broadcast %cst_169 : f32 to vector<7x8xf32>
    %343 = arith.select %341, %342, %339 : vector<7x8xi1>, vector<7x8xf32>
    %c0_170 = arith.constant 0 : index
    %c4_171 = arith.constant 4 : index
    %c0_172 = arith.constant 0 : index
    %c0_173 = arith.constant 0 : index
    %344 = vector.load %arg4[%c0_170, %c4_171, %c0_172, %c0_173] : memref<1x7x7x8xf32, #tpu.memory_space<vmem>>, vector<1x1x7x8xf32>
    %345 = vector.shape_cast %344 : vector<1x1x7x8xf32> to vector<7x8xf32>
    %346 = vector.shape_cast %343 : vector<7x8xf32> to vector<1x1x7x8xf32>
    tpu.vector_store %arg4[%c0_170, %c4_171, %c0_172, %c0_173], %346 {strides = array<i32>} : memref<1x7x7x8xf32, #tpu.memory_space<vmem>>, vector<1x1x7x8xf32>,
    %cst_174 = arith.constant 5.000000e+00 : f32
    %347 = arith.mulf %cst_174, %39 : f32
    %348 = math.floor %347 : f32
    %349 = arith.fptosi %348 : f32 to i32
    %350 = arith.addi %349, %23 : i32
    %c0_i32_175 = arith.constant 0 : i32
    %c16_i32_176 = arith.constant 16 : i32
    %351 = arith.maxsi %c0_i32_175, %350 : i32
    %352 = arith.minsi %c16_i32_176, %351 : i32
    %cst_177 = arith.constant 6.000000e+00 : f32
    %353 = arith.mulf %cst_177, %39 : f32
    %354 = math.ceil %353 : f32
    %355 = arith.fptosi %354 : f32 to i32
    %356 = arith.addi %355, %23 : i32
    %c0_i32_178 = arith.constant 0 : i32
    %c16_i32_179 = arith.constant 16 : i32
    %357 = arith.maxsi %c0_i32_178, %356 : i32
    %358 = arith.minsi %c16_i32_179, %357 : i32
    %359 = vector.broadcast %352 : i32 to vector<7x16x8xi32>
    %360 = arith.cmpi sge, %45, %359 : vector<7x16x8xi32>
    %361 = vector.broadcast %358 : i32 to vector<7x16x8xi32>
    %362 = arith.cmpi slt, %45, %361 : vector<7x16x8xi32>
    %363 = arith.andi %360, %362 : vector<7x16x8xi1>
    %c0_180 = arith.constant 0 : index
    %c0_181 = arith.constant 0 : index
    %c0_182 = arith.constant 0 : index
    %364 = vector.load %arg5[%c0_180, %c0_181, %c0_182] : memref<7x16x8xf32, #tpu.memory_space<vmem>>, vector<7x16x8xf32>
    %cst_183 = arith.constant 0xFF800000 : f32
    %365 = vector.broadcast %cst_183 : f32 to vector<7x16x8xf32>
    %366 = arith.select %363, %364, %365 : vector<7x16x8xi1>, vector<7x16x8xf32>
    %cst_184 = arith.constant dense<0xFF800000> : vector<7x8xf32>
    %367 = vector.multi_reduction <maximumf>, %366, %cst_184 [1] : vector<7x16x8xf32> to vector<7x8xf32>
    %cst_185 = arith.constant 0xFF800000 : f32
    %368 = vector.broadcast %cst_185 : f32 to vector<7x8xf32>
    %369 = arith.cmpf oeq, %367, %368 : vector<7x8xf32>
    %cst_186 = arith.constant 0.000000e+00 : f32
    %370 = vector.broadcast %cst_186 : f32 to vector<7x8xf32>
    %371 = arith.select %369, %370, %367 : vector<7x8xi1>, vector<7x8xf32>
    %c0_187 = arith.constant 0 : index
    %c5_188 = arith.constant 5 : index
    %c0_189 = arith.constant 0 : index
    %c0_190 = arith.constant 0 : index
    %372 = vector.load %arg4[%c0_187, %c5_188, %c0_189, %c0_190] : memref<1x7x7x8xf32, #tpu.memory_space<vmem>>, vector<1x1x7x8xf32>
    %373 = vector.shape_cast %372 : vector<1x1x7x8xf32> to vector<7x8xf32>
    %374 = vector.shape_cast %371 : vector<7x8xf32> to vector<1x1x7x8xf32>
    tpu.vector_store %arg4[%c0_187, %c5_188, %c0_189, %c0_190], %374 {strides = array<i32>} : memref<1x7x7x8xf32, #tpu.memory_space<vmem>>, vector<1x1x7x8xf32>,
    %cst_191 = arith.constant 6.000000e+00 : f32
    %375 = arith.mulf %cst_191, %39 : f32
    %376 = math.floor %375 : f32
    %377 = arith.fptosi %376 : f32 to i32
    %378 = arith.addi %377, %23 : i32
    %c0_i32_192 = arith.constant 0 : i32
    %c16_i32_193 = arith.constant 16 : i32
    %379 = arith.maxsi %c0_i32_192, %378 : i32
    %380 = arith.minsi %c16_i32_193, %379 : i32
    %cst_194 = arith.constant 7.000000e+00 : f32
    %381 = arith.mulf %cst_194, %39 : f32
    %382 = math.ceil %381 : f32
    %383 = arith.fptosi %382 : f32 to i32
    %384 = arith.addi %383, %23 : i32
    %c0_i32_195 = arith.constant 0 : i32
    %c16_i32_196 = arith.constant 16 : i32
    %385 = arith.maxsi %c0_i32_195, %384 : i32
    %386 = arith.minsi %c16_i32_196, %385 : i32
    %387 = vector.broadcast %380 : i32 to vector<7x16x8xi32>
    %388 = arith.cmpi sge, %45, %387 : vector<7x16x8xi32>
    %389 = vector.broadcast %386 : i32 to vector<7x16x8xi32>
    %390 = arith.cmpi slt, %45, %389 : vector<7x16x8xi32>
    %391 = arith.andi %388, %390 : vector<7x16x8xi1>
    %c0_197 = arith.constant 0 : index
    %c0_198 = arith.constant 0 : index
    %c0_199 = arith.constant 0 : index
    %392 = vector.load %arg5[%c0_197, %c0_198, %c0_199] : memref<7x16x8xf32, #tpu.memory_space<vmem>>, vector<7x16x8xf32>
    %cst_200 = arith.constant 0xFF800000 : f32
    %393 = vector.broadcast %cst_200 : f32 to vector<7x16x8xf32>
    %394 = arith.select %391, %392, %393 : vector<7x16x8xi1>, vector<7x16x8xf32>
    %cst_201 = arith.constant dense<0xFF800000> : vector<7x8xf32>
    %395 = vector.multi_reduction <maximumf>, %394, %cst_201 [1] : vector<7x16x8xf32> to vector<7x8xf32>
    %cst_202 = arith.constant 0xFF800000 : f32
    %396 = vector.broadcast %cst_202 : f32 to vector<7x8xf32>
    %397 = arith.cmpf oeq, %395, %396 : vector<7x8xf32>
    %cst_203 = arith.constant 0.000000e+00 : f32
    %398 = vector.broadcast %cst_203 : f32 to vector<7x8xf32>
    %399 = arith.select %397, %398, %395 : vector<7x8xi1>, vector<7x8xf32>
    %c0_204 = arith.constant 0 : index
    %c6_205 = arith.constant 6 : index
    %c0_206 = arith.constant 0 : index
    %c0_207 = arith.constant 0 : index
    %400 = vector.load %arg4[%c0_204, %c6_205, %c0_206, %c0_207] : memref<1x7x7x8xf32, #tpu.memory_space<vmem>>, vector<1x1x7x8xf32>
    %401 = vector.shape_cast %400 : vector<1x1x7x8xf32> to vector<7x8xf32>
    %402 = vector.shape_cast %399 : vector<7x8xf32> to vector<1x1x7x8xf32>
    tpu.vector_store %arg4[%c0_204, %c6_205, %c0_206, %c0_207], %402 {strides = array<i32>} : memref<1x7x7x8xf32, #tpu.memory_space<vmem>>, vector<1x1x7x8xf32>,
    return
  }
  func.func @transform_0(%arg0: i32, %arg1: memref<6xi32, #tpu.memory_space<smem>>) -> i32 {
    %c0_i32 = arith.constant 0 : i32
    %c0_i32_0 = arith.constant 0 : i32
    return %c0_i32 : i32
  }
  func.func @transform_1(%arg0: i32, %arg1: memref<6xi32, #tpu.memory_space<smem>>) -> (i32, i32, i32, i32) {
    %0 = arith.index_cast %arg0 : i32 to index
    %1 = memref.load %arg1[%0] : memref<6xi32, #tpu.memory_space<smem>>
    %c0_i32 = arith.constant 0 : i32
    %c0_i32_0 = arith.constant 0 : i32
    %c0_i32_1 = arith.constant 0 : i32
    %c0_i32_2 = arith.constant 0 : i32
    return %1, %c0_i32, %c0_i32_0, %c0_i32_1 : i32, i32, i32, i32
  }
  func.func @transform_2(%arg0: i32, %arg1: memref<6xi32, #tpu.memory_space<smem>>) -> (i32, i32, i32, i32) {
    %c0_i32 = arith.constant 0 : i32
    %c0_i32_0 = arith.constant 0 : i32
    %c0_i32_1 = arith.constant 0 : i32
    %c0_i32_2 = arith.constant 0 : i32
    return %arg0, %c0_i32, %c0_i32_0, %c0_i32_1 : i32, i32, i32, i32
  }
}

</mosaic_0001>

<llo_original>
// kernel: tpu_custom_call.1
$region0: #{tpu_custom_call.1}
  #allocation0 [shape = 'u32[]', space=smem, size = 0x4, offset = 0x4, fixed_abs, tag = 'smem constant byte address 0x4 - core index']
  #allocation1 [shape = 'u32[72,128]{1,0:T(1,128)}', space=vmem, size = 0x9000, scoped, tag = 'internal scratch']
  #allocation2 [shape = 'f32[7,16,8]{2,1,0:T(8,128)}', space=vmem, size = 0xe000, scoped, tag = 'scratch operand']
  #allocation3 [shape = 's32[1]{0}', space=sflag, size = 0x4, scoped, tag = 'scoped memory for tpu_custom_call.1']
  #allocation4 [shape = 'u8[512]{0}', space=smem, size = 0x200, scoped, tag = 'prefetched SMEM operand 0']
  %s0 = inlined_call_operand.vmem [shape: s32[6], index: 0, kind: input, shape index: {}]
  %s1 = inlined_call_operand.vmem [shape: f32[24], index: 1, kind: input, shape index: {}]
  %s2 = inlined_call_operand.vmem [shape: f32[2,16,16,8], index: 2, kind: input, shape index: {}]
  %s3 = inlined_call_operand.hbm [shape: f32[6,7,7,8], index: 3, kind: output, shape index: {}]
  %s4 = sld [smem:[#allocation0]]
  $region45: #{tpu_custom_call.1} parent=0
    _
  %s6 = ssub.s32 1, %s4
  %s7 = scalar_select 0, %s6, %s4
  %s9 = sshll.u32 %s0, 4
  %s10 = int_to_ptr.vmem [resolvable:$true] %s9
  %12 = dma.vmem_to_smem %s10, 16, [#allocation4], [#allocation3]
  %14 = dma.done [#allocation3], 16
  %15 = sfence
  $region1: #{tpu_custom_call.1} parent=0
    #allocation5 [shape = 'u8[512]{0}', space=smem, size = 0x200, scoped, tag = 'input window, operand 1, single buffered']
    #allocation6 [shape = 's32[2]{0}', space=sflag, size = 0x8, scoped, tag = 'scoped memory for tpu_custom_call.1']
    #allocation7 [shape = 's32[2]{0}', space=sflag, size = 0x8, scoped, tag = 'scoped memory for tpu_custom_call.1']
    #allocation8 [shape = 'u8[57344]{0}', space=vmem, size = 0xe000, scoped, tag = 'output window, operand 0']
    %16 = vsyncpa [#allocation7], 0
    %17 = vsyncpa [#allocation6], 0
    %s18 = scalar_lea.sflag [#allocation6], 1
    %19 = vsyncpa %s18, 0
    loop: start=0, step=1, limit=8
    $region2: #{tpu_custom_call.1} parent=1 // loop_pre_header
      _
    $region3: #{tpu_custom_call.1} parent=1 // loop_header
      %s21 = sphi 0, %s25
      %p22 = scmp.ge.s32.totalorder %s21, 8
      %s29 = sphi 0, %s29
      %s31 = sphi 0, %s29
      %s32 = sphi 0, %s31
      %s46 = sphi 0, %s32
      %s54 = sphi 0, %s56
      %s57 = sphi 0, %s54
      %s58 = sphi 0, %s57
      %s74 = sphi 0, %s58
      %s80 = sphi 0, %s82
      %s83 = sphi 0, %s80
      %s84 = sphi 0, %s83
      %s100 = sphi 0, %s84
    $region4: #{tpu_custom_call.1} parent=1 // loop_header_branch
      %24 = sbr.rel (%p22) target = $region8
    $region5: #{tpu_custom_call.1} parent=1 // loop_body
      %s26 = ssub.s32 %s21, 1
      %s27 = ssub.s32 %s21, 2
      %s28 = sadd.s32 %s21, 1
      %s30 = sadd.s32 %s29, 1
      %p33 = scmp.eq.s32.totalorder %s21, 5
      %p34 = scmp.ne.s32.totalorder %s29, %s31
      %p35 = scmp.eq.s32.totalorder %s21, 0
      %p36 = por %p34, %p35
      %p37 = scmp.ne.s32.totalorder %s29, %s31
      %p38 = scmp.eq.s32.totalorder %s26, 5
      %p39 = por %p37, %p38
      %p40 = scmp.ne.s32.totalorder %s31, %s32
      %p41 = scmp.eq.s32.totalorder %s26, 0
      %p42 = por %p40, %p41
      %p43 = scmp.ne.s32.totalorder %s31, %s32
      %p44 = scmp.eq.s32.totalorder %s27, 5
      %p45 = por %p43, %p44
      %p47 = scmp.ne.s32.totalorder %s32, %s46
      %p48 = scmp.eq.s32.totalorder %s27, 0
      %p49 = por %p47, %p48
      %s50 = sld [smem:[#allocation4 + %s21]]
      %s51 = sld [smem:[#allocation4 + %s28]]
      %s52 = ssub.s32 %s50, %s51
      %p53 = scmp.eq.s32.totalorder %s52, 0
      %s55 = sadd.s32 %s54, 1
      %s56 = scalar_select %p53, %s54, %s55
      %p59 = pneg %p53
      %p60 = scmp.eq.s32.totalorder %s21, 5
      %p61 = por %p59, %p60
      %p62 = scmp.ne.s32.totalorder %s54, %s57
      %p63 = scmp.eq.s32.totalorder %s21, 0
      %p64 = por %p62, %p63
      %p65 = scmp.ne.s32.totalorder %s54, %s57
      %p66 = scmp.eq.s32.totalorder %s26, 5
      %p67 = por %p65, %p66
      %p68 = scmp.ne.s32.totalorder %s57, %s58
      %p69 = scmp.eq.s32.totalorder %s26, 0
      %p70 = por %p68, %p69
      %p71 = scmp.ne.s32.totalorder %s57, %s58
      %p72 = scmp.eq.s32.totalorder %s27, 5
      %p73 = por %p71, %p72
      %p75 = scmp.ne.s32.totalorder %s58, %s74
      %p76 = scmp.eq.s32.totalorder %s27, 0
      %p77 = por %p75, %p76
      %s78 = ssub.s32 %s21, %s28
      %p79 = scmp.eq.s32.totalorder %s78, 0
      %s81 = sadd.s32 %s80, 1
      %s82 = scalar_select %p79, %s80, %s81
      %p85 = pneg %p79
      %p86 = scmp.eq.s32.totalorder %s21, 5
      %p87 = por %p85, %p86
      %p88 = scmp.ne.s32.totalorder %s80, %s83
      %p89 = scmp.eq.s32.totalorder %s21, 0
      %p90 = por %p88, %p89
      %p91 = scmp.ne.s32.totalorder %s80, %s83
      %p92 = scmp.eq.s32.totalorder %s26, 5
      %p93 = por %p91, %p92
      %p94 = scmp.ne.s32.totalorder %s83, %s84
      %p95 = scmp.eq.s32.totalorder %s26, 0
      %p96 = por %p94, %p95
      %p97 = scmp.ne.s32.totalorder %s83, %s84
      %p98 = scmp.eq.s32.totalorder %s27, 5
      %p99 = por %p97, %p98
      %p101 = scmp.ne.s32.totalorder %s84, %s100
      %p102 = scmp.eq.s32.totalorder %s27, 0
      %p103 = por %p101, %p102
      %p104 = scmp.le.s32.totalorder 1, %s21
      %p105 = scmp.lt.s32.totalorder %s21, 7
      %p106 = pnand %p104, %p105
      %p107 = pneg %p106
      // Predicated region
      $region9: #{tpu_custom_call.1} parent=5 // pred_check
        _
      $region10: #{tpu_custom_call.1} parent=5 // pred_check_branch
        %109 = sbr.rel (%p106) target = $region12
      $region11: #{tpu_custom_call.1} parent=5 // pred_region
        %s110 = ssub.s32 %s21, 1
        // Predicated region
        $region13: #{tpu_custom_call.1} parent=11 // pred_check
          %p111 = pneg %p42
        $region14: #{tpu_custom_call.1} parent=11 // pred_check_branch
          %113 = sbr.rel (%p111) target = $region16
        $region15: #{tpu_custom_call.1} parent=11 // pred_region
          %115 = vsyncadd [#allocation7], 0
          %s117 = sshll.u32 %s1, 4
          %s118 = int_to_ptr.vmem [resolvable:$true] %s117
          %120 = dma.vmem_to_smem %s118, 16, [#allocation5], [#allocation7]
        $region16: #{tpu_custom_call.1} parent=11 // pred_fallthru
          _
      $region12: #{tpu_custom_call.1} parent=5 // pred_fallthru
        _
      %p121 = scmp.lt.s32.totalorder %s21, 6
      // Predicated region
      $region17: #{tpu_custom_call.1} parent=5 // pred_check
        %p122 = pneg %p121
      $region18: #{tpu_custom_call.1} parent=5 // pred_check_branch
        %124 = sbr.rel (%p122) target = $region20
      $region19: #{tpu_custom_call.1} parent=5 // pred_region
        // Predicated region
        $region21: #{tpu_custom_call.1} parent=19 // pred_check
          %p125 = pneg %p64
        $region22: #{tpu_custom_call.1} parent=19 // pred_check_branch
          %127 = sbr.rel (%p125) target = $region24
        $region23: #{tpu_custom_call.1} parent=19 // pred_region
          %s128 = sld [smem:[#allocation4 + %s21]]
          %p129 = scmp.lt.s32.totalorder %s128, 1
          %s130 = scalar_select %p129, %s128, 1
          %s131 = smul.addr %s130, 32
          %s132 = smul.addr %s131, 8
          %s133 = scalar_lea.vmem %s2, %s132
          %s134 = sld [smem:[#allocation4 + %s21]]
        $region24: #{tpu_custom_call.1} parent=19 // pred_fallthru
          _
      $region20: #{tpu_custom_call.1} parent=5 // pred_fallthru
        _
      %p135 = scmp.le.s32.totalorder 1, %s21
      %p136 = scmp.lt.s32.totalorder %s21, 7
      %p137 = pnand %p135, %p136
      %p138 = pneg %p137
      // Predicated region
      $region25: #{tpu_custom_call.1} parent=5 // pred_check
        _
      $region26: #{tpu_custom_call.1} parent=5 // pred_check_branch
        %140 = sbr.rel (%p137) target = $region28
      $region27: #{tpu_custom_call.1} parent=5 // pred_region
        %s141 = ssub.s32 %s21, 1
        // Predicated region
        $region29: #{tpu_custom_call.1} parent=27 // pred_check
          %p142 = pneg %p42
        $region30: #{tpu_custom_call.1} parent=27 // pred_check_branch
          %144 = sbr.rel (%p142) target = $region32
        $region31: #{tpu_custom_call.1} parent=27 // pred_region
          %146 = dma.done [#allocation7], 16
        $region32: #{tpu_custom_call.1} parent=27 // pred_fallthru
          _
        %147 = sfence
        %p148 = pneg %p42
        %p149 = pneg %p39
        %s150 = sld [smem:[#allocation4 + %s26]]
        %p151 = scmp.lt.s32.totalorder %s150, 1
        %s152 = scalar_select %p151, %s150, 1
        %s153 = smul.addr %s152, 32
        %s154 = smul.addr %s153, 8
        %s155 = scalar_lea.vmem %s2, %s154
        %p156 = pneg %p70
        %p157 = pneg %p67
        %p158 = pneg %p96
        %p159 = pneg %p93
        %s160 = sand.u32 %s83, 1
        %s161 = scalar_lea.sflag [#allocation6], %s160
        %s162 = sand.u32 %s83, 1
        %s163 = smul.addr %s162, 56
        %s164 = scalar_lea.vmem [#allocation8], %s163
        %s165 = sld [smem:[#allocation4 + %s26]]
        %p166 = scmp.lt.s32.totalorder %s165, 1
        %s167 = scalar_select %p166, %s165, 1
        %s168 = smul.addr %s167, 32
        %s169 = smul.addr %s168, 8
        %s170 = scalar_lea.vmem %s2, %s169
        %s171 = sld [smem:[#allocation4 + %s26]]
        %s172 = smul.u32 %s26, 4
        %s173 = sld [smem:[#allocation5 + %s172]]
        %s174 = sadd.s32 %s172, 1
        %s175 = sld [smem:[#allocation5 + %s174]]
        %s176 = sadd.s32 %s172, 2
        %s177 = sld [smem:[#allocation5 + %s176]]
        %s178 = sadd.s32 %s172, 3
        %s179 = sld [smem:[#allocation5 + %s178]]
        %s180 = smul.f32 %s175, 0.0625
        %s181 = sadd.f32 %s180, 0.5
        %s182 = sfloor.f32 %s181
        %s183 = scvt.f32.s32.to.zero.pseudo %s182
        %s184 = smul.f32 %s173, 0.0625
        %s185 = sadd.f32 %s184, 0.5
        %s186 = sfloor.f32 %s185
        %s187 = scvt.f32.s32.to.zero.pseudo %s186
        %s188 = smul.f32 %s179, 0.0625
        %s189 = sadd.f32 %s188, 0.5
        %s190 = sfloor.f32 %s189
        %s191 = scvt.f32.s32.to.zero.pseudo %s190
        %s192 = smul.f32 %s177, 0.0625
        %s193 = sadd.f32 %s192, 0.5
        %s194 = sfloor.f32 %s193
        %s195 = scvt.f32.s32.to.zero.pseudo %s194
        %s196 = ssub.s32 %s191, %s183
        %s197 = sadd.s32 %s196, 1
        %p198 = scmp.gt.s32.totalorder %s197, 1
        %s199 = scalar_select %p198, %s197, 1
        %s200 = ssub.s32 %s195, %s187
        %s201 = sadd.s32 %s200, 1
        %p202 = scmp.gt.s32.totalorder %s201, 1
        %s203 = scalar_select %p202, %s201, 1
        %s204 = scvt.s32.f32 %s203
        %v205 = vrcp.pop 7.0
        %v206 = vmul.f32 7.0, %v205
        %v207 = vsub.f32 1.0, %v206
        %v208 = vmul.f32 %v205, %v207
        %v209 = vadd.f32 %v205, %v208
        %vm210 = vweird.f32 %v205
        %v211 = vsel %vm210, %v205, %v209
        %s212 = vtos %v211
        %s213 = smul.f32 %s204, %s212
        %s214 = scvt.s32.f32 %s199
        %v215 = vrcp.pop 7.0
        %v216 = vmul.f32 7.0, %v215
        %v217 = vsub.f32 1.0, %v216
        %v218 = vmul.f32 %v215, %v217
        %v219 = vadd.f32 %v215, %v218
        %vm220 = vweird.f32 %v215
        %v221 = vsel %vm220, %v215, %v219
        %s222 = vtos %v221
        %s223 = smul.f32 %s214, %s222
        %v224 = vld [vmem:[%s170] sm:$0xff]
        %v225 = vld [vmem:[%s170 + $0x8] sm:$0xff]
        %v226 = vld [vmem:[%s170 + $0x10] sm:$0xff]
        %v227 = vld [vmem:[%s170 + $0x18] sm:$0xff]
        %v228 = vld [vmem:[%s170 + $0x20] sm:$0xff]
        %v229 = vld [vmem:[%s170 + $0x28] sm:$0xff]
        %v230 = vld [vmem:[%s170 + $0x30] sm:$0xff]
        %v231 = vld [vmem:[%s170 + $0x38] sm:$0xff]
        %v232 = vld [vmem:[%s170 + $0x40] sm:$0xff]
        %v233 = vld [vmem:[%s170 + $0x48] sm:$0xff]
        %v234 = vld [vmem:[%s170 + $0x50] sm:$0xff]
        %v235 = vld [vmem:[%s170 + $0x58] sm:$0xff]
        %v236 = vld [vmem:[%s170 + $0x60] sm:$0xff]
        %v237 = vld [vmem:[%s170 + $0x68] sm:$0xff]
        %v238 = vld [vmem:[%s170 + $0x70] sm:$0xff]
        %v239 = vld [vmem:[%s170 + $0x78] sm:$0xff]
        %v240 = vld [vmem:[%s170 + $0x80] sm:$0xff]
        %v241 = vld [vmem:[%s170 + $0x88] sm:$0xff]
        %v242 = vld [vmem:[%s170 + $0x90] sm:$0xff]
        %v243 = vld [vmem:[%s170 + $0x98] sm:$0xff]
        %v244 = vld [vmem:[%s170 + $0xa0] sm:$0xff]
        %v245 = vld [vmem:[%s170 + $0xa8] sm:$0xff]
        %v246 = vld [vmem:[%s170 + $0xb0] sm:$0xff]
        %v247 = vld [vmem:[%s170 + $0xb8] sm:$0xff]
        %v248 = vld [vmem:[%s170 + $0xc0] sm:$0xff]
        %v249 = vld [vmem:[%s170 + $0xc8] sm:$0xff]
        %v250 = vld [vmem:[%s170 + $0xd0] sm:$0xff]
        %v251 = vld [vmem:[%s170 + $0xd8] sm:$0xff]
        %v252 = vld [vmem:[%s170 + $0xe0] sm:$0xff]
        %v253 = vld [vmem:[%s170 + $0xe8] sm:$0xff]
        %v254 = vld [vmem:[%s170 + $0xf0] sm:$0xff]
        %v255 = vld [vmem:[%s170 + $0xf8] sm:$0xff]
        %v256 = vlaneseq
        %v257 = vshrl.u32 %v256, 7
        %v258 = vadd.s32 %v257, 8
        %s259 = smul.f32 %s223, 0.0
        %s260 = sfloor.f32 %s259
        %s261 = scvt.f32.s32.to.zero.pseudo %s260
        %s262 = sadd.s32 %s261, %s183
        %p263 = scmp.gt.s32.totalorder %s262, 0
        %s264 = scalar_select %p263, %s262, 0
        %p265 = scmp.lt.s32.totalorder %s264, 16
        %s266 = scalar_select %p265, %s264, 16
        %s267 = sceil.f32 %s223
        %s268 = scvt.f32.s32.to.zero.pseudo %s267
        %s269 = sadd.s32 %s268, %s183
        %p270 = scmp.gt.s32.totalorder %s269, 0
        %s271 = scalar_select %p270, %s269, 0
        %p272 = scmp.lt.s32.totalorder %s271, 16
        %s273 = scalar_select %p272, %s271, 16
        %v274 = vstv %s266
        %vm275 = vcmp.ge.s32.totalorder %v257, %v274
        %vm276 = vcmp.ge.s32.totalorder %v258, %v274
        %v277 = vstv %s273
        %vm278 = vcmp.lt.s32.totalorder %v257, %v277
        %vm279 = vcmp.lt.s32.totalorder %v258, %v277
        %vm280 = vmand %vm275, %vm278
        %vm281 = vmand %vm276, %vm279
        %v282 = vsel %vm280, %v224, -inf
        %v283 = vsel %vm281, %v225, -inf
        %v284 = vsel %vm280, %v226, -inf
        %v285 = vsel %vm281, %v227, -inf
        %v286 = vsel %vm280, %v228, -inf
        %v287 = vsel %vm281, %v229, -inf
        %v288 = vsel %vm280, %v230, -inf
        %v289 = vsel %vm281, %v231, -inf
        %v290 = vsel %vm280, %v232, -inf
        %v291 = vsel %vm281, %v233, -inf
        %v292 = vsel %vm280, %v234, -inf
        %v293 = vsel %vm281, %v235, -inf
        %v294 = vsel %vm280, %v236, -inf
        %v295 = vsel %vm281, %v237, -inf
        %v296 = vsel %vm280, %v238, -inf
        %v297 = vsel %vm281, %v239, -inf
        %v298 = vsel %vm280, %v240, -inf
        %v299 = vsel %vm281, %v241, -inf
        %v300 = vsel %vm280, %v242, -inf
        %v301 = vsel %vm281, %v243, -inf
        %v302 = vsel %vm280, %v244, -inf
        %v303 = vsel %vm281, %v245, -inf
        %v304 = vsel %vm280, %v246, -inf
        %v305 = vsel %vm281, %v247, -inf
        %v306 = vsel %vm280, %v248, -inf
        %v307 = vsel %vm281, %v249, -inf
        %v308 = vsel %vm280, %v250, -inf
        %v309 = vsel %vm281, %v251, -inf
        %v310 = vsel %vm280, %v252, -inf
        %v311 = vsel %vm281, %v253, -inf
        %v312 = vsel %vm280, %v254, -inf
        %v313 = vsel %vm281, %v255, -inf
        %vm314 = vcmask 64512
        %v315 = vsel %vm314, %v282, -inf
        %v316 = vsel %vm314, %v283, -inf
        %v317 = vmax.f32 %v315, %v316
        %v318 = vrot.slane %v317, 4
        %v319 = vmax.f32 %v317, %v318
        %v320 = vrot.slane %v319, 2
        %v321 = vmax.f32 %v319, %v320
        %v322 = vrot.slane %v321, 1
        %v323 = vmax.f32 %v321, %v322
        %v324 = vsel %vm314, %v284, -inf
        %v325 = vsel %vm314, %v285, -inf
        %v326 = vmax.f32 %v324, %v325
        %v327 = vrot.slane %v326, 4
        %v328 = vmax.f32 %v326, %v327
        %v329 = vrot.slane %v328, 2
        %v330 = vmax.f32 %v328, %v329
        %v331 = vrot.slane %v330, 1
        %v332 = vmax.f32 %v330, %v331
        %v333 = vsel %vm314, %v286, -inf
        %v334 = vsel %vm314, %v287, -inf
        %v335 = vmax.f32 %v333, %v334
        %v336 = vrot.slane %v335, 4
        %v337 = vmax.f32 %v335, %v336
        %v338 = vrot.slane %v337, 2
        %v339 = vmax.f32 %v337, %v338
        %v340 = vrot.slane %v339, 1
        %v341 = vmax.f32 %v339, %v340
        %v342 = vsel %vm314, %v288, -inf
        %v343 = vsel %vm314, %v289, -inf
        %v344 = vmax.f32 %v342, %v343
        %v345 = vrot.slane %v344, 4
        %v346 = vmax.f32 %v344, %v345
        %v347 = vrot.slane %v346, 2
        %v348 = vmax.f32 %v346, %v347
        %v349 = vrot.slane %v348, 1
        %v350 = vmax.f32 %v348, %v349
        %v351 = vsel %vm314, %v290, -inf
        %v352 = vsel %vm314, %v291, -inf
        %v353 = vmax.f32 %v351, %v352
        %v354 = vrot.slane %v353, 4
        %v355 = vmax.f32 %v353, %v354
        %v356 = vrot.slane %v355, 2
        %v357 = vmax.f32 %v355, %v356
        %v358 = vrot.slane %v357, 1
        %v359 = vmax.f32 %v357, %v358
        %v360 = vsel %vm314, %v292, -inf
        %v361 = vsel %vm314, %v293, -inf
        %v362 = vmax.f32 %v360, %v361
        %v363 = vrot.slane %v362, 4
        %v364 = vmax.f32 %v362, %v363
        %v365 = vrot.slane %v364, 2
        %v366 = vmax.f32 %v364, %v365
        %v367 = vrot.slane %v366, 1
        %v368 = vmax.f32 %v366, %v367
        %v369 = vsel %vm314, %v294, -inf
        %v370 = vsel %vm314, %v295, -inf
        %v371 = vmax.f32 %v369, %v370
        %v372 = vrot.slane %v371, 4
        %v373 = vmax.f32 %v371, %v372
        %v374 = vrot.slane %v373, 2
        %v375 = vmax.f32 %v373, %v374
        %v376 = vrot.slane %v375, 1
        %v377 = vmax.f32 %v375, %v376
        %v378 = vsel %vm314, %v296, -inf
        %v379 = vsel %vm314, %v297, -inf
        %v380 = vmax.f32 %v378, %v379
        %v381 = vrot.slane %v380, 4
        %v382 = vmax.f32 %v380, %v381
        %v383 = vrot.slane %v382, 2
        %v384 = vmax.f32 %v382, %v383
        %v385 = vrot.slane %v384, 1
        %v386 = vmax.f32 %v384, %v385
        %v387 = vsel %vm314, %v298, -inf
        %v388 = vsel %vm314, %v299, -inf
        %v389 = vmax.f32 %v387, %v388
        %v390 = vrot.slane %v389, 4
        %v391 = vmax.f32 %v389, %v390
        %v392 = vrot.slane %v391, 2
        %v393 = vmax.f32 %v391, %v392
        %v394 = vrot.slane %v393, 1
        %v395 = vmax.f32 %v393, %v394
        %v396 = vsel %vm314, %v300, -inf
        %v397 = vsel %vm314, %v301, -inf
        %v398 = vmax.f32 %v396, %v397
        %v399 = vrot.slane %v398, 4
        %v400 = vmax.f32 %v398, %v399
        %v401 = vrot.slane %v400, 2
        %v402 = vmax.f32 %v400, %v401
        %v403 = vrot.slane %v402, 1
        %v404 = vmax.f32 %v402, %v403
        %v405 = vsel %vm314, %v302, -inf
        %v406 = vsel %vm314, %v303, -inf
        %v407 = vmax.f32 %v405, %v406
        %v408 = vrot.slane %v407, 4
        %v409 = vmax.f32 %v407, %v408
        %v410 = vrot.slane %v409, 2
        %v411 = vmax.f32 %v409, %v410
        %v412 = vrot.slane %v411, 1
        %v413 = vmax.f32 %v411, %v412
        %v414 = vsel %vm314, %v304, -inf
        %v415 = vsel %vm314, %v305, -inf
        %v416 = vmax.f32 %v414, %v415
        %v417 = vrot.slane %v416, 4
        %v418 = vmax.f32 %v416, %v417
        %v419 = vrot.slane %v418, 2
        %v420 = vmax.f32 %v418, %v419
        %v421 = vrot.slane %v420, 1
        %v422 = vmax.f32 %v420, %v421
        %v423 = vsel %vm314, %v306, -inf
        %v424 = vsel %vm314, %v307, -inf
        %v425 = vmax.f32 %v423, %v424
        %v426 = vrot.slane %v425, 4
        %v427 = vmax.f32 %v425, %v426
        %v428 = vrot.slane %v427, 2
        %v429 = vmax.f32 %v427, %v428
        %v430 = vrot.slane %v429, 1
        %v431 = vmax.f32 %v429, %v430
        %v432 = vsel %vm314, %v308, -inf
        %v433 = vsel %vm314, %v309, -inf
        %v434 = vmax.f32 %v432, %v433
        %v435 = vrot.slane %v434, 4
        %v436 = vmax.f32 %v434, %v435
        %v437 = vrot.slane %v436, 2
        %v438 = vmax.f32 %v436, %v437
        %v439 = vrot.slane %v438, 1
        %v440 = vmax.f32 %v438, %v439
        %v441 = vsel %vm314, %v310, -inf
        %v442 = vsel %vm314, %v311, -inf
        %v443 = vmax.f32 %v441, %v442
        %v444 = vrot.slane %v443, 4
        %v445 = vmax.f32 %v443, %v444
        %v446 = vrot.slane %v445, 2
        %v447 = vmax.f32 %v445, %v446
        %v448 = vrot.slane %v447, 1
        %v449 = vmax.f32 %v447, %v448
        %v450 = vsel %vm314, %v312, -inf
        %v451 = vsel %vm314, %v313, -inf
        %v452 = vmax.f32 %v450, %v451
        %v453 = vrot.slane %v452, 4
        %v454 = vmax.f32 %v452, %v453
        %v455 = vrot.slane %v454, 2
        %v456 = vmax.f32 %v454, %v455
        %v457 = vrot.slane %v456, 1
        %v458 = vmax.f32 %v456, %v457
        %vm475 = vcmask 1041409
        %v476 = vsel %vm475, %v332, %v323
        %vm477 = vcmask 1042434
        %v478 = vsel %vm477, %v341, %v476
        %vm479 = vcmask 1043459
        %v480 = vsel %vm479, %v350, %v478
        %vm481 = vcmask 1044484
        %v482 = vsel %vm481, %v359, %v480
        %vm483 = vcmask 1045509
        %v484 = vsel %vm483, %v368, %v482
        %vm485 = vcmask 1046534
        %v486 = vsel %vm485, %v377, %v484
        %vm487 = vcmask 1047559
        %v488 = vsel %vm487, %v386, %v486
        %v489 = vsel %vm475, %v404, %v395
        %v490 = vsel %vm477, %v413, %v489
        %v491 = vsel %vm479, %v422, %v490
        %v492 = vsel %vm481, %v431, %v491
        %v493 = vsel %vm483, %v440, %v492
        %v494 = vsel %vm485, %v449, %v493
        %v495 = vsel %vm487, %v458, %v494
        %498 = vst.msk [vmem:[#allocation2] sm:$0xff] %vm314, %v488
        %499 = vst.msk [vmem:[#allocation2 + $0x8] sm:$0xff] %vm314, %v495
        %s500 = sfloor.f32 %s223
        %s501 = scvt.f32.s32.to.zero.pseudo %s500
        %s502 = sadd.s32 %s501, %s183
        %p503 = scmp.gt.s32.totalorder %s502, 0
        %s504 = scalar_select %p503, %s502, 0
        %p505 = scmp.lt.s32.totalorder %s504, 16
        %s506 = scalar_select %p505, %s504, 16
        %s507 = smul.f32 %s223, 2.0
        %s508 = sceil.f32 %s507
        %s509 = scvt.f32.s32.to.zero.pseudo %s508
        %s510 = sadd.s32 %s509, %s183
        %p511 = scmp.gt.s32.totalorder %s510, 0
        %s512 = scalar_select %p511, %s510, 0
        %p513 = scmp.lt.s32.totalorder %s512, 16
        %s514 = scalar_select %p513, %s512, 16
        %v515 = vstv %s506
        %vm516 = vcmp.ge.s32.totalorder %v257, %v515
        %vm517 = vcmp.ge.s32.totalorder %v258, %v515
        %v518 = vstv %s514
        %vm519 = vcmp.lt.s32.totalorder %v257, %v518
        %vm520 = vcmp.lt.s32.totalorder %v258, %v518
        %vm521 = vmand %vm516, %vm519
        %vm522 = vmand %vm517, %vm520
        %v523 = vsel %vm521, %v224, -inf
        %v524 = vsel %vm522, %v225, -inf
        %v525 = vsel %vm521, %v226, -inf
        %v526 = vsel %vm522, %v227, -inf
        %v527 = vsel %vm521, %v228, -inf
        %v528 = vsel %vm522, %v229, -inf
        %v529 = vsel %vm521, %v230, -inf
        %v530 = vsel %vm522, %v231, -inf
        %v531 = vsel %vm521, %v232, -inf
        %v532 = vsel %vm522, %v233, -inf
        %v533 = vsel %vm521, %v234, -inf
        %v534 = vsel %vm522, %v235, -inf
        %v535 = vsel %vm521, %v236, -inf
        %v536 = vsel %vm522, %v237, -inf
        %v537 = vsel %vm521, %v238, -inf
        %v538 = vsel %vm522, %v239, -inf
        %v539 = vsel %vm521, %v240, -inf
        %v540 = vsel %vm522, %v241, -inf
        %v541 = vsel %vm521, %v242, -inf
        %v542 = vsel %vm522, %v243, -inf
        %v543 = vsel %vm521, %v244, -inf
        %v544 = vsel %vm522, %v245, -inf
        %v545 = vsel %vm521, %v246, -inf
        %v546 = vsel %vm522, %v247, -inf
        %v547 = vsel %vm521, %v248, -inf
        %v548 = vsel %vm522, %v249, -inf
        %v549 = vsel %vm521, %v250, -inf
        %v550 = vsel %vm522, %v251, -inf
        %v551 = vsel %vm521, %v252, -inf
        %v552 = vsel %vm522, %v253, -inf
        %v553 = vsel %vm521, %v254, -inf
        %v554 = vsel %vm522, %v255, -inf
        %v555 = vsel %vm314, %v523, -inf
        %v556 = vsel %vm314, %v524, -inf
        %v557 = vmax.f32 %v555, %v556
        %v558 = vrot.slane %v557, 4
        %v559 = vmax.f32 %v557, %v558
        %v560 = vrot.slane %v559, 2
        %v561 = vmax.f32 %v559, %v560
        %v562 = vrot.slane %v561, 1
        %v563 = vmax.f32 %v561, %v562
        %v564 = vsel %vm314, %v525, -inf
        %v565 = vsel %vm314, %v526, -inf
        %v566 = vmax.f32 %v564, %v565
        %v567 = vrot.slane %v566, 4
        %v568 = vmax.f32 %v566, %v567
        %v569 = vrot.slane %v568, 2
        %v570 = vmax.f32 %v568, %v569
        %v571 = vrot.slane %v570, 1
        %v572 = vmax.f32 %v570, %v571
        %v573 = vsel %vm314, %v527, -inf
        %v574 = vsel %vm314, %v528, -inf
        %v575 = vmax.f32 %v573, %v574
        %v576 = vrot.slane %v575, 4
        %v577 = vmax.f32 %v575, %v576
        %v578 = vrot.slane %v577, 2
        %v579 = vmax.f32 %v577, %v578
        %v580 = vrot.slane %v579, 1
        %v581 = vmax.f32 %v579, %v580
        %v582 = vsel %vm314, %v529, -inf
        %v583 = vsel %vm314, %v530, -inf
        %v584 = vmax.f32 %v582, %v583
        %v585 = vrot.slane %v584, 4
        %v586 = vmax.f32 %v584, %v585
        %v587 = vrot.slane %v586, 2
        %v588 = vmax.f32 %v586, %v587
        %v589 = vrot.slane %v588, 1
        %v590 = vmax.f32 %v588, %v589
        %v591 = vsel %vm314, %v531, -inf
        %v592 = vsel %vm314, %v532, -inf
        %v593 = vmax.f32 %v591, %v592
        %v594 = vrot.slane %v593, 4
        %v595 = vmax.f32 %v593, %v594
        %v596 = vrot.slane %v595, 2
        %v597 = vmax.f32 %v595, %v596
        %v598 = vrot.slane %v597, 1
        %v599 = vmax.f32 %v597, %v598
        %v600 = vsel %vm314, %v533, -inf
        %v601 = vsel %vm314, %v534, -inf
        %v602 = vmax.f32 %v600, %v601
        %v603 = vrot.slane %v602, 4
        %v604 = vmax.f32 %v602, %v603
        %v605 = vrot.slane %v604, 2
        %v606 = vmax.f32 %v604, %v605
        %v607 = vrot.slane %v606, 1
        %v608 = vmax.f32 %v606, %v607
        %v609 = vsel %vm314, %v535, -inf
        %v610 = vsel %vm314, %v536, -inf
        %v611 = vmax.f32 %v609, %v610
        %v612 = vrot.slane %v611, 4
        %v613 = vmax.f32 %v611, %v612
        %v614 = vrot.slane %v613, 2
        %v615 = vmax.f32 %v613, %v614
        %v616 = vrot.slane %v615, 1
        %v617 = vmax.f32 %v615, %v616
        %v618 = vsel %vm314, %v537, -inf
        %v619 = vsel %vm314, %v538, -inf
        %v620 = vmax.f32 %v618, %v619
        %v621 = vrot.slane %v620, 4
        %v622 = vmax.f32 %v620, %v621
        %v623 = vrot.slane %v622, 2
        %v624 = vmax.f32 %v622, %v623
        %v625 = vrot.slane %v624, 1
        %v626 = vmax.f32 %v624, %v625
        %v627 = vsel %vm314, %v539, -inf
        %v628 = vsel %vm314, %v540, -inf
        %v629 = vmax.f32 %v627, %v628
        %v630 = vrot.slane %v629, 4
        %v631 = vmax.f32 %v629, %v630
        %v632 = vrot.slane %v631, 2
        %v633 = vmax.f32 %v631, %v632
        %v634 = vrot.slane %v633, 1
        %v635 = vmax.f32 %v633, %v634
        %v636 = vsel %vm314, %v541, -inf
        %v637 = vsel %vm314, %v542, -inf
        %v638 = vmax.f32 %v636, %v637
        %v639 = vrot.slane %v638, 4
        %v640 = vmax.f32 %v638, %v639
        %v641 = vrot.slane %v640, 2
        %v642 = vmax.f32 %v640, %v641
        %v643 = vrot.slane %v642, 1
        %v644 = vmax.f32 %v642, %v643
        %v645 = vsel %vm314, %v543, -inf
        %v646 = vsel %vm314, %v544, -inf
        %v647 = vmax.f32 %v645, %v646
        %v648 = vrot.slane %v647, 4
        %v649 = vmax.f32 %v647, %v648
        %v650 = vrot.slane %v649, 2
        %v651 = vmax.f32 %v649, %v650
        %v652 = vrot.slane %v651, 1
        %v653 = vmax.f32 %v651, %v652
        %v654 = vsel %vm314, %v545, -inf
        %v655 = vsel %vm314, %v546, -inf
        %v656 = vmax.f32 %v654, %v655
        %v657 = vrot.slane %v656, 4
        %v658 = vmax.f32 %v656, %v657
        %v659 = vrot.slane %v658, 2
        %v660 = vmax.f32 %v658, %v659
        %v661 = vrot.slane %v660, 1
        %v662 = vmax.f32 %v660, %v661
        %v663 = vsel %vm314, %v547, -inf
        %v664 = vsel %vm314, %v548, -inf
        %v665 = vmax.f32 %v663, %v664
        %v666 = vrot.slane %v665, 4
        %v667 = vmax.f32 %v665, %v666
        %v668 = vrot.slane %v667, 2
        %v669 = vmax.f32 %v667, %v668
        %v670 = vrot.slane %v669, 1
        %v671 = vmax.f32 %v669, %v670
        %v672 = vsel %vm314, %v549, -inf
        %v673 = vsel %vm314, %v550, -inf
        %v674 = vmax.f32 %v672, %v673
        %v675 = vrot.slane %v674, 4
        %v676 = vmax.f32 %v674, %v675
        %v677 = vrot.slane %v676, 2
        %v678 = vmax.f32 %v676, %v677
        %v679 = vrot.slane %v678, 1
        %v680 = vmax.f32 %v678, %v679
        %v681 = vsel %vm314, %v551, -inf
        %v682 = vsel %vm314, %v552, -inf
        %v683 = vmax.f32 %v681, %v682
        %v684 = vrot.slane %v683, 4
        %v685 = vmax.f32 %v683, %v684
        %v686 = vrot.slane %v685, 2
        %v687 = vmax.f32 %v685, %v686
        %v688 = vrot.slane %v687, 1
        %v689 = vmax.f32 %v687, %v688
        %v690 = vsel %vm314, %v553, -inf
        %v691 = vsel %vm314, %v554, -inf
        %v692 = vmax.f32 %v690, %v691
        %v693 = vrot.slane %v692, 4
        %v694 = vmax.f32 %v692, %v693
        %v695 = vrot.slane %v694, 2
        %v696 = vmax.f32 %v694, %v695
        %v697 = vrot.slane %v696, 1
        %v698 = vmax.f32 %v696, %v697
        %v715 = vsel %vm475, %v572, %v563
        %v716 = vsel %vm477, %v581, %v715
        %v717 = vsel %vm479, %v590, %v716
        %v718 = vsel %vm481, %v599, %v717
        %v719 = vsel %vm483, %v608, %v718
        %v720 = vsel %vm485, %v617, %v719
        %v721 = vsel %vm487, %v626, %v720
        %v722 = vsel %vm475, %v644, %v635
        %v723 = vsel %vm477, %v653, %v722
        %v724 = vsel %vm479, %v662, %v723
        %v725 = vsel %vm481, %v671, %v724
        %v726 = vsel %vm483, %v680, %v725
        %v727 = vsel %vm485, %v689, %v726
        %v728 = vsel %vm487, %v698, %v727
        %s731 = scalar_lea.vmem [#allocation2], 16
        %732 = vst.msk [vmem:[%s731] sm:$0xff] %vm314, %v721
        %733 = vst.msk [vmem:[%s731 + $0x8] sm:$0xff] %vm314, %v728
        %s734 = sfloor.f32 %s507
        %s735 = scvt.f32.s32.to.zero.pseudo %s734
        %s736 = sadd.s32 %s735, %s183
        %p737 = scmp.gt.s32.totalorder %s736, 0
        %s738 = scalar_select %p737, %s736, 0
        %p739 = scmp.lt.s32.totalorder %s738, 16
        %s740 = scalar_select %p739, %s738, 16
        %s741 = smul.f32 %s223, 3.0
        %s742 = sceil.f32 %s741
        %s743 = scvt.f32.s32.to.zero.pseudo %s742
        %s744 = sadd.s32 %s743, %s183
        %p745 = scmp.gt.s32.totalorder %s744, 0
        %s746 = scalar_select %p745, %s744, 0
        %p747 = scmp.lt.s32.totalorder %s746, 16
        %s748 = scalar_select %p747, %s746, 16
        %v749 = vstv %s740
        %vm750 = vcmp.ge.s32.totalorder %v257, %v749
        %vm751 = vcmp.ge.s32.totalorder %v258, %v749
        %v752 = vstv %s748
        %vm753 = vcmp.lt.s32.totalorder %v257, %v752
        %vm754 = vcmp.lt.s32.totalorder %v258, %v752
        %vm755 = vmand %vm750, %vm753
        %vm756 = vmand %vm751, %vm754
        %v757 = vsel %vm755, %v224, -inf
        %v758 = vsel %vm756, %v225, -inf
        %v759 = vsel %vm755, %v226, -inf
        %v760 = vsel %vm756, %v227, -inf
        %v761 = vsel %vm755, %v228, -inf
        %v762 = vsel %vm756, %v229, -inf
        %v763 = vsel %vm755, %v230, -inf
        %v764 = vsel %vm756, %v231, -inf
        %v765 = vsel %vm755, %v232, -inf
        %v766 = vsel %vm756, %v233, -inf
        %v767 = vsel %vm755, %v234, -inf
        %v768 = vsel %vm756, %v235, -inf
        %v769 = vsel %vm755, %v236, -inf
        %v770 = vsel %vm756, %v237, -inf
        %v771 = vsel %vm755, %v238, -inf
        %v772 = vsel %vm756, %v239, -inf
        %v773 = vsel %vm755, %v240, -inf
        %v774 = vsel %vm756, %v241, -inf
        %v775 = vsel %vm755, %v242, -inf
        %v776 = vsel %vm756, %v243, -inf
        %v777 = vsel %vm755, %v244, -inf
        %v778 = vsel %vm756, %v245, -inf
        %v779 = vsel %vm755, %v246, -inf
        %v780 = vsel %vm756, %v247, -inf
        %v781 = vsel %vm755, %v248, -inf
        %v782 = vsel %vm756, %v249, -inf
        %v783 = vsel %vm755, %v250, -inf
        %v784 = vsel %vm756, %v251, -inf
        %v785 = vsel %vm755, %v252, -inf
        %v786 = vsel %vm756, %v253, -inf
        %v787 = vsel %vm755, %v254, -inf
        %v788 = vsel %vm756, %v255, -inf
        %v789 = vsel %vm314, %v757, -inf
        %v790 = vsel %vm314, %v758, -inf
        %v791 = vmax.f32 %v789, %v790
        %v792 = vrot.slane %v791, 4
        %v793 = vmax.f32 %v791, %v792
        %v794 = vrot.slane %v793, 2
        %v795 = vmax.f32 %v793, %v794
        %v796 = vrot.slane %v795, 1
        %v797 = vmax.f32 %v795, %v796
        %v798 = vsel %vm314, %v759, -inf
        %v799 = vsel %vm314, %v760, -inf
        %v800 = vmax.f32 %v798, %v799
        %v801 = vrot.slane %v800, 4
        %v802 = vmax.f32 %v800, %v801
        %v803 = vrot.slane %v802, 2
        %v804 = vmax.f32 %v802, %v803
        %v805 = vrot.slane %v804, 1
        %v806 = vmax.f32 %v804, %v805
        %v807 = vsel %vm314, %v761, -inf
        %v808 = vsel %vm314, %v762, -inf
        %v809 = vmax.f32 %v807, %v808
        %v810 = vrot.slane %v809, 4
        %v811 = vmax.f32 %v809, %v810
        %v812 = vrot.slane %v811, 2
        %v813 = vmax.f32 %v811, %v812
        %v814 = vrot.slane %v813, 1
        %v815 = vmax.f32 %v813, %v814
        %v816 = vsel %vm314, %v763, -inf
        %v817 = vsel %vm314, %v764, -inf
        %v818 = vmax.f32 %v816, %v817
        %v819 = vrot.slane %v818, 4
        %v820 = vmax.f32 %v818, %v819
        %v821 = vrot.slane %v820, 2
        %v822 = vmax.f32 %v820, %v821
        %v823 = vrot.slane %v822, 1
        %v824 = vmax.f32 %v822, %v823
        %v825 = vsel %vm314, %v765, -inf
        %v826 = vsel %vm314, %v766, -inf
        %v827 = vmax.f32 %v825, %v826
        %v828 = vrot.slane %v827, 4
        %v829 = vmax.f32 %v827, %v828
        %v830 = vrot.slane %v829, 2
        %v831 = vmax.f32 %v829, %v830
        %v832 = vrot.slane %v831, 1
        %v833 = vmax.f32 %v831, %v832
        %v834 = vsel %vm314, %v767, -inf
        %v835 = vsel %vm314, %v768, -inf
        %v836 = vmax.f32 %v834, %v835
        %v837 = vrot.slane %v836, 4
        %v838 = vmax.f32 %v836, %v837
        %v839 = vrot.slane %v838, 2
        %v840 = vmax.f32 %v838, %v839
        %v841 = vrot.slane %v840, 1
        %v842 = vmax.f32 %v840, %v841
        %v843 = vsel %vm314, %v769, -inf
        %v844 = vsel %vm314, %v770, -inf
        %v845 = vmax.f32 %v843, %v844
        %v846 = vrot.slane %v845, 4
        %v847 = vmax.f32 %v845, %v846
        %v848 = vrot.slane %v847, 2
        %v849 = vmax.f32 %v847, %v848
        %v850 = vrot.slane %v849, 1
        %v851 = vmax.f32 %v849, %v850
        %v852 = vsel %vm314, %v771, -inf
        %v853 = vsel %vm314, %v772, -inf
        %v854 = vmax.f32 %v852, %v853
        %v855 = vrot.slane %v854, 4
        %v856 = vmax.f32 %v854, %v855
        %v857 = vrot.slane %v856, 2
        %v858 = vmax.f32 %v856, %v857
        %v859 = vrot.slane %v858, 1
        %v860 = vmax.f32 %v858, %v859
        %v861 = vsel %vm314, %v773, -inf
        %v862 = vsel %vm314, %v774, -inf
        %v863 = vmax.f32 %v861, %v862
        %v864 = vrot.slane %v863, 4
        %v865 = vmax.f32 %v863, %v864
        %v866 = vrot.slane %v865, 2
        %v867 = vmax.f32 %v865, %v866
        %v868 = vrot.slane %v867, 1
        %v869 = vmax.f32 %v867, %v868
        %v870 = vsel %vm314, %v775, -inf
        %v871 = vsel %vm314, %v776, -inf
        %v872 = vmax.f32 %v870, %v871
        %v873 = vrot.slane %v872, 4
        %v874 = vmax.f32 %v872, %v873
        %v875 = vrot.slane %v874, 2
        %v876 = vmax.f32 %v874, %v875
        %v877 = vrot.slane %v876, 1
        %v878 = vmax.f32 %v876, %v877
        %v879 = vsel %vm314, %v777, -inf
        %v880 = vsel %vm314, %v778, -inf
        %v881 = vmax.f32 %v879, %v880
        %v882 = vrot.slane %v881, 4
        %v883 = vmax.f32 %v881, %v882
        %v884 = vrot.slane %v883, 2
        %v885 = vmax.f32 %v883, %v884
        %v886 = vrot.slane %v885, 1
        %v887 = vmax.f32 %v885, %v886
        %v888 = vsel %vm314, %v779, -inf
        %v889 = vsel %vm314, %v780, -inf
        %v890 = vmax.f32 %v888, %v889
        %v891 = vrot.slane %v890, 4
        %v892 = vmax.f32 %v890, %v891
        %v893 = vrot.slane %v892, 2
        %v894 = vmax.f32 %v892, %v893
        %v895 = vrot.slane %v894, 1
        %v896 = vmax.f32 %v894, %v895
        %v897 = vsel %vm314, %v781, -inf
        %v898 = vsel %vm314, %v782, -inf
        %v899 = vmax.f32 %v897, %v898
        %v900 = vrot.slane %v899, 4
        %v901 = vmax.f32 %v899, %v900
        %v902 = vrot.slane %v901, 2
        %v903 = vmax.f32 %v901, %v902
        %v904 = vrot.slane %v903, 1
        %v905 = vmax.f32 %v903, %v904
        %v906 = vsel %vm314, %v783, -inf
        %v907 = vsel %vm314, %v784, -inf
        %v908 = vmax.f32 %v906, %v907
        %v909 = vrot.slane %v908, 4
        %v910 = vmax.f32 %v908, %v909
        %v911 = vrot.slane %v910, 2
        %v912 = vmax.f32 %v910, %v911
        %v913 = vrot.slane %v912, 1
        %v914 = vmax.f32 %v912, %v913
        %v915 = vsel %vm314, %v785, -inf
        %v916 = vsel %vm314, %v786, -inf
        %v917 = vmax.f32 %v915, %v916
        %v918 = vrot.slane %v917, 4
        %v919 = vmax.f32 %v917, %v918
        %v920 = vrot.slane %v919, 2
        %v921 = vmax.f32 %v919, %v920
        %v922 = vrot.slane %v921, 1
        %v923 = vmax.f32 %v921, %v922
        %v924 = vsel %vm314, %v787, -inf
        %v925 = vsel %vm314, %v788, -inf
        %v926 = vmax.f32 %v924, %v925
        %v927 = vrot.slane %v926, 4
        %v928 = vmax.f32 %v926, %v927
        %v929 = vrot.slane %v928, 2
        %v930 = vmax.f32 %v928, %v929
        %v931 = vrot.slane %v930, 1
        %v932 = vmax.f32 %v930, %v931
        %v949 = vsel %vm475, %v806, %v797
        %v950 = vsel %vm477, %v815, %v949
        %v951 = vsel %vm479, %v824, %v950
        %v952 = vsel %vm481, %v833, %v951
        %v953 = vsel %vm483, %v842, %v952
        %v954 = vsel %vm485, %v851, %v953
        %v955 = vsel %vm487, %v860, %v954
        %v956 = vsel %vm475, %v878, %v869
        %v957 = vsel %vm477, %v887, %v956
        %v958 = vsel %vm479, %v896, %v957
        %v959 = vsel %vm481, %v905, %v958
        %v960 = vsel %vm483, %v914, %v959
        %v961 = vsel %vm485, %v923, %v960
        %v962 = vsel %vm487, %v932, %v961
        %s965 = scalar_lea.vmem [#allocation2], 32
        %966 = vst.msk [vmem:[%s965] sm:$0xff] %vm314, %v955
        %967 = vst.msk [vmem:[%s965 + $0x8] sm:$0xff] %vm314, %v962
        %s968 = sfloor.f32 %s741
        %s969 = scvt.f32.s32.to.zero.pseudo %s968
        %s970 = sadd.s32 %s969, %s183
        %p971 = scmp.gt.s32.totalorder %s970, 0
        %s972 = scalar_select %p971, %s970, 0
        %p973 = scmp.lt.s32.totalorder %s972, 16
        %s974 = scalar_select %p973, %s972, 16
        %s975 = smul.f32 %s223, 4.0
        %s976 = sceil.f32 %s975
        %s977 = scvt.f32.s32.to.zero.pseudo %s976
        %s978 = sadd.s32 %s977, %s183
        %p979 = scmp.gt.s32.totalorder %s978, 0
        %s980 = scalar_select %p979, %s978, 0
        %p981 = scmp.lt.s32.totalorder %s980, 16
        %s982 = scalar_select %p981, %s980, 16
        %v983 = vstv %s974
        %vm984 = vcmp.ge.s32.totalorder %v257, %v983
        %vm985 = vcmp.ge.s32.totalorder %v258, %v983
        %v986 = vstv %s982
        %vm987 = vcmp.lt.s32.totalorder %v257, %v986
        %vm988 = vcmp.lt.s32.totalorder %v258, %v986
        %vm989 = vmand %vm984, %vm987
        %vm990 = vmand %vm985, %vm988
        %v991 = vsel %vm989, %v224, -inf
        %v992 = vsel %vm990, %v225, -inf
        %v993 = vsel %vm989, %v226, -inf
        %v994 = vsel %vm990, %v227, -inf
        %v995 = vsel %vm989, %v228, -inf
        %v996 = vsel %vm990, %v229, -inf
        %v997 = vsel %vm989, %v230, -inf
        %v998 = vsel %vm990, %v231, -inf
        %v999 = vsel %vm989, %v232, -inf
        %v1000 = vsel %vm990, %v233, -inf
        %v1001 = vsel %vm989, %v234, -inf
        %v1002 = vsel %vm990, %v235, -inf
        %v1003 = vsel %vm989, %v236, -inf
        %v1004 = vsel %vm990, %v237, -inf
        %v1005 = vsel %vm989, %v238, -inf
        %v1006 = vsel %vm990, %v239, -inf
        %v1007 = vsel %vm989, %v240, -inf
        %v1008 = vsel %vm990, %v241, -inf
        %v1009 = vsel %vm989, %v242, -inf
        %v1010 = vsel %vm990, %v243, -inf
        %v1011 = vsel %vm989, %v244, -inf
        %v1012 = vsel %vm990, %v245, -inf
        %v1013 = vsel %vm989, %v246, -inf
        %v1014 = vsel %vm990, %v247, -inf
        %v1015 = vsel %vm989, %v248, -inf
        %v1016 = vsel %vm990, %v249, -inf
        %v1017 = vsel %vm989, %v250, -inf
        %v1018 = vsel %vm990, %v251, -inf
        %v1019 = vsel %vm989, %v252, -inf
        %v1020 = vsel %vm990, %v253, -inf
        %v1021 = vsel %vm989, %v254, -inf
        %v1022 = vsel %vm990, %v255, -inf
        %v1023 = vsel %vm314, %v991, -inf
        %v1024 = vsel %vm314, %v992, -inf
        %v1025 = vmax.f32 %v1023, %v1024
        %v1026 = vrot.slane %v1025, 4
        %v1027 = vmax.f32 %v1025, %v1026
        %v1028 = vrot.slane %v1027, 2
        %v1029 = vmax.f32 %v1027, %v1028
        %v1030 = vrot.slane %v1029, 1
        %v1031 = vmax.f32 %v1029, %v1030
        %v1032 = vsel %vm314, %v993, -inf
        %v1033 = vsel %vm314, %v994, -inf
        %v1034 = vmax.f32 %v1032, %v1033
        %v1035 = vrot.slane %v1034, 4
        %v1036 = vmax.f32 %v1034, %v1035
        %v1037 = vrot.slane %v1036, 2
        %v1038 = vmax.f32 %v1036, %v1037
        %v1039 = vrot.slane %v1038, 1
        %v1040 = vmax.f32 %v1038, %v1039
        %v1041 = vsel %vm314, %v995, -inf
        %v1042 = vsel %vm314, %v996, -inf
        %v1043 = vmax.f32 %v1041, %v1042
        %v1044 = vrot.slane %v1043, 4
        %v1045 = vmax.f32 %v1043, %v1044
        %v1046 = vrot.slane %v1045, 2
        %v1047 = vmax.f32 %v1045, %v1046
        %v1048 = vrot.slane %v1047, 1
        %v1049 = vmax.f32 %v1047, %v1048
        %v1050 = vsel %vm314, %v997, -inf
        %v1051 = vsel %vm314, %v998, -inf
        %v1052 = vmax.f32 %v1050, %v1051
        %v1053 = vrot.slane %v1052, 4
        %v1054 = vmax.f32 %v1052, %v1053
        %v1055 = vrot.slane %v1054, 2
        %v1056 = vmax.f32 %v1054, %v1055
        %v1057 = vrot.slane %v1056, 1
        %v1058 = vmax.f32 %v1056, %v1057
        %v1059 = vsel %vm314, %v999, -inf
        %v1060 = vsel %vm314, %v1000, -inf
        %v1061 = vmax.f32 %v1059, %v1060
        %v1062 = vrot.slane %v1061, 4
        %v1063 = vmax.f32 %v1061, %v1062
        %v1064 = vrot.slane %v1063, 2
        %v1065 = vmax.f32 %v1063, %v1064
        %v1066 = vrot.slane %v1065, 1
        %v1067 = vmax.f32 %v1065, %v1066
        %v1068 = vsel %vm314, %v1001, -inf
        %v1069 = vsel %vm314, %v1002, -inf
        %v1070 = vmax.f32 %v1068, %v1069
        %v1071 = vrot.slane %v1070, 4
        %v1072 = vmax.f32 %v1070, %v1071
        %v1073 = vrot.slane %v1072, 2
        %v1074 = vmax.f32 %v1072, %v1073
        %v1075 = vrot.slane %v1074, 1
        %v1076 = vmax.f32 %v1074, %v1075
        %v1077 = vsel %vm314, %v1003, -inf
        %v1078 = vsel %vm314, %v1004, -inf
        %v1079 = vmax.f32 %v1077, %v1078
        %v1080 = vrot.slane %v1079, 4
        %v1081 = vmax.f32 %v1079, %v1080
        %v1082 = vrot.slane %v1081, 2
        %v1083 = vmax.f32 %v1081, %v1082
        %v1084 = vrot.slane %v1083, 1
        %v1085 = vmax.f32 %v1083, %v1084
        %v1086 = vsel %vm314, %v1005, -inf
        %v1087 = vsel %vm314, %v1006, -inf
        %v1088 = vmax.f32 %v1086, %v1087
        %v1089 = vrot.slane %v1088, 4
        %v1090 = vmax.f32 %v1088, %v1089
        %v1091 = vrot.slane %v1090, 2
        %v1092 = vmax.f32 %v1090, %v1091
        %v1093 = vrot.slane %v1092, 1
        %v1094 = vmax.f32 %v1092, %v1093
        %v1095 = vsel %vm314, %v1007, -inf
        %v1096 = vsel %vm314, %v1008, -inf
        %v1097 = vmax.f32 %v1095, %v1096
        %v1098 = vrot.slane %v1097, 4
        %v1099 = vmax.f32 %v1097, %v1098
        %v1100 = vrot.slane %v1099, 2
        %v1101 = vmax.f32 %v1099, %v1100
        %v1102 = vrot.slane %v1101, 1
        %v1103 = vmax.f32 %v1101, %v1102
        %v1104 = vsel %vm314, %v1009, -inf
        %v1105 = vsel %vm314, %v1010, -inf
        %v1106 = vmax.f32 %v1104, %v1105
        %v1107 = vrot.slane %v1106, 4
        %v1108 = vmax.f32 %v1106, %v1107
        %v1109 = vrot.slane %v1108, 2
        %v1110 = vmax.f32 %v1108, %v1109
        %v1111 = vrot.slane %v1110, 1
        %v1112 = vmax.f32 %v1110, %v1111
        %v1113 = vsel %vm314, %v1011, -inf
        %v1114 = vsel %vm314, %v1012, -inf
        %v1115 = vmax.f32 %v1113, %v1114
        %v1116 = vrot.slane %v1115, 4
        %v1117 = vmax.f32 %v1115, %v1116
        %v1118 = vrot.slane %v1117, 2
        %v1119 = vmax.f32 %v1117, %v1118
        %v1120 = vrot.slane %v1119, 1
        %v1121 = vmax.f32 %v1119, %v1120
        %v1122 = vsel %vm314, %v1013, -inf
        %v1123 = vsel %vm314, %v1014, -inf
        %v1124 = vmax.f32 %v1122, %v1123
        %v1125 = vrot.slane %v1124, 4
        %v1126 = vmax.f32 %v1124, %v1125
        %v1127 = vrot.slane %v1126, 2
        %v1128 = vmax.f32 %v1126, %v1127
        %v1129 = vrot.slane %v1128, 1
        %v1130 = vmax.f32 %v1128, %v1129
        %v1131 = vsel %vm314, %v1015, -inf
        %v1132 = vsel %vm314, %v1016, -inf
        %v1133 = vmax.f32 %v1131, %v1132
        %v1134 = vrot.slane %v1133, 4
        %v1135 = vmax.f32 %v1133, %v1134
        %v1136 = vrot.slane %v1135, 2
        %v1137 = vmax.f32 %v1135, %v1136
        %v1138 = vrot.slane %v1137, 1
        %v1139 = vmax.f32 %v1137, %v1138
        %v1140 = vsel %vm314, %v1017, -inf
        %v1141 = vsel %vm314, %v1018, -inf
        %v1142 = vmax.f32 %v1140, %v1141
        %v1143 = vrot.slane %v1142, 4
        %v1144 = vmax.f32 %v1142, %v1143
        %v1145 = vrot.slane %v1144, 2
        %v1146 = vmax.f32 %v1144, %v1145
        %v1147 = vrot.slane %v1146, 1
        %v1148 = vmax.f32 %v1146, %v1147
        %v1149 = vsel %vm314, %v1019, -inf
        %v1150 = vsel %vm314, %v1020, -inf
        %v1151 = vmax.f32 %v1149, %v1150
        %v1152 = vrot.slane %v1151, 4
        %v1153 = vmax.f32 %v1151, %v1152
        %v1154 = vrot.slane %v1153, 2
        %v1155 = vmax.f32 %v1153, %v1154
        %v1156 = vrot.slane %v1155, 1
        %v1157 = vmax.f32 %v1155, %v1156
        %v1158 = vsel %vm314, %v1021, -inf
        %v1159 = vsel %vm314, %v1022, -inf
        %v1160 = vmax.f32 %v1158, %v1159
        %v1161 = vrot.slane %v1160, 4
        %v1162 = vmax.f32 %v1160, %v1161
        %v1163 = vrot.slane %v1162, 2
        %v1164 = vmax.f32 %v1162, %v1163
        %v1165 = vrot.slane %v1164, 1
        %v1166 = vmax.f32 %v1164, %v1165
        %v1183 = vsel %vm475, %v1040, %v1031
        %v1184 = vsel %vm477, %v1049, %v1183
        %v1185 = vsel %vm479, %v1058, %v1184
        %v1186 = vsel %vm481, %v1067, %v1185
        %v1187 = vsel %vm483, %v1076, %v1186
        %v1188 = vsel %vm485, %v1085, %v1187
        %v1189 = vsel %vm487, %v1094, %v1188
        %v1190 = vsel %vm475, %v1112, %v1103
        %v1191 = vsel %vm477, %v1121, %v1190
        %v1192 = vsel %vm479, %v1130, %v1191
        %v1193 = vsel %vm481, %v1139, %v1192
        %v1194 = vsel %vm483, %v1148, %v1193
        %v1195 = vsel %vm485, %v1157, %v1194
        %v1196 = vsel %vm487, %v1166, %v1195
        %s1199 = scalar_lea.vmem [#allocation2], 48
        %1200 = vst.msk [vmem:[%s1199] sm:$0xff] %vm314, %v1189
        %1201 = vst.msk [vmem:[%s1199 + $0x8] sm:$0xff] %vm314, %v1196
        %s1202 = sfloor.f32 %s975
        %s1203 = scvt.f32.s32.to.zero.pseudo %s1202
        %s1204 = sadd.s32 %s1203, %s183
        %p1205 = scmp.gt.s32.totalorder %s1204, 0
        %s1206 = scalar_select %p1205, %s1204, 0
        %p1207 = scmp.lt.s32.totalorder %s1206, 16
        %s1208 = scalar_select %p1207, %s1206, 16
        %s1209 = smul.f32 %s223, 5.0
        %s1210 = sceil.f32 %s1209
        %s1211 = scvt.f32.s32.to.zero.pseudo %s1210
        %s1212 = sadd.s32 %s1211, %s183
        %p1213 = scmp.gt.s32.totalorder %s1212, 0
        %s1214 = scalar_select %p1213, %s1212, 0
        %p1215 = scmp.lt.s32.totalorder %s1214, 16
        %s1216 = scalar_select %p1215, %s1214, 16
        %v1217 = vstv %s1208
        %vm1218 = vcmp.ge.s32.totalorder %v257, %v1217
        %vm1219 = vcmp.ge.s32.totalorder %v258, %v1217
        %v1220 = vstv %s1216
        %vm1221 = vcmp.lt.s32.totalorder %v257, %v1220
        %vm1222 = vcmp.lt.s32.totalorder %v258, %v1220
        %vm1223 = vmand %vm1218, %vm1221
        %vm1224 = vmand %vm1219, %vm1222
        %v1225 = vsel %vm1223, %v224, -inf
        %v1226 = vsel %vm1224, %v225, -inf
        %v1227 = vsel %vm1223, %v226, -inf
        %v1228 = vsel %vm1224, %v227, -inf
        %v1229 = vsel %vm1223, %v228, -inf
        %v1230 = vsel %vm1224, %v229, -inf
        %v1231 = vsel %vm1223, %v230, -inf
        %v1232 = vsel %vm1224, %v231, -inf
        %v1233 = vsel %vm1223, %v232, -inf
        %v1234 = vsel %vm1224, %v233, -inf
        %v1235 = vsel %vm1223, %v234, -inf
        %v1236 = vsel %vm1224, %v235, -inf
        %v1237 = vsel %vm1223, %v236, -inf
        %v1238 = vsel %vm1224, %v237, -inf
        %v1239 = vsel %vm1223, %v238, -inf
        %v1240 = vsel %vm1224, %v239, -inf
        %v1241 = vsel %vm1223, %v240, -inf
        %v1242 = vsel %vm1224, %v241, -inf
        %v1243 = vsel %vm1223, %v242, -inf
        %v1244 = vsel %vm1224, %v243, -inf
        %v1245 = vsel %vm1223, %v244, -inf
        %v1246 = vsel %vm1224, %v245, -inf
        %v1247 = vsel %vm1223, %v246, -inf
        %v1248 = vsel %vm1224, %v247, -inf
        %v1249 = vsel %vm1223, %v248, -inf
        %v1250 = vsel %vm1224, %v249, -inf
        %v1251 = vsel %vm1223, %v250, -inf
        %v1252 = vsel %vm1224, %v251, -inf
        %v1253 = vsel %vm1223, %v252, -inf
        %v1254 = vsel %vm1224, %v253, -inf
        %v1255 = vsel %vm1223, %v254, -inf
        %v1256 = vsel %vm1224, %v255, -inf
        %v1257 = vsel %vm314, %v1225, -inf
        %v1258 = vsel %vm314, %v1226, -inf
        %v1259 = vmax.f32 %v1257, %v1258
        %v1260 = vrot.slane %v1259, 4
        %v1261 = vmax.f32 %v1259, %v1260
        %v1262 = vrot.slane %v1261, 2
        %v1263 = vmax.f32 %v1261, %v1262
        %v1264 = vrot.slane %v1263, 1
        %v1265 = vmax.f32 %v1263, %v1264
        %v1266 = vsel %vm314, %v1227, -inf
        %v1267 = vsel %vm314, %v1228, -inf
        %v1268 = vmax.f32 %v1266, %v1267
        %v1269 = vrot.slane %v1268, 4
        %v1270 = vmax.f32 %v1268, %v1269
        %v1271 = vrot.slane %v1270, 2
        %v1272 = vmax.f32 %v1270, %v1271
        %v1273 = vrot.slane %v1272, 1
        %v1274 = vmax.f32 %v1272, %v1273
        %v1275 = vsel %vm314, %v1229, -inf
        %v1276 = vsel %vm314, %v1230, -inf
        %v1277 = vmax.f32 %v1275, %v1276
        %v1278 = vrot.slane %v1277, 4
        %v1279 = vmax.f32 %v1277, %v1278
        %v1280 = vrot.slane %v1279, 2
        %v1281 = vmax.f32 %v1279, %v1280
        %v1282 = vrot.slane %v1281, 1
        %v1283 = vmax.f32 %v1281, %v1282
        %v1284 = vsel %vm314, %v1231, -inf
        %v1285 = vsel %vm314, %v1232, -inf
        %v1286 = vmax.f32 %v1284, %v1285
        %v1287 = vrot.slane %v1286, 4
        %v1288 = vmax.f32 %v1286, %v1287
        %v1289 = vrot.slane %v1288, 2
        %v1290 = vmax.f32 %v1288, %v1289
        %v1291 = vrot.slane %v1290, 1
        %v1292 = vmax.f32 %v1290, %v1291
        %v1293 = vsel %vm314, %v1233, -inf
        %v1294 = vsel %vm314, %v1234, -inf
        %v1295 = vmax.f32 %v1293, %v1294
        %v1296 = vrot.slane %v1295, 4
        %v1297 = vmax.f32 %v1295, %v1296
        %v1298 = vrot.slane %v1297, 2
        %v1299 = vmax.f32 %v1297, %v1298
        %v1300 = vrot.slane %v1299, 1
        %v1301 = vmax.f32 %v1299, %v1300
        %v1302 = vsel %vm314, %v1235, -inf
        %v1303 = vsel %vm314, %v1236, -inf
        %v1304 = vmax.f32 %v1302, %v1303
        %v1305 = vrot.slane %v1304, 4
        %v1306 = vmax.f32 %v1304, %v1305
        %v1307 = vrot.slane %v1306, 2
        %v1308 = vmax.f32 %v1306, %v1307
        %v1309 = vrot.slane %v1308, 1
        %v1310 = vmax.f32 %v1308, %v1309
        %v1311 = vsel %vm314, %v1237, -inf
        %v1312 = vsel %vm314, %v1238, -inf
        %v1313 = vmax.f32 %v1311, %v1312
        %v1314 = vrot.slane %v1313, 4
        %v1315 = vmax.f32 %v1313, %v1314
        %v1316 = vrot.slane %v1315, 2
        %v1317 = vmax.f32 %v1315, %v1316
        %v1318 = vrot.slane %v1317, 1
        %v1319 = vmax.f32 %v1317, %v1318
        %v1320 = vsel %vm314, %v1239, -inf
        %v1321 = vsel %vm314, %v1240, -inf
        %v1322 = vmax.f32 %v1320, %v1321
        %v1323 = vrot.slane %v1322, 4
        %v1324 = vmax.f32 %v1322, %v1323
        %v1325 = vrot.slane %v1324, 2
        %v1326 = vmax.f32 %v1324, %v1325
        %v1327 = vrot.slane %v1326, 1
        %v1328 = vmax.f32 %v1326, %v1327
        %v1329 = vsel %vm314, %v1241, -inf
        %v1330 = vsel %vm314, %v1242, -inf
        %v1331 = vmax.f32 %v1329, %v1330
        %v1332 = vrot.slane %v1331, 4
        %v1333 = vmax.f32 %v1331, %v1332
        %v1334 = vrot.slane %v1333, 2
        %v1335 = vmax.f32 %v1333, %v1334
        %v1336 = vrot.slane %v1335, 1
        %v1337 = vmax.f32 %v1335, %v1336
        %v1338 = vsel %vm314, %v1243, -inf
        %v1339 = vsel %vm314, %v1244, -inf
        %v1340 = vmax.f32 %v1338, %v1339
        %v1341 = vrot.slane %v1340, 4
        %v1342 = vmax.f32 %v1340, %v1341
        %v1343 = vrot.slane %v1342, 2
        %v1344 = vmax.f32 %v1342, %v1343
        %v1345 = vrot.slane %v1344, 1
        %v1346 = vmax.f32 %v1344, %v1345
        %v1347 = vsel %vm314, %v1245, -inf
        %v1348 = vsel %vm314, %v1246, -inf
        %v1349 = vmax.f32 %v1347, %v1348
        %v1350 = vrot.slane %v1349, 4
        %v1351 = vmax.f32 %v1349, %v1350
        %v1352 = vrot.slane %v1351, 2
        %v1353 = vmax.f32 %v1351, %v1352
        %v1354 = vrot.slane %v1353, 1
        %v1355 = vmax.f32 %v1353, %v1354
        %v1356 = vsel %vm314, %v1247, -inf
        %v1357 = vsel %vm314, %v1248, -inf
        %v1358 = vmax.f32 %v1356, %v1357
        %v1359 = vrot.slane %v1358, 4
        %v1360 = vmax.f32 %v1358, %v1359
        %v1361 = vrot.slane %v1360, 2
        %v1362 = vmax.f32 %v1360, %v1361
        %v1363 = vrot.slane %v1362, 1
        %v1364 = vmax.f32 %v1362, %v1363
        %v1365 = vsel %vm314, %v1249, -inf
        %v1366 = vsel %vm314, %v1250, -inf
        %v1367 = vmax.f32 %v1365, %v1366
        %v1368 = vrot.slane %v1367, 4
        %v1369 = vmax.f32 %v1367, %v1368
        %v1370 = vrot.slane %v1369, 2
        %v1371 = vmax.f32 %v1369, %v1370
        %v1372 = vrot.slane %v1371, 1
        %v1373 = vmax.f32 %v1371, %v1372
        %v1374 = vsel %vm314, %v1251, -inf
        %v1375 = vsel %vm314, %v1252, -inf
        %v1376 = vmax.f32 %v1374, %v1375
        %v1377 = vrot.slane %v1376, 4
        %v1378 = vmax.f32 %v1376, %v1377
        %v1379 = vrot.slane %v1378, 2
        %v1380 = vmax.f32 %v1378, %v1379
        %v1381 = vrot.slane %v1380, 1
        %v1382 = vmax.f32 %v1380, %v1381
        %v1383 = vsel %vm314, %v1253, -inf
        %v1384 = vsel %vm314, %v1254, -inf
        %v1385 = vmax.f32 %v1383, %v1384
        %v1386 = vrot.slane %v1385, 4
        %v1387 = vmax.f32 %v1385, %v1386
        %v1388 = vrot.slane %v1387, 2
        %v1389 = vmax.f32 %v1387, %v1388
        %v1390 = vrot.slane %v1389, 1
        %v1391 = vmax.f32 %v1389, %v1390
        %v1392 = vsel %vm314, %v1255, -inf
        %v1393 = vsel %vm314, %v1256, -inf
        %v1394 = vmax.f32 %v1392, %v1393
        %v1395 = vrot.slane %v1394, 4
        %v1396 = vmax.f32 %v1394, %v1395
        %v1397 = vrot.slane %v1396, 2
        %v1398 = vmax.f32 %v1396, %v1397
        %v1399 = vrot.slane %v1398, 1
        %v1400 = vmax.f32 %v1398, %v1399
        %v1417 = vsel %vm475, %v1274, %v1265
        %v1418 = vsel %vm477, %v1283, %v1417
        %v1419 = vsel %vm479, %v1292, %v1418
        %v1420 = vsel %vm481, %v1301, %v1419
        %v1421 = vsel %vm483, %v1310, %v1420
        %v1422 = vsel %vm485, %v1319, %v1421
        %v1423 = vsel %vm487, %v1328, %v1422
        %v1424 = vsel %vm475, %v1346, %v1337
        %v1425 = vsel %vm477, %v1355, %v1424
        %v1426 = vsel %vm479, %v1364, %v1425
        %v1427 = vsel %vm481, %v1373, %v1426
        %v1428 = vsel %vm483, %v1382, %v1427
        %v1429 = vsel %vm485, %v1391, %v1428
        %v1430 = vsel %vm487, %v1400, %v1429
        %s1433 = scalar_lea.vmem [#allocation2], 64
        %1434 = vst.msk [vmem:[%s1433] sm:$0xff] %vm314, %v1423
        %1435 = vst.msk [vmem:[%s1433 + $0x8] sm:$0xff] %vm314, %v1430
        %s1436 = sfloor.f32 %s1209
        %s1437 = scvt.f32.s32.to.zero.pseudo %s1436
        %s1438 = sadd.s32 %s1437, %s183
        %p1439 = scmp.gt.s32.totalorder %s1438, 0
        %s1440 = scalar_select %p1439, %s1438, 0
        %p1441 = scmp.lt.s32.totalorder %s1440, 16
        %s1442 = scalar_select %p1441, %s1440, 16
        %s1443 = smul.f32 %s223, 6.0
        %s1444 = sceil.f32 %s1443
        %s1445 = scvt.f32.s32.to.zero.pseudo %s1444
        %s1446 = sadd.s32 %s1445, %s183
        %p1447 = scmp.gt.s32.totalorder %s1446, 0
        %s1448 = scalar_select %p1447, %s1446, 0
        %p1449 = scmp.lt.s32.totalorder %s1448, 16
        %s1450 = scalar_select %p1449, %s1448, 16
        %v1451 = vstv %s1442
        %vm1452 = vcmp.ge.s32.totalorder %v257, %v1451
        %vm1453 = vcmp.ge.s32.totalorder %v258, %v1451
        %v1454 = vstv %s1450
        %vm1455 = vcmp.lt.s32.totalorder %v257, %v1454
        %vm1456 = vcmp.lt.s32.totalorder %v258, %v1454
        %vm1457 = vmand %vm1452, %vm1455
        %vm1458 = vmand %vm1453, %vm1456
        %v1459 = vsel %vm1457, %v224, -inf
        %v1460 = vsel %vm1458, %v225, -inf
        %v1461 = vsel %vm1457, %v226, -inf
        %v1462 = vsel %vm1458, %v227, -inf
        %v1463 = vsel %vm1457, %v228, -inf
        %v1464 = vsel %vm1458, %v229, -inf
        %v1465 = vsel %vm1457, %v230, -inf
        %v1466 = vsel %vm1458, %v231, -inf
        %v1467 = vsel %vm1457, %v232, -inf
        %v1468 = vsel %vm1458, %v233, -inf
        %v1469 = vsel %vm1457, %v234, -inf
        %v1470 = vsel %vm1458, %v235, -inf
        %v1471 = vsel %vm1457, %v236, -inf
        %v1472 = vsel %vm1458, %v237, -inf
        %v1473 = vsel %vm1457, %v238, -inf
        %v1474 = vsel %vm1458, %v239, -inf
        %v1475 = vsel %vm1457, %v240, -inf
        %v1476 = vsel %vm1458, %v241, -inf
        %v1477 = vsel %vm1457, %v242, -inf
        %v1478 = vsel %vm1458, %v243, -inf
        %v1479 = vsel %vm1457, %v244, -inf
        %v1480 = vsel %vm1458, %v245, -inf
        %v1481 = vsel %vm1457, %v246, -inf
        %v1482 = vsel %vm1458, %v247, -inf
        %v1483 = vsel %vm1457, %v248, -inf
        %v1484 = vsel %vm1458, %v249, -inf
        %v1485 = vsel %vm1457, %v250, -inf
        %v1486 = vsel %vm1458, %v251, -inf
        %v1487 = vsel %vm1457, %v252, -inf
        %v1488 = vsel %vm1458, %v253, -inf
        %v1489 = vsel %vm1457, %v254, -inf
        %v1490 = vsel %vm1458, %v255, -inf
        %v1491 = vsel %vm314, %v1459, -inf
        %v1492 = vsel %vm314, %v1460, -inf
        %v1493 = vmax.f32 %v1491, %v1492
        %v1494 = vrot.slane %v1493, 4
        %v1495 = vmax.f32 %v1493, %v1494
        %v1496 = vrot.slane %v1495, 2
        %v1497 = vmax.f32 %v1495, %v1496
        %v1498 = vrot.slane %v1497, 1
        %v1499 = vmax.f32 %v1497, %v1498
        %v1500 = vsel %vm314, %v1461, -inf
        %v1501 = vsel %vm314, %v1462, -inf
        %v1502 = vmax.f32 %v1500, %v1501
        %v1503 = vrot.slane %v1502, 4
        %v1504 = vmax.f32 %v1502, %v1503
        %v1505 = vrot.slane %v1504, 2
        %v1506 = vmax.f32 %v1504, %v1505
        %v1507 = vrot.slane %v1506, 1
        %v1508 = vmax.f32 %v1506, %v1507
        %v1509 = vsel %vm314, %v1463, -inf
        %v1510 = vsel %vm314, %v1464, -inf
        %v1511 = vmax.f32 %v1509, %v1510
        %v1512 = vrot.slane %v1511, 4
        %v1513 = vmax.f32 %v1511, %v1512
        %v1514 = vrot.slane %v1513, 2
        %v1515 = vmax.f32 %v1513, %v1514
        %v1516 = vrot.slane %v1515, 1
        %v1517 = vmax.f32 %v1515, %v1516
        %v1518 = vsel %vm314, %v1465, -inf
        %v1519 = vsel %vm314, %v1466, -inf
        %v1520 = vmax.f32 %v1518, %v1519
        %v1521 = vrot.slane %v1520, 4
        %v1522 = vmax.f32 %v1520, %v1521
        %v1523 = vrot.slane %v1522, 2
        %v1524 = vmax.f32 %v1522, %v1523
        %v1525 = vrot.slane %v1524, 1
        %v1526 = vmax.f32 %v1524, %v1525
        %v1527 = vsel %vm314, %v1467, -inf
        %v1528 = vsel %vm314, %v1468, -inf
        %v1529 = vmax.f32 %v1527, %v1528
        %v1530 = vrot.slane %v1529, 4
        %v1531 = vmax.f32 %v1529, %v1530
        %v1532 = vrot.slane %v1531, 2
        %v1533 = vmax.f32 %v1531, %v1532
        %v1534 = vrot.slane %v1533, 1
        %v1535 = vmax.f32 %v1533, %v1534
        %v1536 = vsel %vm314, %v1469, -inf
        %v1537 = vsel %vm314, %v1470, -inf
        %v1538 = vmax.f32 %v1536, %v1537
        %v1539 = vrot.slane %v1538, 4
        %v1540 = vmax.f32 %v1538, %v1539
        %v1541 = vrot.slane %v1540, 2
        %v1542 = vmax.f32 %v1540, %v1541
        %v1543 = vrot.slane %v1542, 1
        %v1544 = vmax.f32 %v1542, %v1543
        %v1545 = vsel %vm314, %v1471, -inf
        %v1546 = vsel %vm314, %v1472, -inf
        %v1547 = vmax.f32 %v1545, %v1546
        %v1548 = vrot.slane %v1547, 4
        %v1549 = vmax.f32 %v1547, %v1548
        %v1550 = vrot.slane %v1549, 2
        %v1551 = vmax.f32 %v1549, %v1550
        %v1552 = vrot.slane %v1551, 1
        %v1553 = vmax.f32 %v1551, %v1552
        %v1554 = vsel %vm314, %v1473, -inf
        %v1555 = vsel %vm314, %v1474, -inf
        %v1556 = vmax.f32 %v1554, %v1555
        %v1557 = vrot.slane %v1556, 4
        %v1558 = vmax.f32 %v1556, %v1557
        %v1559 = vrot.slane %v1558, 2
        %v1560 = vmax.f32 %v1558, %v1559
        %v1561 = vrot.slane %v1560, 1
        %v1562 = vmax.f32 %v1560, %v1561
        %v1563 = vsel %vm314, %v1475, -inf
        %v1564 = vsel %vm314, %v1476, -inf
        %v1565 = vmax.f32 %v1563, %v1564
        %v1566 = vrot.slane %v1565, 4
        %v1567 = vmax.f32 %v1565, %v1566
        %v1568 = vrot.slane %v1567, 2
        %v1569 = vmax.f32 %v1567, %v1568
        %v1570 = vrot.slane %v1569, 1
        %v1571 = vmax.f32 %v1569, %v1570
        %v1572 = vsel %vm314, %v1477, -inf
        %v1573 = vsel %vm314, %v1478, -inf
        %v1574 = vmax.f32 %v1572, %v1573
        %v1575 = vrot.slane %v1574, 4
        %v1576 = vmax.f32 %v1574, %v1575
        %v1577 = vrot.slane %v1576, 2
        %v1578 = vmax.f32 %v1576, %v1577
        %v1579 = vrot.slane %v1578, 1
        %v1580 = vmax.f32 %v1578, %v1579
        %v1581 = vsel %vm314, %v1479, -inf
        %v1582 = vsel %vm314, %v1480, -inf
        %v1583 = vmax.f32 %v1581, %v1582
        %v1584 = vrot.slane %v1583, 4
        %v1585 = vmax.f32 %v1583, %v1584
        %v1586 = vrot.slane %v1585, 2
        %v1587 = vmax.f32 %v1585, %v1586
        %v1588 = vrot.slane %v1587, 1
        %v1589 = vmax.f32 %v1587, %v1588
        %v1590 = vsel %vm314, %v1481, -inf
        %v1591 = vsel %vm314, %v1482, -inf
        %v1592 = vmax.f32 %v1590, %v1591
        %v1593 = vrot.slane %v1592, 4
        %v1594 = vmax.f32 %v1592, %v1593
        %v1595 = vrot.slane %v1594, 2
        %v1596 = vmax.f32 %v1594, %v1595
        %v1597 = vrot.slane %v1596, 1
        %v1598 = vmax.f32 %v1596, %v1597
        %v1599 = vsel %vm314, %v1483, -inf
        %v1600 = vsel %vm314, %v1484, -inf
        %v1601 = vmax.f32 %v1599, %v1600
        %v1602 = vrot.slane %v1601, 4
        %v1603 = vmax.f32 %v1601, %v1602
        %v1604 = vrot.slane %v1603, 2
        %v1605 = vmax.f32 %v1603, %v1604
        %v1606 = vrot.slane %v1605, 1
        %v1607 = vmax.f32 %v1605, %v1606
        %v1608 = vsel %vm314, %v1485, -inf
        %v1609 = vsel %vm314, %v1486, -inf
        %v1610 = vmax.f32 %v1608, %v1609
        %v1611 = vrot.slane %v1610, 4
        %v1612 = vmax.f32 %v1610, %v1611
        %v1613 = vrot.slane %v1612, 2
        %v1614 = vmax.f32 %v1612, %v1613
        %v1615 = vrot.slane %v1614, 1
        %v1616 = vmax.f32 %v1614, %v1615
        %v1617 = vsel %vm314, %v1487, -inf
        %v1618 = vsel %vm314, %v1488, -inf
        %v1619 = vmax.f32 %v1617, %v1618
        %v1620 = vrot.slane %v1619, 4
        %v1621 = vmax.f32 %v1619, %v1620
        %v1622 = vrot.slane %v1621, 2
        %v1623 = vmax.f32 %v1621, %v1622
        %v1624 = vrot.slane %v1623, 1
        %v1625 = vmax.f32 %v1623, %v1624
        %v1626 = vsel %vm314, %v1489, -inf
        %v1627 = vsel %vm314, %v1490, -inf
        %v1628 = vmax.f32 %v1626, %v1627
        %v1629 = vrot.slane %v1628, 4
        %v1630 = vmax.f32 %v1628, %v1629
        %v1631 = vrot.slane %v1630, 2
        %v1632 = vmax.f32 %v1630, %v1631
        %v1633 = vrot.slane %v1632, 1
        %v1634 = vmax.f32 %v1632, %v1633
        %v1651 = vsel %vm475, %v1508, %v1499
        %v1652 = vsel %vm477, %v1517, %v1651
        %v1653 = vsel %vm479, %v1526, %v1652
        %v1654 = vsel %vm481, %v1535, %v1653
        %v1655 = vsel %vm483, %v1544, %v1654
        %v1656 = vsel %vm485, %v1553, %v1655
        %v1657 = vsel %vm487, %v1562, %v1656
        %v1658 = vsel %vm475, %v1580, %v1571
        %v1659 = vsel %vm477, %v1589, %v1658
        %v1660 = vsel %vm479, %v1598, %v1659
        %v1661 = vsel %vm481, %v1607, %v1660
        %v1662 = vsel %vm483, %v1616, %v1661
        %v1663 = vsel %vm485, %v1625, %v1662
        %v1664 = vsel %vm487, %v1634, %v1663
        %s1667 = scalar_lea.vmem [#allocation2], 80
        %1668 = vst.msk [vmem:[%s1667] sm:$0xff] %vm314, %v1657
        %1669 = vst.msk [vmem:[%s1667 + $0x8] sm:$0xff] %vm314, %v1664
        %s1670 = sfloor.f32 %s1443
        %s1671 = scvt.f32.s32.to.zero.pseudo %s1670
        %s1672 = sadd.s32 %s1671, %s183
        %p1673 = scmp.gt.s32.totalorder %s1672, 0
        %s1674 = scalar_select %p1673, %s1672, 0
        %p1675 = scmp.lt.s32.totalorder %s1674, 16
        %s1676 = scalar_select %p1675, %s1674, 16
        %s1677 = smul.f32 %s223, 7.0
        %s1678 = sceil.f32 %s1677
        %s1679 = scvt.f32.s32.to.zero.pseudo %s1678
        %s1680 = sadd.s32 %s1679, %s183
        %p1681 = scmp.gt.s32.totalorder %s1680, 0
        %s1682 = scalar_select %p1681, %s1680, 0
        %p1683 = scmp.lt.s32.totalorder %s1682, 16
        %s1684 = scalar_select %p1683, %s1682, 16
        %v1685 = vstv %s1676
        %vm1686 = vcmp.ge.s32.totalorder %v257, %v1685
        %vm1687 = vcmp.ge.s32.totalorder %v258, %v1685
        %v1688 = vstv %s1684
        %vm1689 = vcmp.lt.s32.totalorder %v257, %v1688
        %vm1690 = vcmp.lt.s32.totalorder %v258, %v1688
        %vm1691 = vmand %vm1686, %vm1689
        %vm1692 = vmand %vm1687, %vm1690
        %v1693 = vsel %vm1691, %v224, -inf
        %v1694 = vsel %vm1692, %v225, -inf
        %v1695 = vsel %vm1691, %v226, -inf
        %v1696 = vsel %vm1692, %v227, -inf
        %v1697 = vsel %vm1691, %v228, -inf
        %v1698 = vsel %vm1692, %v229, -inf
        %v1699 = vsel %vm1691, %v230, -inf
        %v1700 = vsel %vm1692, %v231, -inf
        %v1701 = vsel %vm1691, %v232, -inf
        %v1702 = vsel %vm1692, %v233, -inf
        %v1703 = vsel %vm1691, %v234, -inf
        %v1704 = vsel %vm1692, %v235, -inf
        %v1705 = vsel %vm1691, %v236, -inf
        %v1706 = vsel %vm1692, %v237, -inf
        %v1707 = vsel %vm1691, %v238, -inf
        %v1708 = vsel %vm1692, %v239, -inf
        %v1709 = vsel %vm1691, %v240, -inf
        %v1710 = vsel %vm1692, %v241, -inf
        %v1711 = vsel %vm1691, %v242, -inf
        %v1712 = vsel %vm1692, %v243, -inf
        %v1713 = vsel %vm1691, %v244, -inf
        %v1714 = vsel %vm1692, %v245, -inf
        %v1715 = vsel %vm1691, %v246, -inf
        %v1716 = vsel %vm1692, %v247, -inf
        %v1717 = vsel %vm1691, %v248, -inf
        %v1718 = vsel %vm1692, %v249, -inf
        %v1719 = vsel %vm1691, %v250, -inf
        %v1720 = vsel %vm1692, %v251, -inf
        %v1721 = vsel %vm1691, %v252, -inf
        %v1722 = vsel %vm1692, %v253, -inf
        %v1723 = vsel %vm1691, %v254, -inf
        %v1724 = vsel %vm1692, %v255, -inf
        %v1725 = vsel %vm314, %v1693, -inf
        %v1726 = vsel %vm314, %v1694, -inf
        %v1727 = vmax.f32 %v1725, %v1726
        %v1728 = vrot.slane %v1727, 4
        %v1729 = vmax.f32 %v1727, %v1728
        %v1730 = vrot.slane %v1729, 2
        %v1731 = vmax.f32 %v1729, %v1730
        %v1732 = vrot.slane %v1731, 1
        %v1733 = vmax.f32 %v1731, %v1732
        %v1734 = vsel %vm314, %v1695, -inf
        %v1735 = vsel %vm314, %v1696, -inf
        %v1736 = vmax.f32 %v1734, %v1735
        %v1737 = vrot.slane %v1736, 4
        %v1738 = vmax.f32 %v1736, %v1737
        %v1739 = vrot.slane %v1738, 2
        %v1740 = vmax.f32 %v1738, %v1739
        %v1741 = vrot.slane %v1740, 1
        %v1742 = vmax.f32 %v1740, %v1741
        %v1743 = vsel %vm314, %v1697, -inf
        %v1744 = vsel %vm314, %v1698, -inf
        %v1745 = vmax.f32 %v1743, %v1744
        %v1746 = vrot.slane %v1745, 4
        %v1747 = vmax.f32 %v1745, %v1746
        %v1748 = vrot.slane %v1747, 2
        %v1749 = vmax.f32 %v1747, %v1748
        %v1750 = vrot.slane %v1749, 1
        %v1751 = vmax.f32 %v1749, %v1750
        %v1752 = vsel %vm314, %v1699, -inf
        %v1753 = vsel %vm314, %v1700, -inf
        %v1754 = vmax.f32 %v1752, %v1753
        %v1755 = vrot.slane %v1754, 4
        %v1756 = vmax.f32 %v1754, %v1755
        %v1757 = vrot.slane %v1756, 2
        %v1758 = vmax.f32 %v1756, %v1757
        %v1759 = vrot.slane %v1758, 1
        %v1760 = vmax.f32 %v1758, %v1759
        %v1761 = vsel %vm314, %v1701, -inf
        %v1762 = vsel %vm314, %v1702, -inf
        %v1763 = vmax.f32 %v1761, %v1762
        %v1764 = vrot.slane %v1763, 4
        %v1765 = vmax.f32 %v1763, %v1764
        %v1766 = vrot.slane %v1765, 2
        %v1767 = vmax.f32 %v1765, %v1766
        %v1768 = vrot.slane %v1767, 1
        %v1769 = vmax.f32 %v1767, %v1768
        %v1770 = vsel %vm314, %v1703, -inf
        %v1771 = vsel %vm314, %v1704, -inf
        %v1772 = vmax.f32 %v1770, %v1771
        %v1773 = vrot.slane %v1772, 4
        %v1774 = vmax.f32 %v1772, %v1773
        %v1775 = vrot.slane %v1774, 2
        %v1776 = vmax.f32 %v1774, %v1775
        %v1777 = vrot.slane %v1776, 1
        %v1778 = vmax.f32 %v1776, %v1777
        %v1779 = vsel %vm314, %v1705, -inf
        %v1780 = vsel %vm314, %v1706, -inf
        %v1781 = vmax.f32 %v1779, %v1780
        %v1782 = vrot.slane %v1781, 4
        %v1783 = vmax.f32 %v1781, %v1782
        %v1784 = vrot.slane %v1783, 2
        %v1785 = vmax.f32 %v1783, %v1784
        %v1786 = vrot.slane %v1785, 1
        %v1787 = vmax.f32 %v1785, %v1786
        %v1788 = vsel %vm314, %v1707, -inf
        %v1789 = vsel %vm314, %v1708, -inf
        %v1790 = vmax.f32 %v1788, %v1789
        %v1791 = vrot.slane %v1790, 4
        %v1792 = vmax.f32 %v1790, %v1791
        %v1793 = vrot.slane %v1792, 2
        %v1794 = vmax.f32 %v1792, %v1793
        %v1795 = vrot.slane %v1794, 1
        %v1796 = vmax.f32 %v1794, %v1795
        %v1797 = vsel %vm314, %v1709, -inf
        %v1798 = vsel %vm314, %v1710, -inf
        %v1799 = vmax.f32 %v1797, %v1798
        %v1800 = vrot.slane %v1799, 4
        %v1801 = vmax.f32 %v1799, %v1800
        %v1802 = vrot.slane %v1801, 2
        %v1803 = vmax.f32 %v1801, %v1802
        %v1804 = vrot.slane %v1803, 1
        %v1805 = vmax.f32 %v1803, %v1804
        %v1806 = vsel %vm314, %v1711, -inf
        %v1807 = vsel %vm314, %v1712, -inf
        %v1808 = vmax.f32 %v1806, %v1807
        %v1809 = vrot.slane %v1808, 4
        %v1810 = vmax.f32 %v1808, %v1809
        %v1811 = vrot.slane %v1810, 2
        %v1812 = vmax.f32 %v1810, %v1811
        %v1813 = vrot.slane %v1812, 1
        %v1814 = vmax.f32 %v1812, %v1813
        %v1815 = vsel %vm314, %v1713, -inf
        %v1816 = vsel %vm314, %v1714, -inf
        %v1817 = vmax.f32 %v1815, %v1816
        %v1818 = vrot.slane %v1817, 4
        %v1819 = vmax.f32 %v1817, %v1818
        %v1820 = vrot.slane %v1819, 2
        %v1821 = vmax.f32 %v1819, %v1820
        %v1822 = vrot.slane %v1821, 1
        %v1823 = vmax.f32 %v1821, %v1822
        %v1824 = vsel %vm314, %v1715, -inf
        %v1825 = vsel %vm314, %v1716, -inf
        %v1826 = vmax.f32 %v1824, %v1825
        %v1827 = vrot.slane %v1826, 4
        %v1828 = vmax.f32 %v1826, %v1827
        %v1829 = vrot.slane %v1828, 2
        %v1830 = vmax.f32 %v1828, %v1829
        %v1831 = vrot.slane %v1830, 1
        %v1832 = vmax.f32 %v1830, %v1831
        %v1833 = vsel %vm314, %v1717, -inf
        %v1834 = vsel %vm314, %v1718, -inf
        %v1835 = vmax.f32 %v1833, %v1834
        %v1836 = vrot.slane %v1835, 4
        %v1837 = vmax.f32 %v1835, %v1836
        %v1838 = vrot.slane %v1837, 2
        %v1839 = vmax.f32 %v1837, %v1838
        %v1840 = vrot.slane %v1839, 1
        %v1841 = vmax.f32 %v1839, %v1840
        %v1842 = vsel %vm314, %v1719, -inf
        %v1843 = vsel %vm314, %v1720, -inf
        %v1844 = vmax.f32 %v1842, %v1843
        %v1845 = vrot.slane %v1844, 4
        %v1846 = vmax.f32 %v1844, %v1845
        %v1847 = vrot.slane %v1846, 2
        %v1848 = vmax.f32 %v1846, %v1847
        %v1849 = vrot.slane %v1848, 1
        %v1850 = vmax.f32 %v1848, %v1849
        %v1851 = vsel %vm314, %v1721, -inf
        %v1852 = vsel %vm314, %v1722, -inf
        %v1853 = vmax.f32 %v1851, %v1852
        %v1854 = vrot.slane %v1853, 4
        %v1855 = vmax.f32 %v1853, %v1854
        %v1856 = vrot.slane %v1855, 2
        %v1857 = vmax.f32 %v1855, %v1856
        %v1858 = vrot.slane %v1857, 1
        %v1859 = vmax.f32 %v1857, %v1858
        %v1860 = vsel %vm314, %v1723, -inf
        %v1861 = vsel %vm314, %v1724, -inf
        %v1862 = vmax.f32 %v1860, %v1861
        %v1863 = vrot.slane %v1862, 4
        %v1864 = vmax.f32 %v1862, %v1863
        %v1865 = vrot.slane %v1864, 2
        %v1866 = vmax.f32 %v1864, %v1865
        %v1867 = vrot.slane %v1866, 1
        %v1868 = vmax.f32 %v1866, %v1867
        %v1885 = vsel %vm475, %v1742, %v1733
        %v1886 = vsel %vm477, %v1751, %v1885
        %v1887 = vsel %vm479, %v1760, %v1886
        %v1888 = vsel %vm481, %v1769, %v1887
        %v1889 = vsel %vm483, %v1778, %v1888
        %v1890 = vsel %vm485, %v1787, %v1889
        %v1891 = vsel %vm487, %v1796, %v1890
        %v1892 = vsel %vm475, %v1814, %v1805
        %v1893 = vsel %vm477, %v1823, %v1892
        %v1894 = vsel %vm479, %v1832, %v1893
        %v1895 = vsel %vm481, %v1841, %v1894
        %v1896 = vsel %vm483, %v1850, %v1895
        %v1897 = vsel %vm485, %v1859, %v1896
        %v1898 = vsel %vm487, %v1868, %v1897
        %s1901 = scalar_lea.vmem [#allocation2], 96
        %1902 = vst.msk [vmem:[%s1901] sm:$0xff] %vm314, %v1891
        %1903 = vst.msk [vmem:[%s1901 + $0x8] sm:$0xff] %vm314, %v1898
        %s1904 = smul.f32 %s213, 0.0
        %s1905 = sfloor.f32 %s1904
        %s1906 = scvt.f32.s32.to.zero.pseudo %s1905
        %s1907 = sadd.s32 %s1906, %s187
        %p1908 = scmp.gt.s32.totalorder %s1907, 0
        %s1909 = scalar_select %p1908, %s1907, 0
        %p1910 = scmp.lt.s32.totalorder %s1909, 16
        %s1911 = scalar_select %p1910, %s1909, 16
        %s1912 = sceil.f32 %s213
        %s1913 = scvt.f32.s32.to.zero.pseudo %s1912
        %s1914 = sadd.s32 %s1913, %s187
        %p1915 = scmp.gt.s32.totalorder %s1914, 0
        %s1916 = scalar_select %p1915, %s1914, 0
        %p1917 = scmp.lt.s32.totalorder %s1916, 16
        %s1918 = scalar_select %p1917, %s1916, 16
        %v1919 = vstv %s1911
        %vm1920 = vcmp.ge.s32.totalorder %v257, %v1919
        %vm1921 = vcmp.ge.s32.totalorder %v258, %v1919
        %v1922 = vstv %s1918
        %vm1923 = vcmp.lt.s32.totalorder %v257, %v1922
        %vm1924 = vcmp.lt.s32.totalorder %v258, %v1922
        %vm1925 = vmand %vm1920, %vm1923
        %vm1926 = vmand %vm1921, %vm1924
        %v1927 = vld [vmem:[#allocation2] sm:$0xff]
        %v1928 = vld [vmem:[#allocation2 + $0x8] sm:$0xff]
        %v1929 = vld [vmem:[#allocation2 + $0x10] sm:$0xff]
        %v1930 = vld [vmem:[#allocation2 + $0x18] sm:$0xff]
        %v1931 = vld [vmem:[#allocation2 + $0x20] sm:$0xff]
        %v1932 = vld [vmem:[#allocation2 + $0x28] sm:$0xff]
        %v1933 = vld [vmem:[#allocation2 + $0x30] sm:$0xff]
        %v1934 = vld [vmem:[#allocation2 + $0x38] sm:$0xff]
        %v1935 = vld [vmem:[#allocation2 + $0x40] sm:$0xff]
        %v1936 = vld [vmem:[#allocation2 + $0x48] sm:$0xff]
        %v1937 = vld [vmem:[#allocation2 + $0x50] sm:$0xff]
        %v1938 = vld [vmem:[#allocation2 + $0x58] sm:$0xff]
        %v1939 = vld [vmem:[#allocation2 + $0x60] sm:$0xff]
        %v1940 = vld [vmem:[#allocation2 + $0x68] sm:$0xff]
        %v1941 = vsel %vm1925, %v1927, -inf
        %v1942 = vsel %vm1926, %v1928, -inf
        %v1943 = vsel %vm1925, %v1929, -inf
        %v1944 = vsel %vm1926, %v1930, -inf
        %v1945 = vsel %vm1925, %v1931, -inf
        %v1946 = vsel %vm1926, %v1932, -inf
        %v1947 = vsel %vm1925, %v1933, -inf
        %v1948 = vsel %vm1926, %v1934, -inf
        %v1949 = vsel %vm1925, %v1935, -inf
        %v1950 = vsel %vm1926, %v1936, -inf
        %v1951 = vsel %vm1925, %v1937, -inf
        %v1952 = vsel %vm1926, %v1938, -inf
        %v1953 = vsel %vm1925, %v1939, -inf
        %v1954 = vsel %vm1926, %v1940, -inf
        %v1955 = vsel %vm314, %v1941, -inf
        %v1956 = vsel %vm314, %v1942, -inf
        %v1957 = vmax.f32 %v1955, %v1956
        %v1958 = vrot.slane %v1957, 4
        %v1959 = vmax.f32 %v1957, %v1958
        %v1960 = vrot.slane %v1959, 2
        %v1961 = vmax.f32 %v1959, %v1960
        %v1962 = vrot.slane %v1961, 1
        %v1963 = vmax.f32 %v1961, %v1962
        %v1964 = vsel %vm314, %v1943, -inf
        %v1965 = vsel %vm314, %v1944, -inf
        %v1966 = vmax.f32 %v1964, %v1965
        %v1967 = vrot.slane %v1966, 4
        %v1968 = vmax.f32 %v1966, %v1967
        %v1969 = vrot.slane %v1968, 2
        %v1970 = vmax.f32 %v1968, %v1969
        %v1971 = vrot.slane %v1970, 1
        %v1972 = vmax.f32 %v1970, %v1971
        %v1973 = vsel %vm314, %v1945, -inf
        %v1974 = vsel %vm314, %v1946, -inf
        %v1975 = vmax.f32 %v1973, %v1974
        %v1976 = vrot.slane %v1975, 4
        %v1977 = vmax.f32 %v1975, %v1976
        %v1978 = vrot.slane %v1977, 2
        %v1979 = vmax.f32 %v1977, %v1978
        %v1980 = vrot.slane %v1979, 1
        %v1981 = vmax.f32 %v1979, %v1980
        %v1982 = vsel %vm314, %v1947, -inf
        %v1983 = vsel %vm314, %v1948, -inf
        %v1984 = vmax.f32 %v1982, %v1983
        %v1985 = vrot.slane %v1984, 4
        %v1986 = vmax.f32 %v1984, %v1985
        %v1987 = vrot.slane %v1986, 2
        %v1988 = vmax.f32 %v1986, %v1987
        %v1989 = vrot.slane %v1988, 1
        %v1990 = vmax.f32 %v1988, %v1989
        %v1991 = vsel %vm314, %v1949, -inf
        %v1992 = vsel %vm314, %v1950, -inf
        %v1993 = vmax.f32 %v1991, %v1992
        %v1994 = vrot.slane %v1993, 4
        %v1995 = vmax.f32 %v1993, %v1994
        %v1996 = vrot.slane %v1995, 2
        %v1997 = vmax.f32 %v1995, %v1996
        %v1998 = vrot.slane %v1997, 1
        %v1999 = vmax.f32 %v1997, %v1998
        %v2000 = vsel %vm314, %v1951, -inf
        %v2001 = vsel %vm314, %v1952, -inf
        %v2002 = vmax.f32 %v2000, %v2001
        %v2003 = vrot.slane %v2002, 4
        %v2004 = vmax.f32 %v2002, %v2003
        %v2005 = vrot.slane %v2004, 2
        %v2006 = vmax.f32 %v2004, %v2005
        %v2007 = vrot.slane %v2006, 1
        %v2008 = vmax.f32 %v2006, %v2007
        %v2009 = vsel %vm314, %v1953, -inf
        %v2010 = vsel %vm314, %v1954, -inf
        %v2011 = vmax.f32 %v2009, %v2010
        %v2012 = vrot.slane %v2011, 4
        %v2013 = vmax.f32 %v2011, %v2012
        %v2014 = vrot.slane %v2013, 2
        %v2015 = vmax.f32 %v2013, %v2014
        %v2016 = vrot.slane %v2015, 1
        %v2017 = vmax.f32 %v2015, %v2016
        %vm2018 = vcmp.eq.f32.partialorder %v1963, -inf
        %vm2019 = vcmp.eq.f32.partialorder %v1972, -inf
        %vm2020 = vcmp.eq.f32.partialorder %v1981, -inf
        %vm2021 = vcmp.eq.f32.partialorder %v1990, -inf
        %vm2022 = vcmp.eq.f32.partialorder %v1999, -inf
        %vm2023 = vcmp.eq.f32.partialorder %v2008, -inf
        %vm2024 = vcmp.eq.f32.partialorder %v2017, -inf
        %v2025 = vsel %vm2018, 0.0, %v1963
        %v2026 = vsel %vm2019, 0.0, %v1972
        %v2027 = vsel %vm2020, 0.0, %v1981
        %v2028 = vsel %vm2021, 0.0, %v1990
        %v2029 = vsel %vm2022, 0.0, %v1999
        %v2030 = vsel %vm2023, 0.0, %v2008
        %v2031 = vsel %vm2024, 0.0, %v2017
        %v2039 = vsel %vm475, %v2026, %v2025
        %v2040 = vsel %vm477, %v2027, %v2039
        %v2041 = vsel %vm479, %v2028, %v2040
        %v2042 = vsel %vm481, %v2029, %v2041
        %v2043 = vsel %vm483, %v2030, %v2042
        %v2044 = vsel %vm485, %v2031, %v2043
        %vm2046 = vcmask 63488
        %2047 = vst.msk [vmem:[%s164] sm:$0x7f] %vm2046, %v2044
        %s2048 = sfloor.f32 %s213
        %s2049 = scvt.f32.s32.to.zero.pseudo %s2048
        %s2050 = sadd.s32 %s2049, %s187
        %p2051 = scmp.gt.s32.totalorder %s2050, 0
        %s2052 = scalar_select %p2051, %s2050, 0
        %p2053 = scmp.lt.s32.totalorder %s2052, 16
        %s2054 = scalar_select %p2053, %s2052, 16
        %s2055 = smul.f32 %s213, 2.0
        %s2056 = sceil.f32 %s2055
        %s2057 = scvt.f32.s32.to.zero.pseudo %s2056
        %s2058 = sadd.s32 %s2057, %s187
        %p2059 = scmp.gt.s32.totalorder %s2058, 0
        %s2060 = scalar_select %p2059, %s2058, 0
        %p2061 = scmp.lt.s32.totalorder %s2060, 16
        %s2062 = scalar_select %p2061, %s2060, 16
        %v2063 = vstv %s2054
        %vm2064 = vcmp.ge.s32.totalorder %v257, %v2063
        %vm2065 = vcmp.ge.s32.totalorder %v258, %v2063
        %v2066 = vstv %s2062
        %vm2067 = vcmp.lt.s32.totalorder %v257, %v2066
        %vm2068 = vcmp.lt.s32.totalorder %v258, %v2066
        %vm2069 = vmand %vm2064, %vm2067
        %vm2070 = vmand %vm2065, %vm2068
        %v2071 = vld [vmem:[#allocation2] sm:$0xff]
        %v2072 = vld [vmem:[#allocation2 + $0x8] sm:$0xff]
        %v2073 = vld [vmem:[#allocation2 + $0x10] sm:$0xff]
        %v2074 = vld [vmem:[#allocation2 + $0x18] sm:$0xff]
        %v2075 = vld [vmem:[#allocation2 + $0x20] sm:$0xff]
        %v2076 = vld [vmem:[#allocation2 + $0x28] sm:$0xff]
        %v2077 = vld [vmem:[#allocation2 + $0x30] sm:$0xff]
        %v2078 = vld [vmem:[#allocation2 + $0x38] sm:$0xff]
        %v2079 = vld [vmem:[#allocation2 + $0x40] sm:$0xff]
        %v2080 = vld [vmem:[#allocation2 + $0x48] sm:$0xff]
        %v2081 = vld [vmem:[#allocation2 + $0x50] sm:$0xff]
        %v2082 = vld [vmem:[#allocation2 + $0x58] sm:$0xff]
        %v2083 = vld [vmem:[#allocation2 + $0x60] sm:$0xff]
        %v2084 = vld [vmem:[#allocation2 + $0x68] sm:$0xff]
        %v2085 = vsel %vm2069, %v2071, -inf
        %v2086 = vsel %vm2070, %v2072, -inf
        %v2087 = vsel %vm2069, %v2073, -inf
        %v2088 = vsel %vm2070, %v2074, -inf
        %v2089 = vsel %vm2069, %v2075, -inf
        %v2090 = vsel %vm2070, %v2076, -inf
        %v2091 = vsel %vm2069, %v2077, -inf
        %v2092 = vsel %vm2070, %v2078, -inf
        %v2093 = vsel %vm2069, %v2079, -inf
        %v2094 = vsel %vm2070, %v2080, -inf
        %v2095 = vsel %vm2069, %v2081, -inf
        %v2096 = vsel %vm2070, %v2082, -inf
        %v2097 = vsel %vm2069, %v2083, -inf
        %v2098 = vsel %vm2070, %v2084, -inf
        %v2099 = vsel %vm314, %v2085, -inf
        %v2100 = vsel %vm314, %v2086, -inf
        %v2101 = vmax.f32 %v2099, %v2100
        %v2102 = vrot.slane %v2101, 4
        %v2103 = vmax.f32 %v2101, %v2102
        %v2104 = vrot.slane %v2103, 2
        %v2105 = vmax.f32 %v2103, %v2104
        %v2106 = vrot.slane %v2105, 1
        %v2107 = vmax.f32 %v2105, %v2106
        %v2108 = vsel %vm314, %v2087, -inf
        %v2109 = vsel %vm314, %v2088, -inf
        %v2110 = vmax.f32 %v2108, %v2109
        %v2111 = vrot.slane %v2110, 4
        %v2112 = vmax.f32 %v2110, %v2111
        %v2113 = vrot.slane %v2112, 2
        %v2114 = vmax.f32 %v2112, %v2113
        %v2115 = vrot.slane %v2114, 1
        %v2116 = vmax.f32 %v2114, %v2115
        %v2117 = vsel %vm314, %v2089, -inf
        %v2118 = vsel %vm314, %v2090, -inf
        %v2119 = vmax.f32 %v2117, %v2118
        %v2120 = vrot.slane %v2119, 4
        %v2121 = vmax.f32 %v2119, %v2120
        %v2122 = vrot.slane %v2121, 2
        %v2123 = vmax.f32 %v2121, %v2122
        %v2124 = vrot.slane %v2123, 1
        %v2125 = vmax.f32 %v2123, %v2124
        %v2126 = vsel %vm314, %v2091, -inf
        %v2127 = vsel %vm314, %v2092, -inf
        %v2128 = vmax.f32 %v2126, %v2127
        %v2129 = vrot.slane %v2128, 4
        %v2130 = vmax.f32 %v2128, %v2129
        %v2131 = vrot.slane %v2130, 2
        %v2132 = vmax.f32 %v2130, %v2131
        %v2133 = vrot.slane %v2132, 1
        %v2134 = vmax.f32 %v2132, %v2133
        %v2135 = vsel %vm314, %v2093, -inf
        %v2136 = vsel %vm314, %v2094, -inf
        %v2137 = vmax.f32 %v2135, %v2136
        %v2138 = vrot.slane %v2137, 4
        %v2139 = vmax.f32 %v2137, %v2138
        %v2140 = vrot.slane %v2139, 2
        %v2141 = vmax.f32 %v2139, %v2140
        %v2142 = vrot.slane %v2141, 1
        %v2143 = vmax.f32 %v2141, %v2142
        %v2144 = vsel %vm314, %v2095, -inf
        %v2145 = vsel %vm314, %v2096, -inf
        %v2146 = vmax.f32 %v2144, %v2145
        %v2147 = vrot.slane %v2146, 4
        %v2148 = vmax.f32 %v2146, %v2147
        %v2149 = vrot.slane %v2148, 2
        %v2150 = vmax.f32 %v2148, %v2149
        %v2151 = vrot.slane %v2150, 1
        %v2152 = vmax.f32 %v2150, %v2151
        %v2153 = vsel %vm314, %v2097, -inf
        %v2154 = vsel %vm314, %v2098, -inf
        %v2155 = vmax.f32 %v2153, %v2154
        %v2156 = vrot.slane %v2155, 4
        %v2157 = vmax.f32 %v2155, %v2156
        %v2158 = vrot.slane %v2157, 2
        %v2159 = vmax.f32 %v2157, %v2158
        %v2160 = vrot.slane %v2159, 1
        %v2161 = vmax.f32 %v2159, %v2160
        %vm2162 = vcmp.eq.f32.partialorder %v2107, -inf
        %vm2163 = vcmp.eq.f32.partialorder %v2116, -inf
        %vm2164 = vcmp.eq.f32.partialorder %v2125, -inf
        %vm2165 = vcmp.eq.f32.partialorder %v2134, -inf
        %vm2166 = vcmp.eq.f32.partialorder %v2143, -inf
        %vm2167 = vcmp.eq.f32.partialorder %v2152, -inf
        %vm2168 = vcmp.eq.f32.partialorder %v2161, -inf
        %v2169 = vsel %vm2162, 0.0, %v2107
        %v2170 = vsel %vm2163, 0.0, %v2116
        %v2171 = vsel %vm2164, 0.0, %v2125
        %v2172 = vsel %vm2165, 0.0, %v2134
        %v2173 = vsel %vm2166, 0.0, %v2143
        %v2174 = vsel %vm2167, 0.0, %v2152
        %v2175 = vsel %vm2168, 0.0, %v2161
        %v2183 = vsel %vm475, %v2170, %v2169
        %v2184 = vsel %vm477, %v2171, %v2183
        %v2185 = vsel %vm479, %v2172, %v2184
        %v2186 = vsel %vm481, %v2173, %v2185
        %v2187 = vsel %vm483, %v2174, %v2186
        %v2188 = vsel %vm485, %v2175, %v2187
        %s2190 = scalar_lea.vmem %s164, 8 [#allocation8]
        %2191 = vst.msk [vmem:[%s2190] sm:$0x7f] %vm2046, %v2188
        %s2192 = sfloor.f32 %s2055
        %s2193 = scvt.f32.s32.to.zero.pseudo %s2192
        %s2194 = sadd.s32 %s2193, %s187
        %p2195 = scmp.gt.s32.totalorder %s2194, 0
        %s2196 = scalar_select %p2195, %s2194, 0
        %p2197 = scmp.lt.s32.totalorder %s2196, 16
        %s2198 = scalar_select %p2197, %s2196, 16
        %s2199 = smul.f32 %s213, 3.0
        %s2200 = sceil.f32 %s2199
        %s2201 = scvt.f32.s32.to.zero.pseudo %s2200
        %s2202 = sadd.s32 %s2201, %s187
        %p2203 = scmp.gt.s32.totalorder %s2202, 0
        %s2204 = scalar_select %p2203, %s2202, 0
        %p2205 = scmp.lt.s32.totalorder %s2204, 16
        %s2206 = scalar_select %p2205, %s2204, 16
        %v2207 = vstv %s2198
        %vm2208 = vcmp.ge.s32.totalorder %v257, %v2207
        %vm2209 = vcmp.ge.s32.totalorder %v258, %v2207
        %v2210 = vstv %s2206
        %vm2211 = vcmp.lt.s32.totalorder %v257, %v2210
        %vm2212 = vcmp.lt.s32.totalorder %v258, %v2210
        %vm2213 = vmand %vm2208, %vm2211
        %vm2214 = vmand %vm2209, %vm2212
        %v2215 = vld [vmem:[#allocation2] sm:$0xff]
        %v2216 = vld [vmem:[#allocation2 + $0x8] sm:$0xff]
        %v2217 = vld [vmem:[#allocation2 + $0x10] sm:$0xff]
        %v2218 = vld [vmem:[#allocation2 + $0x18] sm:$0xff]
        %v2219 = vld [vmem:[#allocation2 + $0x20] sm:$0xff]
        %v2220 = vld [vmem:[#allocation2 + $0x28] sm:$0xff]
        %v2221 = vld [vmem:[#allocation2 + $0x30] sm:$0xff]
        %v2222 = vld [vmem:[#allocation2 + $0x38] sm:$0xff]
        %v2223 = vld [vmem:[#allocation2 + $0x40] sm:$0xff]
        %v2224 = vld [vmem:[#allocation2 + $0x48] sm:$0xff]
        %v2225 = vld [vmem:[#allocation2 + $0x50] sm:$0xff]
        %v2226 = vld [vmem:[#allocation2 + $0x58] sm:$0xff]
        %v2227 = vld [vmem:[#allocation2 + $0x60] sm:$0xff]
        %v2228 = vld [vmem:[#allocation2 + $0x68] sm:$0xff]
        %v2229 = vsel %vm2213, %v2215, -inf
        %v2230 = vsel %vm2214, %v2216, -inf
        %v2231 = vsel %vm2213, %v2217, -inf
        %v2232 = vsel %vm2214, %v2218, -inf
        %v2233 = vsel %vm2213, %v2219, -inf
        %v2234 = vsel %vm2214, %v2220, -inf
        %v2235 = vsel %vm2213, %v2221, -inf
        %v2236 = vsel %vm2214, %v2222, -inf
        %v2237 = vsel %vm2213, %v2223, -inf
        %v2238 = vsel %vm2214, %v2224, -inf
        %v2239 = vsel %vm2213, %v2225, -inf
        %v2240 = vsel %vm2214, %v2226, -inf
        %v2241 = vsel %vm2213, %v2227, -inf
        %v2242 = vsel %vm2214, %v2228, -inf
        %v2243 = vsel %vm314, %v2229, -inf
        %v2244 = vsel %vm314, %v2230, -inf
        %v2245 = vmax.f32 %v2243, %v2244
        %v2246 = vrot.slane %v2245, 4
        %v2247 = vmax.f32 %v2245, %v2246
        %v2248 = vrot.slane %v2247, 2
        %v2249 = vmax.f32 %v2247, %v2248
        %v2250 = vrot.slane %v2249, 1
        %v2251 = vmax.f32 %v2249, %v2250
        %v2252 = vsel %vm314, %v2231, -inf
        %v2253 = vsel %vm314, %v2232, -inf
        %v2254 = vmax.f32 %v2252, %v2253
        %v2255 = vrot.slane %v2254, 4
        %v2256 = vmax.f32 %v2254, %v2255
        %v2257 = vrot.slane %v2256, 2
        %v2258 = vmax.f32 %v2256, %v2257
        %v2259 = vrot.slane %v2258, 1
        %v2260 = vmax.f32 %v2258, %v2259
        %v2261 = vsel %vm314, %v2233, -inf
        %v2262 = vsel %vm314, %v2234, -inf
        %v2263 = vmax.f32 %v2261, %v2262
        %v2264 = vrot.slane %v2263, 4
        %v2265 = vmax.f32 %v2263, %v2264
        %v2266 = vrot.slane %v2265, 2
        %v2267 = vmax.f32 %v2265, %v2266
        %v2268 = vrot.slane %v2267, 1
        %v2269 = vmax.f32 %v2267, %v2268
        %v2270 = vsel %vm314, %v2235, -inf
        %v2271 = vsel %vm314, %v2236, -inf
        %v2272 = vmax.f32 %v2270, %v2271
        %v2273 = vrot.slane %v2272, 4
        %v2274 = vmax.f32 %v2272, %v2273
        %v2275 = vrot.slane %v2274, 2
        %v2276 = vmax.f32 %v2274, %v2275
        %v2277 = vrot.slane %v2276, 1
        %v2278 = vmax.f32 %v2276, %v2277
        %v2279 = vsel %vm314, %v2237, -inf
        %v2280 = vsel %vm314, %v2238, -inf
        %v2281 = vmax.f32 %v2279, %v2280
        %v2282 = vrot.slane %v2281, 4
        %v2283 = vmax.f32 %v2281, %v2282
        %v2284 = vrot.slane %v2283, 2
        %v2285 = vmax.f32 %v2283, %v2284
        %v2286 = vrot.slane %v2285, 1
        %v2287 = vmax.f32 %v2285, %v2286
        %v2288 = vsel %vm314, %v2239, -inf
        %v2289 = vsel %vm314, %v2240, -inf
        %v2290 = vmax.f32 %v2288, %v2289
        %v2291 = vrot.slane %v2290, 4
        %v2292 = vmax.f32 %v2290, %v2291
        %v2293 = vrot.slane %v2292, 2
        %v2294 = vmax.f32 %v2292, %v2293
        %v2295 = vrot.slane %v2294, 1
        %v2296 = vmax.f32 %v2294, %v2295
        %v2297 = vsel %vm314, %v2241, -inf
        %v2298 = vsel %vm314, %v2242, -inf
        %v2299 = vmax.f32 %v2297, %v2298
        %v2300 = vrot.slane %v2299, 4
        %v2301 = vmax.f32 %v2299, %v2300
        %v2302 = vrot.slane %v2301, 2
        %v2303 = vmax.f32 %v2301, %v2302
        %v2304 = vrot.slane %v2303, 1
        %v2305 = vmax.f32 %v2303, %v2304
        %vm2306 = vcmp.eq.f32.partialorder %v2251, -inf
        %vm2307 = vcmp.eq.f32.partialorder %v2260, -inf
        %vm2308 = vcmp.eq.f32.partialorder %v2269, -inf
        %vm2309 = vcmp.eq.f32.partialorder %v2278, -inf
        %vm2310 = vcmp.eq.f32.partialorder %v2287, -inf
        %vm2311 = vcmp.eq.f32.partialorder %v2296, -inf
        %vm2312 = vcmp.eq.f32.partialorder %v2305, -inf
        %v2313 = vsel %vm2306, 0.0, %v2251
        %v2314 = vsel %vm2307, 0.0, %v2260
        %v2315 = vsel %vm2308, 0.0, %v2269
        %v2316 = vsel %vm2309, 0.0, %v2278
        %v2317 = vsel %vm2310, 0.0, %v2287
        %v2318 = vsel %vm2311, 0.0, %v2296
        %v2319 = vsel %vm2312, 0.0, %v2305
        %v2327 = vsel %vm475, %v2314, %v2313
        %v2328 = vsel %vm477, %v2315, %v2327
        %v2329 = vsel %vm479, %v2316, %v2328
        %v2330 = vsel %vm481, %v2317, %v2329
        %v2331 = vsel %vm483, %v2318, %v2330
        %v2332 = vsel %vm485, %v2319, %v2331
        %s2334 = scalar_lea.vmem %s164, 16 [#allocation8]
        %2335 = vst.msk [vmem:[%s2334] sm:$0x7f] %vm2046, %v2332
        %s2336 = sfloor.f32 %s2199
        %s2337 = scvt.f32.s32.to.zero.pseudo %s2336
        %s2338 = sadd.s32 %s2337, %s187
        %p2339 = scmp.gt.s32.totalorder %s2338, 0
        %s2340 = scalar_select %p2339, %s2338, 0
        %p2341 = scmp.lt.s32.totalorder %s2340, 16
        %s2342 = scalar_select %p2341, %s2340, 16
        %s2343 = smul.f32 %s213, 4.0
        %s2344 = sceil.f32 %s2343
        %s2345 = scvt.f32.s32.to.zero.pseudo %s2344
        %s2346 = sadd.s32 %s2345, %s187
        %p2347 = scmp.gt.s32.totalorder %s2346, 0
        %s2348 = scalar_select %p2347, %s2346, 0
        %p2349 = scmp.lt.s32.totalorder %s2348, 16
        %s2350 = scalar_select %p2349, %s2348, 16
        %v2351 = vstv %s2342
        %vm2352 = vcmp.ge.s32.totalorder %v257, %v2351
        %vm2353 = vcmp.ge.s32.totalorder %v258, %v2351
        %v2354 = vstv %s2350
        %vm2355 = vcmp.lt.s32.totalorder %v257, %v2354
        %vm2356 = vcmp.lt.s32.totalorder %v258, %v2354
        %vm2357 = vmand %vm2352, %vm2355
        %vm2358 = vmand %vm2353, %vm2356
        %v2359 = vld [vmem:[#allocation2] sm:$0xff]
        %v2360 = vld [vmem:[#allocation2 + $0x8] sm:$0xff]
        %v2361 = vld [vmem:[#allocation2 + $0x10] sm:$0xff]
        %v2362 = vld [vmem:[#allocation2 + $0x18] sm:$0xff]
        %v2363 = vld [vmem:[#allocation2 + $0x20] sm:$0xff]
        %v2364 = vld [vmem:[#allocation2 + $0x28] sm:$0xff]
        %v2365 = vld [vmem:[#allocation2 + $0x30] sm:$0xff]
        %v2366 = vld [vmem:[#allocation2 + $0x38] sm:$0xff]
        %v2367 = vld [vmem:[#allocation2 + $0x40] sm:$0xff]
        %v2368 = vld [vmem:[#allocation2 + $0x48] sm:$0xff]
        %v2369 = vld [vmem:[#allocation2 + $0x50] sm:$0xff]
        %v2370 = vld [vmem:[#allocation2 + $0x58] sm:$0xff]
        %v2371 = vld [vmem:[#allocation2 + $0x60] sm:$0xff]
        %v2372 = vld [vmem:[#allocation2 + $0x68] sm:$0xff]
        %v2373 = vsel %vm2357, %v2359, -inf
        %v2374 = vsel %vm2358, %v2360, -inf
        %v2375 = vsel %vm2357, %v2361, -inf
        %v2376 = vsel %vm2358, %v2362, -inf
        %v2377 = vsel %vm2357, %v2363, -inf
        %v2378 = vsel %vm2358, %v2364, -inf
        %v2379 = vsel %vm2357, %v2365, -inf
        %v2380 = vsel %vm2358, %v2366, -inf
        %v2381 = vsel %vm2357, %v2367, -inf
        %v2382 = vsel %vm2358, %v2368, -inf
        %v2383 = vsel %vm2357, %v2369, -inf
        %v2384 = vsel %vm2358, %v2370, -inf
        %v2385 = vsel %vm2357, %v2371, -inf
        %v2386 = vsel %vm2358, %v2372, -inf
        %v2387 = vsel %vm314, %v2373, -inf
        %v2388 = vsel %vm314, %v2374, -inf
        %v2389 = vmax.f32 %v2387, %v2388
        %v2390 = vrot.slane %v2389, 4
        %v2391 = vmax.f32 %v2389, %v2390
        %v2392 = vrot.slane %v2391, 2
        %v2393 = vmax.f32 %v2391, %v2392
        %v2394 = vrot.slane %v2393, 1
        %v2395 = vmax.f32 %v2393, %v2394
        %v2396 = vsel %vm314, %v2375, -inf
        %v2397 = vsel %vm314, %v2376, -inf
        %v2398 = vmax.f32 %v2396, %v2397
        %v2399 = vrot.slane %v2398, 4
        %v2400 = vmax.f32 %v2398, %v2399
        %v2401 = vrot.slane %v2400, 2
        %v2402 = vmax.f32 %v2400, %v2401
        %v2403 = vrot.slane %v2402, 1
        %v2404 = vmax.f32 %v2402, %v2403
        %v2405 = vsel %vm314, %v2377, -inf
        %v2406 = vsel %vm314, %v2378, -inf
        %v2407 = vmax.f32 %v2405, %v2406
        %v2408 = vrot.slane %v2407, 4
        %v2409 = vmax.f32 %v2407, %v2408
        %v2410 = vrot.slane %v2409, 2
        %v2411 = vmax.f32 %v2409, %v2410
        %v2412 = vrot.slane %v2411, 1
        %v2413 = vmax.f32 %v2411, %v2412
        %v2414 = vsel %vm314, %v2379, -inf
        %v2415 = vsel %vm314, %v2380, -inf
        %v2416 = vmax.f32 %v2414, %v2415
        %v2417 = vrot.slane %v2416, 4
        %v2418 = vmax.f32 %v2416, %v2417
        %v2419 = vrot.slane %v2418, 2
        %v2420 = vmax.f32 %v2418, %v2419
        %v2421 = vrot.slane %v2420, 1
        %v2422 = vmax.f32 %v2420, %v2421
        %v2423 = vsel %vm314, %v2381, -inf
        %v2424 = vsel %vm314, %v2382, -inf
        %v2425 = vmax.f32 %v2423, %v2424
        %v2426 = vrot.slane %v2425, 4
        %v2427 = vmax.f32 %v2425, %v2426
        %v2428 = vrot.slane %v2427, 2
        %v2429 = vmax.f32 %v2427, %v2428
        %v2430 = vrot.slane %v2429, 1
        %v2431 = vmax.f32 %v2429, %v2430
        %v2432 = vsel %vm314, %v2383, -inf
        %v2433 = vsel %vm314, %v2384, -inf
        %v2434 = vmax.f32 %v2432, %v2433
        %v2435 = vrot.slane %v2434, 4
        %v2436 = vmax.f32 %v2434, %v2435
        %v2437 = vrot.slane %v2436, 2
        %v2438 = vmax.f32 %v2436, %v2437
        %v2439 = vrot.slane %v2438, 1
        %v2440 = vmax.f32 %v2438, %v2439
        %v2441 = vsel %vm314, %v2385, -inf
        %v2442 = vsel %vm314, %v2386, -inf
        %v2443 = vmax.f32 %v2441, %v2442
        %v2444 = vrot.slane %v2443, 4
        %v2445 = vmax.f32 %v2443, %v2444
        %v2446 = vrot.slane %v2445, 2
        %v2447 = vmax.f32 %v2445, %v2446
        %v2448 = vrot.slane %v2447, 1
        %v2449 = vmax.f32 %v2447, %v2448
        %vm2450 = vcmp.eq.f32.partialorder %v2395, -inf
        %vm2451 = vcmp.eq.f32.partialorder %v2404, -inf
        %vm2452 = vcmp.eq.f32.partialorder %v2413, -inf
        %vm2453 = vcmp.eq.f32.partialorder %v2422, -inf
        %vm2454 = vcmp.eq.f32.partialorder %v2431, -inf
        %vm2455 = vcmp.eq.f32.partialorder %v2440, -inf
        %vm2456 = vcmp.eq.f32.partialorder %v2449, -inf
        %v2457 = vsel %vm2450, 0.0, %v2395
        %v2458 = vsel %vm2451, 0.0, %v2404
        %v2459 = vsel %vm2452, 0.0, %v2413
        %v2460 = vsel %vm2453, 0.0, %v2422
        %v2461 = vsel %vm2454, 0.0, %v2431
        %v2462 = vsel %vm2455, 0.0, %v2440
        %v2463 = vsel %vm2456, 0.0, %v2449
        %v2471 = vsel %vm475, %v2458, %v2457
        %v2472 = vsel %vm477, %v2459, %v2471
        %v2473 = vsel %vm479, %v2460, %v2472
        %v2474 = vsel %vm481, %v2461, %v2473
        %v2475 = vsel %vm483, %v2462, %v2474
        %v2476 = vsel %vm485, %v2463, %v2475
        %s2478 = scalar_lea.vmem %s164, 24 [#allocation8]
        %2479 = vst.msk [vmem:[%s2478] sm:$0x7f] %vm2046, %v2476
        %s2480 = sfloor.f32 %s2343
        %s2481 = scvt.f32.s32.to.zero.pseudo %s2480
        %s2482 = sadd.s32 %s2481, %s187
        %p2483 = scmp.gt.s32.totalorder %s2482, 0
        %s2484 = scalar_select %p2483, %s2482, 0
        %p2485 = scmp.lt.s32.totalorder %s2484, 16
        %s2486 = scalar_select %p2485, %s2484, 16
        %s2487 = smul.f32 %s213, 5.0
        %s2488 = sceil.f32 %s2487
        %s2489 = scvt.f32.s32.to.zero.pseudo %s2488
        %s2490 = sadd.s32 %s2489, %s187
        %p2491 = scmp.gt.s32.totalorder %s2490, 0
        %s2492 = scalar_select %p2491, %s2490, 0
        %p2493 = scmp.lt.s32.totalorder %s2492, 16
        %s2494 = scalar_select %p2493, %s2492, 16
        %v2495 = vstv %s2486
        %vm2496 = vcmp.ge.s32.totalorder %v257, %v2495
        %vm2497 = vcmp.ge.s32.totalorder %v258, %v2495
        %v2498 = vstv %s2494
        %vm2499 = vcmp.lt.s32.totalorder %v257, %v2498
        %vm2500 = vcmp.lt.s32.totalorder %v258, %v2498
        %vm2501 = vmand %vm2496, %vm2499
        %vm2502 = vmand %vm2497, %vm2500
        %v2503 = vld [vmem:[#allocation2] sm:$0xff]
        %v2504 = vld [vmem:[#allocation2 + $0x8] sm:$0xff]
        %v2505 = vld [vmem:[#allocation2 + $0x10] sm:$0xff]
        %v2506 = vld [vmem:[#allocation2 + $0x18] sm:$0xff]
        %v2507 = vld [vmem:[#allocation2 + $0x20] sm:$0xff]
        %v2508 = vld [vmem:[#allocation2 + $0x28] sm:$0xff]
        %v2509 = vld [vmem:[#allocation2 + $0x30] sm:$0xff]
        %v2510 = vld [vmem:[#allocation2 + $0x38] sm:$0xff]
        %v2511 = vld [vmem:[#allocation2 + $0x40] sm:$0xff]
        %v2512 = vld [vmem:[#allocation2 + $0x48] sm:$0xff]
        %v2513 = vld [vmem:[#allocation2 + $0x50] sm:$0xff]
        %v2514 = vld [vmem:[#allocation2 + $0x58] sm:$0xff]
        %v2515 = vld [vmem:[#allocation2 + $0x60] sm:$0xff]
        %v2516 = vld [vmem:[#allocation2 + $0x68] sm:$0xff]
        %v2517 = vsel %vm2501, %v2503, -inf
        %v2518 = vsel %vm2502, %v2504, -inf
        %v2519 = vsel %vm2501, %v2505, -inf
        %v2520 = vsel %vm2502, %v2506, -inf
        %v2521 = vsel %vm2501, %v2507, -inf
        %v2522 = vsel %vm2502, %v2508, -inf
        %v2523 = vsel %vm2501, %v2509, -inf
        %v2524 = vsel %vm2502, %v2510, -inf
        %v2525 = vsel %vm2501, %v2511, -inf
        %v2526 = vsel %vm2502, %v2512, -inf
        %v2527 = vsel %vm2501, %v2513, -inf
        %v2528 = vsel %vm2502, %v2514, -inf
        %v2529 = vsel %vm2501, %v2515, -inf
        %v2530 = vsel %vm2502, %v2516, -inf
        %v2531 = vsel %vm314, %v2517, -inf
        %v2532 = vsel %vm314, %v2518, -inf
        %v2533 = vmax.f32 %v2531, %v2532
        %v2534 = vrot.slane %v2533, 4
        %v2535 = vmax.f32 %v2533, %v2534
        %v2536 = vrot.slane %v2535, 2
        %v2537 = vmax.f32 %v2535, %v2536
        %v2538 = vrot.slane %v2537, 1
        %v2539 = vmax.f32 %v2537, %v2538
        %v2540 = vsel %vm314, %v2519, -inf
        %v2541 = vsel %vm314, %v2520, -inf
        %v2542 = vmax.f32 %v2540, %v2541
        %v2543 = vrot.slane %v2542, 4
        %v2544 = vmax.f32 %v2542, %v2543
        %v2545 = vrot.slane %v2544, 2
        %v2546 = vmax.f32 %v2544, %v2545
        %v2547 = vrot.slane %v2546, 1
        %v2548 = vmax.f32 %v2546, %v2547
        %v2549 = vsel %vm314, %v2521, -inf
        %v2550 = vsel %vm314, %v2522, -inf
        %v2551 = vmax.f32 %v2549, %v2550
        %v2552 = vrot.slane %v2551, 4
        %v2553 = vmax.f32 %v2551, %v2552
        %v2554 = vrot.slane %v2553, 2
        %v2555 = vmax.f32 %v2553, %v2554
        %v2556 = vrot.slane %v2555, 1
        %v2557 = vmax.f32 %v2555, %v2556
        %v2558 = vsel %vm314, %v2523, -inf
        %v2559 = vsel %vm314, %v2524, -inf
        %v2560 = vmax.f32 %v2558, %v2559
        %v2561 = vrot.slane %v2560, 4
        %v2562 = vmax.f32 %v2560, %v2561
        %v2563 = vrot.slane %v2562, 2
        %v2564 = vmax.f32 %v2562, %v2563
        %v2565 = vrot.slane %v2564, 1
        %v2566 = vmax.f32 %v2564, %v2565
        %v2567 = vsel %vm314, %v2525, -inf
        %v2568 = vsel %vm314, %v2526, -inf
        %v2569 = vmax.f32 %v2567, %v2568
        %v2570 = vrot.slane %v2569, 4
        %v2571 = vmax.f32 %v2569, %v2570
        %v2572 = vrot.slane %v2571, 2
        %v2573 = vmax.f32 %v2571, %v2572
        %v2574 = vrot.slane %v2573, 1
        %v2575 = vmax.f32 %v2573, %v2574
        %v2576 = vsel %vm314, %v2527, -inf
        %v2577 = vsel %vm314, %v2528, -inf
        %v2578 = vmax.f32 %v2576, %v2577
        %v2579 = vrot.slane %v2578, 4
        %v2580 = vmax.f32 %v2578, %v2579
        %v2581 = vrot.slane %v2580, 2
        %v2582 = vmax.f32 %v2580, %v2581
        %v2583 = vrot.slane %v2582, 1
        %v2584 = vmax.f32 %v2582, %v2583
        %v2585 = vsel %vm314, %v2529, -inf
        %v2586 = vsel %vm314, %v2530, -inf
        %v2587 = vmax.f32 %v2585, %v2586
        %v2588 = vrot.slane %v2587, 4
        %v2589 = vmax.f32 %v2587, %v2588
        %v2590 = vrot.slane %v2589, 2
        %v2591 = vmax.f32 %v2589, %v2590
        %v2592 = vrot.slane %v2591, 1
        %v2593 = vmax.f32 %v2591, %v2592
        %vm2594 = vcmp.eq.f32.partialorder %v2539, -inf
        %vm2595 = vcmp.eq.f32.partialorder %v2548, -inf
        %vm2596 = vcmp.eq.f32.partialorder %v2557, -inf
        %vm2597 = vcmp.eq.f32.partialorder %v2566, -inf
        %vm2598 = vcmp.eq.f32.partialorder %v2575, -inf
        %vm2599 = vcmp.eq.f32.partialorder %v2584, -inf
        %vm2600 = vcmp.eq.f32.partialorder %v2593, -inf
        %v2601 = vsel %vm2594, 0.0, %v2539
        %v2602 = vsel %vm2595, 0.0, %v2548
        %v2603 = vsel %vm2596, 0.0, %v2557
        %v2604 = vsel %vm2597, 0.0, %v2566
        %v2605 = vsel %vm2598, 0.0, %v2575
        %v2606 = vsel %vm2599, 0.0, %v2584
        %v2607 = vsel %vm2600, 0.0, %v2593
        %v2615 = vsel %vm475, %v2602, %v2601
        %v2616 = vsel %vm477, %v2603, %v2615
        %v2617 = vsel %vm479, %v2604, %v2616
        %v2618 = vsel %vm481, %v2605, %v2617
        %v2619 = vsel %vm483, %v2606, %v2618
        %v2620 = vsel %vm485, %v2607, %v2619
        %s2622 = scalar_lea.vmem %s164, 32 [#allocation8]
        %2623 = vst.msk [vmem:[%s2622] sm:$0x7f] %vm2046, %v2620
        %s2624 = sfloor.f32 %s2487
        %s2625 = scvt.f32.s32.to.zero.pseudo %s2624
        %s2626 = sadd.s32 %s2625, %s187
        %p2627 = scmp.gt.s32.totalorder %s2626, 0
        %s2628 = scalar_select %p2627, %s2626, 0
        %p2629 = scmp.lt.s32.totalorder %s2628, 16
        %s2630 = scalar_select %p2629, %s2628, 16
        %s2631 = smul.f32 %s213, 6.0
        %s2632 = sceil.f32 %s2631
        %s2633 = scvt.f32.s32.to.zero.pseudo %s2632
        %s2634 = sadd.s32 %s2633, %s187
        %p2635 = scmp.gt.s32.totalorder %s2634, 0
        %s2636 = scalar_select %p2635, %s2634, 0
        %p2637 = scmp.lt.s32.totalorder %s2636, 16
        %s2638 = scalar_select %p2637, %s2636, 16
        %v2639 = vstv %s2630
        %vm2640 = vcmp.ge.s32.totalorder %v257, %v2639
        %vm2641 = vcmp.ge.s32.totalorder %v258, %v2639
        %v2642 = vstv %s2638
        %vm2643 = vcmp.lt.s32.totalorder %v257, %v2642
        %vm2644 = vcmp.lt.s32.totalorder %v258, %v2642
        %vm2645 = vmand %vm2640, %vm2643
        %vm2646 = vmand %vm2641, %vm2644
        %v2647 = vld [vmem:[#allocation2] sm:$0xff]
        %v2648 = vld [vmem:[#allocation2 + $0x8] sm:$0xff]
        %v2649 = vld [vmem:[#allocation2 + $0x10] sm:$0xff]
        %v2650 = vld [vmem:[#allocation2 + $0x18] sm:$0xff]
        %v2651 = vld [vmem:[#allocation2 + $0x20] sm:$0xff]
        %v2652 = vld [vmem:[#allocation2 + $0x28] sm:$0xff]
        %v2653 = vld [vmem:[#allocation2 + $0x30] sm:$0xff]
        %v2654 = vld [vmem:[#allocation2 + $0x38] sm:$0xff]
        %v2655 = vld [vmem:[#allocation2 + $0x40] sm:$0xff]
        %v2656 = vld [vmem:[#allocation2 + $0x48] sm:$0xff]
        %v2657 = vld [vmem:[#allocation2 + $0x50] sm:$0xff]
        %v2658 = vld [vmem:[#allocation2 + $0x58] sm:$0xff]
        %v2659 = vld [vmem:[#allocation2 + $0x60] sm:$0xff]
        %v2660 = vld [vmem:[#allocation2 + $0x68] sm:$0xff]
        %v2661 = vsel %vm2645, %v2647, -inf
        %v2662 = vsel %vm2646, %v2648, -inf
        %v2663 = vsel %vm2645, %v2649, -inf
        %v2664 = vsel %vm2646, %v2650, -inf
        %v2665 = vsel %vm2645, %v2651, -inf
        %v2666 = vsel %vm2646, %v2652, -inf
        %v2667 = vsel %vm2645, %v2653, -inf
        %v2668 = vsel %vm2646, %v2654, -inf
        %v2669 = vsel %vm2645, %v2655, -inf
        %v2670 = vsel %vm2646, %v2656, -inf
        %v2671 = vsel %vm2645, %v2657, -inf
        %v2672 = vsel %vm2646, %v2658, -inf
        %v2673 = vsel %vm2645, %v2659, -inf
        %v2674 = vsel %vm2646, %v2660, -inf
        %v2675 = vsel %vm314, %v2661, -inf
        %v2676 = vsel %vm314, %v2662, -inf
        %v2677 = vmax.f32 %v2675, %v2676
        %v2678 = vrot.slane %v2677, 4
        %v2679 = vmax.f32 %v2677, %v2678
        %v2680 = vrot.slane %v2679, 2
        %v2681 = vmax.f32 %v2679, %v2680
        %v2682 = vrot.slane %v2681, 1
        %v2683 = vmax.f32 %v2681, %v2682
        %v2684 = vsel %vm314, %v2663, -inf
        %v2685 = vsel %vm314, %v2664, -inf
        %v2686 = vmax.f32 %v2684, %v2685
        %v2687 = vrot.slane %v2686, 4
        %v2688 = vmax.f32 %v2686, %v2687
        %v2689 = vrot.slane %v2688, 2
        %v2690 = vmax.f32 %v2688, %v2689
        %v2691 = vrot.slane %v2690, 1
        %v2692 = vmax.f32 %v2690, %v2691
        %v2693 = vsel %vm314, %v2665, -inf
        %v2694 = vsel %vm314, %v2666, -inf
        %v2695 = vmax.f32 %v2693, %v2694
        %v2696 = vrot.slane %v2695, 4
        %v2697 = vmax.f32 %v2695, %v2696
        %v2698 = vrot.slane %v2697, 2
        %v2699 = vmax.f32 %v2697, %v2698
        %v2700 = vrot.slane %v2699, 1
        %v2701 = vmax.f32 %v2699, %v2700
        %v2702 = vsel %vm314, %v2667, -inf
        %v2703 = vsel %vm314, %v2668, -inf
        %v2704 = vmax.f32 %v2702, %v2703
        %v2705 = vrot.slane %v2704, 4
        %v2706 = vmax.f32 %v2704, %v2705
        %v2707 = vrot.slane %v2706, 2
        %v2708 = vmax.f32 %v2706, %v2707
        %v2709 = vrot.slane %v2708, 1
        %v2710 = vmax.f32 %v2708, %v2709
        %v2711 = vsel %vm314, %v2669, -inf
        %v2712 = vsel %vm314, %v2670, -inf
        %v2713 = vmax.f32 %v2711, %v2712
        %v2714 = vrot.slane %v2713, 4
        %v2715 = vmax.f32 %v2713, %v2714
        %v2716 = vrot.slane %v2715, 2
        %v2717 = vmax.f32 %v2715, %v2716
        %v2718 = vrot.slane %v2717, 1
        %v2719 = vmax.f32 %v2717, %v2718
        %v2720 = vsel %vm314, %v2671, -inf
        %v2721 = vsel %vm314, %v2672, -inf
        %v2722 = vmax.f32 %v2720, %v2721
        %v2723 = vrot.slane %v2722, 4
        %v2724 = vmax.f32 %v2722, %v2723
        %v2725 = vrot.slane %v2724, 2
        %v2726 = vmax.f32 %v2724, %v2725
        %v2727 = vrot.slane %v2726, 1
        %v2728 = vmax.f32 %v2726, %v2727
        %v2729 = vsel %vm314, %v2673, -inf
        %v2730 = vsel %vm314, %v2674, -inf
        %v2731 = vmax.f32 %v2729, %v2730
        %v2732 = vrot.slane %v2731, 4
        %v2733 = vmax.f32 %v2731, %v2732
        %v2734 = vrot.slane %v2733, 2
        %v2735 = vmax.f32 %v2733, %v2734
        %v2736 = vrot.slane %v2735, 1
        %v2737 = vmax.f32 %v2735, %v2736
        %vm2738 = vcmp.eq.f32.partialorder %v2683, -inf
        %vm2739 = vcmp.eq.f32.partialorder %v2692, -inf
        %vm2740 = vcmp.eq.f32.partialorder %v2701, -inf
        %vm2741 = vcmp.eq.f32.partialorder %v2710, -inf
        %vm2742 = vcmp.eq.f32.partialorder %v2719, -inf
        %vm2743 = vcmp.eq.f32.partialorder %v2728, -inf
        %vm2744 = vcmp.eq.f32.partialorder %v2737, -inf
        %v2745 = vsel %vm2738, 0.0, %v2683
        %v2746 = vsel %vm2739, 0.0, %v2692
        %v2747 = vsel %vm2740, 0.0, %v2701
        %v2748 = vsel %vm2741, 0.0, %v2710
        %v2749 = vsel %vm2742, 0.0, %v2719
        %v2750 = vsel %vm2743, 0.0, %v2728
        %v2751 = vsel %vm2744, 0.0, %v2737
        %v2759 = vsel %vm475, %v2746, %v2745
        %v2760 = vsel %vm477, %v2747, %v2759
        %v2761 = vsel %vm479, %v2748, %v2760
        %v2762 = vsel %vm481, %v2749, %v2761
        %v2763 = vsel %vm483, %v2750, %v2762
        %v2764 = vsel %vm485, %v2751, %v2763
        %s2766 = scalar_lea.vmem %s164, 40 [#allocation8]
        %2767 = vst.msk [vmem:[%s2766] sm:$0x7f] %vm2046, %v2764
        %s2768 = sfloor.f32 %s2631
        %s2769 = scvt.f32.s32.to.zero.pseudo %s2768
        %s2770 = sadd.s32 %s2769, %s187
        %p2771 = scmp.gt.s32.totalorder %s2770, 0
        %s2772 = scalar_select %p2771, %s2770, 0
        %p2773 = scmp.lt.s32.totalorder %s2772, 16
        %s2774 = scalar_select %p2773, %s2772, 16
        %s2775 = smul.f32 %s213, 7.0
        %s2776 = sceil.f32 %s2775
        %s2777 = scvt.f32.s32.to.zero.pseudo %s2776
        %s2778 = sadd.s32 %s2777, %s187
        %p2779 = scmp.gt.s32.totalorder %s2778, 0
        %s2780 = scalar_select %p2779, %s2778, 0
        %p2781 = scmp.lt.s32.totalorder %s2780, 16
        %s2782 = scalar_select %p2781, %s2780, 16
        %v2783 = vstv %s2774
        %vm2784 = vcmp.ge.s32.totalorder %v257, %v2783
        %vm2785 = vcmp.ge.s32.totalorder %v258, %v2783
        %v2786 = vstv %s2782
        %vm2787 = vcmp.lt.s32.totalorder %v257, %v2786
        %vm2788 = vcmp.lt.s32.totalorder %v258, %v2786
        %vm2789 = vmand %vm2784, %vm2787
        %vm2790 = vmand %vm2785, %vm2788
        %v2791 = vld [vmem:[#allocation2] sm:$0xff]
        %v2792 = vld [vmem:[#allocation2 + $0x8] sm:$0xff]
        %v2793 = vld [vmem:[#allocation2 + $0x10] sm:$0xff]
        %v2794 = vld [vmem:[#allocation2 + $0x18] sm:$0xff]
        %v2795 = vld [vmem:[#allocation2 + $0x20] sm:$0xff]
        %v2796 = vld [vmem:[#allocation2 + $0x28] sm:$0xff]
        %v2797 = vld [vmem:[#allocation2 + $0x30] sm:$0xff]
        %v2798 = vld [vmem:[#allocation2 + $0x38] sm:$0xff]
        %v2799 = vld [vmem:[#allocation2 + $0x40] sm:$0xff]
        %v2800 = vld [vmem:[#allocation2 + $0x48] sm:$0xff]
        %v2801 = vld [vmem:[#allocation2 + $0x50] sm:$0xff]
        %v2802 = vld [vmem:[#allocation2 + $0x58] sm:$0xff]
        %v2803 = vld [vmem:[#allocation2 + $0x60] sm:$0xff]
        %v2804 = vld [vmem:[#allocation2 + $0x68] sm:$0xff]
        %v2805 = vsel %vm2789, %v2791, -inf
        %v2806 = vsel %vm2790, %v2792, -inf
        %v2807 = vsel %vm2789, %v2793, -inf
        %v2808 = vsel %vm2790, %v2794, -inf
        %v2809 = vsel %vm2789, %v2795, -inf
        %v2810 = vsel %vm2790, %v2796, -inf
        %v2811 = vsel %vm2789, %v2797, -inf
        %v2812 = vsel %vm2790, %v2798, -inf
        %v2813 = vsel %vm2789, %v2799, -inf
        %v2814 = vsel %vm2790, %v2800, -inf
        %v2815 = vsel %vm2789, %v2801, -inf
        %v2816 = vsel %vm2790, %v2802, -inf
        %v2817 = vsel %vm2789, %v2803, -inf
        %v2818 = vsel %vm2790, %v2804, -inf
        %v2819 = vsel %vm314, %v2805, -inf
        %v2820 = vsel %vm314, %v2806, -inf
        %v2821 = vmax.f32 %v2819, %v2820
        %v2822 = vrot.slane %v2821, 4
        %v2823 = vmax.f32 %v2821, %v2822
        %v2824 = vrot.slane %v2823, 2
        %v2825 = vmax.f32 %v2823, %v2824
        %v2826 = vrot.slane %v2825, 1
        %v2827 = vmax.f32 %v2825, %v2826
        %v2828 = vsel %vm314, %v2807, -inf
        %v2829 = vsel %vm314, %v2808, -inf
        %v2830 = vmax.f32 %v2828, %v2829
        %v2831 = vrot.slane %v2830, 4
        %v2832 = vmax.f32 %v2830, %v2831
        %v2833 = vrot.slane %v2832, 2
        %v2834 = vmax.f32 %v2832, %v2833
        %v2835 = vrot.slane %v2834, 1
        %v2836 = vmax.f32 %v2834, %v2835
        %v2837 = vsel %vm314, %v2809, -inf
        %v2838 = vsel %vm314, %v2810, -inf
        %v2839 = vmax.f32 %v2837, %v2838
        %v2840 = vrot.slane %v2839, 4
        %v2841 = vmax.f32 %v2839, %v2840
        %v2842 = vrot.slane %v2841, 2
        %v2843 = vmax.f32 %v2841, %v2842
        %v2844 = vrot.slane %v2843, 1
        %v2845 = vmax.f32 %v2843, %v2844
        %v2846 = vsel %vm314, %v2811, -inf
        %v2847 = vsel %vm314, %v2812, -inf
        %v2848 = vmax.f32 %v2846, %v2847
        %v2849 = vrot.slane %v2848, 4
        %v2850 = vmax.f32 %v2848, %v2849
        %v2851 = vrot.slane %v2850, 2
        %v2852 = vmax.f32 %v2850, %v2851
        %v2853 = vrot.slane %v2852, 1
        %v2854 = vmax.f32 %v2852, %v2853
        %v2855 = vsel %vm314, %v2813, -inf
        %v2856 = vsel %vm314, %v2814, -inf
        %v2857 = vmax.f32 %v2855, %v2856
        %v2858 = vrot.slane %v2857, 4
        %v2859 = vmax.f32 %v2857, %v2858
        %v2860 = vrot.slane %v2859, 2
        %v2861 = vmax.f32 %v2859, %v2860
        %v2862 = vrot.slane %v2861, 1
        %v2863 = vmax.f32 %v2861, %v2862
        %v2864 = vsel %vm314, %v2815, -inf
        %v2865 = vsel %vm314, %v2816, -inf
        %v2866 = vmax.f32 %v2864, %v2865
        %v2867 = vrot.slane %v2866, 4
        %v2868 = vmax.f32 %v2866, %v2867
        %v2869 = vrot.slane %v2868, 2
        %v2870 = vmax.f32 %v2868, %v2869
        %v2871 = vrot.slane %v2870, 1
        %v2872 = vmax.f32 %v2870, %v2871
        %v2873 = vsel %vm314, %v2817, -inf
        %v2874 = vsel %vm314, %v2818, -inf
        %v2875 = vmax.f32 %v2873, %v2874
        %v2876 = vrot.slane %v2875, 4
        %v2877 = vmax.f32 %v2875, %v2876
        %v2878 = vrot.slane %v2877, 2
        %v2879 = vmax.f32 %v2877, %v2878
        %v2880 = vrot.slane %v2879, 1
        %v2881 = vmax.f32 %v2879, %v2880
        %vm2882 = vcmp.eq.f32.partialorder %v2827, -inf
        %vm2883 = vcmp.eq.f32.partialorder %v2836, -inf
        %vm2884 = vcmp.eq.f32.partialorder %v2845, -inf
        %vm2885 = vcmp.eq.f32.partialorder %v2854, -inf
        %vm2886 = vcmp.eq.f32.partialorder %v2863, -inf
        %vm2887 = vcmp.eq.f32.partialorder %v2872, -inf
        %vm2888 = vcmp.eq.f32.partialorder %v2881, -inf
        %v2889 = vsel %vm2882, 0.0, %v2827
        %v2890 = vsel %vm2883, 0.0, %v2836
        %v2891 = vsel %vm2884, 0.0, %v2845
        %v2892 = vsel %vm2885, 0.0, %v2854
        %v2893 = vsel %vm2886, 0.0, %v2863
        %v2894 = vsel %vm2887, 0.0, %v2872
        %v2895 = vsel %vm2888, 0.0, %v2881
        %v2903 = vsel %vm475, %v2890, %v2889
        %v2904 = vsel %vm477, %v2891, %v2903
        %v2905 = vsel %vm479, %v2892, %v2904
        %v2906 = vsel %vm481, %v2893, %v2905
        %v2907 = vsel %vm483, %v2894, %v2906
        %v2908 = vsel %vm485, %v2895, %v2907
        %s2910 = scalar_lea.vmem %s164, 48 [#allocation8]
        %2911 = vst.msk [vmem:[%s2910] sm:$0x7f] %vm2046, %v2908
        %s2912 = sand.u32 %s83, 1
        %s2913 = scalar_lea.sflag [#allocation6], %s2912
        %s2914 = sand.u32 %s83, 1
        %s2915 = smul.addr %s2914, 56
        %s2916 = scalar_lea.vmem [#allocation8], %s2915
        // Predicated region
        $region33: #{tpu_custom_call.1} parent=27 // pred_check
          %p2917 = pneg %p93
        $region34: #{tpu_custom_call.1} parent=27 // pred_check_branch
          %2919 = sbr.rel (%p2917) target = $region36
        $region35: #{tpu_custom_call.1} parent=27 // pred_region
          %2921 = vsyncadd %s2913, 0
          %s2922 = smul.addr %s26, 7
          %s2923 = smul.addr %s2922, 8
          %s2924 = scalar_lea.hbm %s3, %s2923
          %s2925 = sshll.u32 %s2916, 4
          %s2926 = int_to_ptr.vmem [resolvable:$true] %s2925
          %s2927 = sshll.u32 %s2924, 4
          %s2928 = int_to_ptr.hbm [resolvable:$true] %s2927
          %2933 = dma.vmem_to_hbm [thread:$0]  %s2926, 896, %s2928, %s2913, 128, 128, 8
        $region36: #{tpu_custom_call.1} parent=27 // pred_fallthru
          _
      $region28: #{tpu_custom_call.1} parent=5 // pred_fallthru
        _
      %p2934 = scmp.le.s32.totalorder 2, %s21
      // Predicated region
      $region37: #{tpu_custom_call.1} parent=5 // pred_check
        %p2935 = pneg %p2934
      $region38: #{tpu_custom_call.1} parent=5 // pred_check_branch
        %2937 = sbr.rel (%p2935) target = $region40
      $region39: #{tpu_custom_call.1} parent=5 // pred_region
        %s2938 = ssub.s32 %s21, 2
        // Predicated region
        $region41: #{tpu_custom_call.1} parent=39 // pred_check
          %p2939 = pneg %p99
        $region42: #{tpu_custom_call.1} parent=39 // pred_check_branch
          %2941 = sbr.rel (%p2939) target = $region44
        $region43: #{tpu_custom_call.1} parent=39 // pred_region
          %s2942 = sand.u32 %s84, 1
          %s2943 = scalar_lea.sflag [#allocation6], %s2942
          %s2944 = sand.u32 %s84, 1
          %s2945 = smul.addr %s2944, 56
          %s2946 = scalar_lea.vmem [#allocation8], %s2945
          %2948 = dma.done %s2943, 896
        $region44: #{tpu_custom_call.1} parent=39 // pred_fallthru
          _
      $region40: #{tpu_custom_call.1} parent=5 // pred_fallthru
        _
    $region6: #{tpu_custom_call.1} parent=1 // loop_footer
      %s25 = sadd.s32 1, %s21
    $region7: #{tpu_custom_call.1} parent=1 // loop_footer_branch
      %20 = sbr.rel target = $region3
    $region8: #{tpu_custom_call.1} parent=1 // loop_exit
      _
    %2949 = vsyncpa [#allocation6], 1
    %s2950 = scalar_lea.sflag [#allocation6], 1
    %2951 = vsyncpa %s2950, 1
    %2952 = vsyncpa [#allocation7], 1
    %s2953 = scalar_lea.sflag [#allocation7], 1
    %2954 = vsyncpa %s2953, 1

</llo_original>
